<compile_context>
chip_gen: v7x
topology: tpu7x:2x2x1
jax: 0.10.0
libtpu: 0.0.40
codegen_flags: <defaults>
</compile_context>

<pallas_src>
import jax
import jax.numpy as jnp
from jax import lax
from jax.experimental import pallas as pl
from jax.experimental.pallas import tpu as pltpu

EPS = 1e-5
CP = 8  # padded output-channel rows (one full sublane tile)


# ---------------------------- fused Pallas kernel ----------------------------

def make_fused_kernel(B, T, V, H, C):
    N = B * T * V
    TV = T * V
    assert C <= CP and H % 8 == 0

    # packed-parameter row offsets (must match _pack_params below)
    OFF_WRPT = 8          # rows  8..15 : refine W^T, padded to 8 rows
    OFF_BR   = 16         # rows 16..23 : refine bias in column 0
    OFF_W1   = 24         # rows 24..31 : spatial_conv1 weight (C rows used)
    OFF_W2   = 32         # rows 32..32+H : spatial_conv2 weight
    OFF_WT   = 32 + H     # 6 blocks of H rows: wt1[0..2], wt2[0..2]

    def kernel(x_ref, s_ref, p_ref, o_ref):
        f32 = jnp.float32

        # ---- unpack consolidated parameters (static VMEM slices: free) ----
        b1, g1, be1 = p_ref[0:1, :], p_ref[1:2, :], p_ref[2:3, :]
        b2, g2, be2 = p_ref[3:4, :], p_ref[4:5, :], p_ref[5:6, :]
        bt1, bt2 = p_ref[6:7, :], p_ref[7:8, :]
        wrpT = p_ref[OFF_WRPT:OFF_WRPT + CP, :]        # (8, H), rows >= C are zero
        brp = p_ref[OFF_BR:OFF_BR + CP, 0:1]           # (8, 1) refine bias column
        w1 = p_ref[OFF_W1:OFF_W1 + C, :]               # (C, H)
        w2 = p_ref[OFF_W2:OFF_W2 + H, :]               # (H, H)

        def wt(k):                                     # k-th (H, H) temporal weight
            return p_ref[OFF_WT + k * H:OFF_WT + (k + 1) * H, :]

        # ---- spatial_conv1 weight + graph conv: two dense MXU dots ----
        z = jnp.dot(x_ref[...], w1, preferred_element_type=f32)     # (N, H)
        h = jnp.dot(s_ref[...], z, preferred_element_type=f32)      # (N, H)

        # ---- bias + ReLU + BatchNorm (training-mode batch stats, one pass) ----
        inv_n = 1.0 / N

        def relu_bn(u, g, beta):
            u = jnp.maximum(u, 0.0)
            mean = jnp.sum(u, axis=0, keepdims=True) * inv_n
            ex2 = jnp.sum(u * u, axis=0, keepdims=True) * inv_n
            var = ex2 - mean * mean                    # biased (torch train mode)
            scale = g * lax.rsqrt(var + EPS)
            return u * scale + (beta - mean * scale)

        h = relu_bn(h + b1, g1, be1)
        # TODO(synk): nn.Dropout is stochastic (train-mode RNG cannot be
        # matched); applied as identity (eval semantics).
        h = relu_bn(jnp.dot(h, w2, preferred_element_type=f32) + b2, g2, be2)

        # ---- temporal convs: taps built in registers (XLU rolls + iota mask) ----
        row = lax.broadcasted_iota(jnp.int32, (N, H), 0)
        if (TV & (TV - 1)) == 0:                       # power-of-2 fast path
            t_pos = row & (TV - 1)
        else:
            t_pos = row % TV
        keep_prev = t_pos >= V                         # rows with t > 0
        keep_next = t_pos < TV - V                     # rows with t < T-1

        def temporal(u, k0, bias):
            prev = jnp.where(keep_prev, pltpu.roll(u, shift=V, axis=0), 0.0)
            nxt = jnp.where(keep_next, pltpu.roll(u, shift=N - V, axis=0), 0.0)
            out = jnp.dot(u, wt(k0 + 1), preferred_element_type=f32)
            out = out + jnp.dot(prev, wt(k0), preferred_element_type=f32)
            out = out + jnp.dot(nxt, wt(k0 + 2), preferred_element_type=f32)
            return out + bias

        h = temporal(h, 0, bt1)
        h = temporal(h, 3, bt2)

        # ---- refine linear, emitted lane-dense as (CP, N) ----
        o_ref[...] = jnp.dot(wrpT, h.T, preferred_element_type=f32) + brp

    return kernel


# ---------------------------- wrapper ----------------------------

def _pack_params(p, H, C):
    """Pack all small parameters into one (32 + 7H, H) f32 slab (one DMA)."""
    f32 = jnp.float32
    wrpT = jnp.zeros((CP, H), f32).at[:C, :].set(p['wr'].T.astype(f32))
    brb = jnp.zeros((CP, H), f32).at[:C, 0].set(p['br'][0].astype(f32))
    w1b = jnp.zeros((CP, H), f32).at[:C, :].set(p['w1'].astype(f32))
    vec = jnp.concatenate([p['b1'], p['g1'], p['beta1'],
                           p['b2'], p['g2'], p['beta2'],
                           p['bt1'], p['bt2']], axis=0).astype(f32)      # (8, H)
    wts = jnp.concatenate([p['wt1'].reshape(3 * H, H),
                           p['wt2'].reshape(3 * H, H)], axis=0).astype(f32)
    return jnp.concatenate([vec, wrpT, brb, w1b,
                            p['w2'].astype(f32), wts], axis=0)           # (32+7H, H)


def stgcn_forward(x, p):
    # x: (B, C, T, V) float32, matching the PyTorch input layout.
    B, C, T, V = x.shape
    H = p['w1'].shape[1]
    N = B * T * V

    # Parameter-only / tiny layout prep (negligible next to the kernel):
    x2d = jnp.transpose(x, (0, 2, 3, 1)).reshape(N, C)         # rows = (b, t, v)
    a_smT = jax.nn.softmax(p['A'], axis=-1).T                  # (V, V)
    S = jnp.kron(jnp.eye(B * T, dtype=jnp.float32), a_smT)     # (N, N) block-diag
    packed = _pack_params(p, H, C)

    vmem = lambda: pl.BlockSpec(memory_space=pltpu.MemorySpace.VMEM)
    out_cn = pl.pallas_call(
        make_fused_kernel(B, T, V, H, C),
        out_shape=jax.ShapeDtypeStruct((CP, N), jnp.float32),
        in_specs=[vmem(), vmem(), vmem()],
        out_specs=vmem(),
    )(x2d, S, packed)

    # Lane-dense (CP, N) -> (B, C, T, V); ~6 KB of layout glue.
    return jnp.transpose(out_cn[:C].reshape(C, B, T, V), (1, 0, 2, 3))


# ---------------------------- pure-JAX reference ----------------------------

def _bn_ref(h, g, beta):
    m = jnp.mean(h, axis=0)
    v = jnp.var(h, axis=0)                                  # biased, training-mode BN
    return g * (h - m) / jnp.sqrt(v + EPS) + beta


def stgcn_reference(x, p):
    hpz = lax.Precision.HIGHEST
    A = jax.nn.softmax(p['A'], axis=-1)
    B, C, T, V = x.shape
    H = p['w1'].shape[1]
    h = jnp.transpose(x, (0, 2, 1, 3))
    h = jnp.matmul(h, A, precision=hpz)
    h = jnp.transpose(h, (0, 1, 3, 2))                      # (B, T, V, C)
    h = jnp.maximum(jnp.matmul(h, p['w1'], precision=hpz) + p['b1'][0], 0.0)
    h = _bn_ref(h.reshape(B * T * V, H), p['g1'][0], p['beta1'][0]).reshape(B, T, V, H)
    h = jnp.maximum(jnp.matmul(h, p['w2'], precision=hpz) + p['b2'][0], 0.0)
    h = _bn_ref(h.reshape(B * T * V, H), p['g2'][0], p['beta2'][0]).reshape(B, T, V, H)
    hn = jnp.transpose(h, (0, 3, 1, 2))                     # (B, H, T, V)
    for wt, bt in ((p['wt1'], p['bt1']), (p['wt2'], p['bt2'])):
        rhs = jnp.transpose(wt, (2, 1, 0))[:, :, :, None]   # (Hout, Hin, 3, 1)
        hn = lax.conv_general_dilated(hn, rhs, (1, 1), ((1, 1), (0, 0)),
                                      dimension_numbers=('NCHW', 'OIHW', 'NCHW'),
                                      precision=hpz) + bt[0][None, :, None, None]
    h = jnp.transpose(hn, (0, 2, 3, 1))                     # (B, T, V, H)
    out = jnp.matmul(h, p['wr'], precision=hpz) + p['br'][0]
    return jnp.transpose(out, (0, 3, 1, 2))                 # (B, C, T, V)


# ---------------------------- main ----------------------------

if __name__ == "__main__":
    # Small shapes consistent with the module: in_channels=3, num_nodes(V)=16,
    # hidden_dim=32, batch=2, seq(T)=8.
    B, C, T, V, H = 2, 3, 8, 16, 32
    key = jax.random.PRNGKey(0)
    ks = jax.random.split(key, 16)

    def rn(k, shape, scale=0.1):
        return scale * jax.random.normal(k, shape, dtype=jnp.float32)

    params = {
        'A': jnp.eye(V, dtype=jnp.float32)
             + 0.01 * jax.random.normal(ks[0], (V, V), dtype=jnp.float32),
        'w1': rn(ks[1], (C, H)), 'b1': rn(ks[2], (1, H)),
        'g1': 1.0 + rn(ks[3], (1, H)), 'beta1': rn(ks[4], (1, H)),
        'w2': rn(ks[5], (H, H)), 'b2': rn(ks[6], (1, H)),
        'g2': 1.0 + rn(ks[7], (1, H)), 'beta2': rn(ks[8], (1, H)),
        'wt1': rn(ks[9], (3, H, H)), 'bt1': rn(ks[10], (1, H)),
        'wt2': rn(ks[11], (3, H, H)), 'bt2': rn(ks[12], (1, H)),
        'wr': rn(ks[13], (H, C)), 'br': rn(ks[14], (1, C)),
    }
    x = jax.random.normal(ks[15], (B, C, T, V), dtype=jnp.float32)

    out = jax.jit(stgcn_forward)(x, params)
    out = jax.block_until_ready(out)
    assert out.shape == (B, C, T, V) and out.dtype == jnp.float32

    ref = stgcn_reference(x, params)
    err = float(jnp.max(jnp.abs(out - ref)))
    assert err < 1e-2, f"mismatch vs pure-JAX reference, max abs err = {err}"
    print("KERNEL_OK")
</pallas_src>

<mosaic_0001>
module attributes {stable_mosaic.version = 11 : i64} {
  func.func @kernel(%arg0: memref<256x3xf32, #tpu.memory_space<vmem>>, %arg1: memref<256x256xf32, #tpu.memory_space<vmem>>, %arg2: memref<256x32xf32, #tpu.memory_space<vmem>>, %arg3: memref<8x256xf32, #tpu.memory_space<vmem>>) attributes {dimension_semantics = [], scalar_prefetch = 0 : i64, scratch_operands = 0 : i64, tpu.core_type = #tpu.core_type<tc>} {
    %c0 = arith.constant 0 : index
    %c0_0 = arith.constant 0 : index
    %0 = vector.load %arg2[%c0, %c0_0] : memref<256x32xf32, #tpu.memory_space<vmem>>, vector<1x32xf32>
    %c1 = arith.constant 1 : index
    %c0_1 = arith.constant 0 : index
    %1 = vector.load %arg2[%c1, %c0_1] : memref<256x32xf32, #tpu.memory_space<vmem>>, vector<1x32xf32>
    %c2 = arith.constant 2 : index
    %c0_2 = arith.constant 0 : index
    %2 = vector.load %arg2[%c2, %c0_2] : memref<256x32xf32, #tpu.memory_space<vmem>>, vector<1x32xf32>
    %c3 = arith.constant 3 : index
    %c0_3 = arith.constant 0 : index
    %3 = vector.load %arg2[%c3, %c0_3] : memref<256x32xf32, #tpu.memory_space<vmem>>, vector<1x32xf32>
    %c4 = arith.constant 4 : index
    %c0_4 = arith.constant 0 : index
    %4 = vector.load %arg2[%c4, %c0_4] : memref<256x32xf32, #tpu.memory_space<vmem>>, vector<1x32xf32>
    %c5 = arith.constant 5 : index
    %c0_5 = arith.constant 0 : index
    %5 = vector.load %arg2[%c5, %c0_5] : memref<256x32xf32, #tpu.memory_space<vmem>>, vector<1x32xf32>
    %c6 = arith.constant 6 : index
    %c0_6 = arith.constant 0 : index
    %6 = vector.load %arg2[%c6, %c0_6] : memref<256x32xf32, #tpu.memory_space<vmem>>, vector<1x32xf32>
    %c7 = arith.constant 7 : index
    %c0_7 = arith.constant 0 : index
    %7 = vector.load %arg2[%c7, %c0_7] : memref<256x32xf32, #tpu.memory_space<vmem>>, vector<1x32xf32>
    %c8 = arith.constant 8 : index
    %c0_8 = arith.constant 0 : index
    %8 = vector.load %arg2[%c8, %c0_8] : memref<256x32xf32, #tpu.memory_space<vmem>>, vector<8x32xf32>
    %c16 = arith.constant 16 : index
    %c0_9 = arith.constant 0 : index
    %9 = vector.load %arg2[%c16, %c0_9] : memref<256x32xf32, #tpu.memory_space<vmem>>, vector<8x1xf32>
    %c24 = arith.constant 24 : index
    %c0_10 = arith.constant 0 : index
    %10 = vector.load %arg2[%c24, %c0_10] : memref<256x32xf32, #tpu.memory_space<vmem>>, vector<3x32xf32>
    %c32 = arith.constant 32 : index
    %c0_11 = arith.constant 0 : index
    %11 = vector.load %arg2[%c32, %c0_11] : memref<256x32xf32, #tpu.memory_space<vmem>>, vector<32x32xf32>
    %c0_12 = arith.constant 0 : index
    %c0_13 = arith.constant 0 : index
    %12 = vector.load %arg0[%c0_12, %c0_13] : memref<256x3xf32, #tpu.memory_space<vmem>>, vector<256x3xf32>
    %cst = arith.constant dense<0.000000e+00> : vector<256x32xf32>
    %13 = tpu.matmul %12, %10, %cst {dimension_numbers = #tpu.dot_dimension_numbers<[1], [0], [0], [1], [0, 0, 1, 1], [], []>} : vector<256x3xf32>, vector<3x32xf32>, vector<256x32xf32> -> vector<256x32xf32>
    %c0_14 = arith.constant 0 : index
    %c0_15 = arith.constant 0 : index
    %14 = vector.load %arg1[%c0_14, %c0_15] : memref<256x256xf32, #tpu.memory_space<vmem>>, vector<256x256xf32>
    %cst_16 = arith.constant dense<0.000000e+00> : vector<256x32xf32>
    %15 = tpu.matmul %14, %13, %cst_16 {dimension_numbers = #tpu.dot_dimension_numbers<[1], [0], [0], [1], [0, 0, 1, 1], [], []>} : vector<256x256xf32>, vector<256x32xf32>, vector<256x32xf32> -> vector<256x32xf32>
    %16 = vector.broadcast %0 : vector<1x32xf32> to vector<256x32xf32>
    %17 = arith.addf %15, %16 : vector<256x32xf32>
    %cst_17 = arith.constant 0.000000e+00 : f32
    %18 = vector.broadcast %cst_17 : f32 to vector<256x32xf32>
    %19 = arith.maximumf %17, %18 : vector<256x32xf32>
    %cst_18 = arith.constant dense<0.000000e+00> : vector<32xf32>
    %20 = vector.multi_reduction <add>, %19, %cst_18 [0] : vector<256x32xf32> to vector<32xf32>
    %21 = vector.shape_cast %20 : vector<32xf32> to vector<1x32xf32>
    %cst_19 = arith.constant 3.906250e-03 : f32
    %22 = vector.broadcast %cst_19 : f32 to vector<1x32xf32>
    %23 = arith.mulf %21, %22 : vector<1x32xf32>
    %24 = arith.mulf %19, %19 : vector<256x32xf32>
    %cst_20 = arith.constant dense<0.000000e+00> : vector<32xf32>
    %25 = vector.multi_reduction <add>, %24, %cst_20 [0] : vector<256x32xf32> to vector<32xf32>
    %26 = vector.shape_cast %25 : vector<32xf32> to vector<1x32xf32>
    %cst_21 = arith.constant 3.906250e-03 : f32
    %27 = vector.broadcast %cst_21 : f32 to vector<1x32xf32>
    %28 = arith.mulf %26, %27 : vector<1x32xf32>
    %29 = arith.mulf %23, %23 : vector<1x32xf32>
    %30 = arith.subf %28, %29 : vector<1x32xf32>
    %cst_22 = arith.constant 9.99999974E-6 : f32
    %31 = vector.broadcast %cst_22 : f32 to vector<1x32xf32>
    %32 = arith.addf %30, %31 : vector<1x32xf32>
    %33 = math.rsqrt %32 : vector<1x32xf32>
    %34 = arith.mulf %1, %33 : vector<1x32xf32>
    %35 = vector.broadcast %34 : vector<1x32xf32> to vector<256x32xf32>
    %36 = arith.mulf %19, %35 : vector<256x32xf32>
    %37 = arith.mulf %23, %34 : vector<1x32xf32>
    %38 = arith.subf %2, %37 : vector<1x32xf32>
    %39 = vector.broadcast %38 : vector<1x32xf32> to vector<256x32xf32>
    %40 = arith.addf %36, %39 : vector<256x32xf32>
    %cst_23 = arith.constant dense<0.000000e+00> : vector<256x32xf32>
    %41 = tpu.matmul %40, %11, %cst_23 {dimension_numbers = #tpu.dot_dimension_numbers<[1], [0], [0], [1], [0, 0, 1, 1], [], []>} : vector<256x32xf32>, vector<32x32xf32>, vector<256x32xf32> -> vector<256x32xf32>
    %42 = vector.broadcast %3 : vector<1x32xf32> to vector<256x32xf32>
    %43 = arith.addf %41, %42 : vector<256x32xf32>
    %cst_24 = arith.constant 0.000000e+00 : f32
    %44 = vector.broadcast %cst_24 : f32 to vector<256x32xf32>
    %45 = arith.maximumf %43, %44 : vector<256x32xf32>
    %cst_25 = arith.constant dense<0.000000e+00> : vector<32xf32>
    %46 = vector.multi_reduction <add>, %45, %cst_25 [0] : vector<256x32xf32> to vector<32xf32>
    %47 = vector.shape_cast %46 : vector<32xf32> to vector<1x32xf32>
    %cst_26 = arith.constant 3.906250e-03 : f32
    %48 = vector.broadcast %cst_26 : f32 to vector<1x32xf32>
    %49 = arith.mulf %47, %48 : vector<1x32xf32>
    %50 = arith.mulf %45, %45 : vector<256x32xf32>
    %cst_27 = arith.constant dense<0.000000e+00> : vector<32xf32>
    %51 = vector.multi_reduction <add>, %50, %cst_27 [0] : vector<256x32xf32> to vector<32xf32>
    %52 = vector.shape_cast %51 : vector<32xf32> to vector<1x32xf32>
    %cst_28 = arith.constant 3.906250e-03 : f32
    %53 = vector.broadcast %cst_28 : f32 to vector<1x32xf32>
    %54 = arith.mulf %52, %53 : vector<1x32xf32>
    %55 = arith.mulf %49, %49 : vector<1x32xf32>
    %56 = arith.subf %54, %55 : vector<1x32xf32>
    %cst_29 = arith.constant 9.99999974E-6 : f32
    %57 = vector.broadcast %cst_29 : f32 to vector<1x32xf32>
    %58 = arith.addf %56, %57 : vector<1x32xf32>
    %59 = math.rsqrt %58 : vector<1x32xf32>
    %60 = arith.mulf %4, %59 : vector<1x32xf32>
    %61 = vector.broadcast %60 : vector<1x32xf32> to vector<256x32xf32>
    %62 = arith.mulf %45, %61 : vector<256x32xf32>
    %63 = arith.mulf %49, %60 : vector<1x32xf32>
    %64 = arith.subf %5, %63 : vector<1x32xf32>
    %65 = vector.broadcast %64 : vector<1x32xf32> to vector<256x32xf32>
    %66 = arith.addf %62, %65 : vector<256x32xf32>
    %67 = tpu.iota {dimensions = array<i32: 0>} : vector<256x32xi32>
    %c127_i32 = arith.constant 127 : i32
    %68 = vector.broadcast %c127_i32 : i32 to vector<256x32xi32>
    %69 = arith.andi %67, %68 : vector<256x32xi32>
    %c16_i32 = arith.constant 16 : i32
    %70 = vector.broadcast %c16_i32 : i32 to vector<256x32xi32>
    %71 = arith.cmpi sge, %69, %70 : vector<256x32xi32>
    %c112_i32 = arith.constant 112 : i32
    %72 = vector.broadcast %c112_i32 : i32 to vector<256x32xi32>
    %73 = arith.cmpi slt, %69, %72 : vector<256x32xi32>
    %c16_i32_30 = arith.constant 16 : i32
    %74 = tpu.dynamic_rotate %66 by %c16_i32_30 dim 0 : vector<256x32xf32>, i32 -> vector<256x32xf32>
    %cst_31 = arith.constant 0.000000e+00 : f32
    %75 = vector.broadcast %cst_31 : f32 to vector<256x32xf32>
    %76 = arith.select %71, %74, %75 : vector<256x32xi1>, vector<256x32xf32>
    %c240_i32 = arith.constant 240 : i32
    %77 = tpu.dynamic_rotate %66 by %c240_i32 dim 0 : vector<256x32xf32>, i32 -> vector<256x32xf32>
    %cst_32 = arith.constant 0.000000e+00 : f32
    %78 = vector.broadcast %cst_32 : f32 to vector<256x32xf32>
    %79 = arith.select %73, %77, %78 : vector<256x32xi1>, vector<256x32xf32>
    %c96 = arith.constant 96 : index
    %c0_33 = arith.constant 0 : index
    %80 = vector.load %arg2[%c96, %c0_33] : memref<256x32xf32, #tpu.memory_space<vmem>>, vector<32x32xf32>
    %cst_34 = arith.constant dense<0.000000e+00> : vector<256x32xf32>
    %81 = tpu.matmul %66, %80, %cst_34 {dimension_numbers = #tpu.dot_dimension_numbers<[1], [0], [0], [1], [0, 0, 1, 1], [], []>} : vector<256x32xf32>, vector<32x32xf32>, vector<256x32xf32> -> vector<256x32xf32>
    %c64 = arith.constant 64 : index
    %c0_35 = arith.constant 0 : index
    %82 = vector.load %arg2[%c64, %c0_35] : memref<256x32xf32, #tpu.memory_space<vmem>>, vector<32x32xf32>
    %cst_36 = arith.constant dense<0.000000e+00> : vector<256x32xf32>
    %83 = tpu.matmul %76, %82, %cst_36 {dimension_numbers = #tpu.dot_dimension_numbers<[1], [0], [0], [1], [0, 0, 1, 1], [], []>} : vector<256x32xf32>, vector<32x32xf32>, vector<256x32xf32> -> vector<256x32xf32>
    %84 = arith.addf %81, %83 : vector<256x32xf32>
    %c128 = arith.constant 128 : index
    %c0_37 = arith.constant 0 : index
    %85 = vector.load %arg2[%c128, %c0_37] : memref<256x32xf32, #tpu.memory_space<vmem>>, vector<32x32xf32>
    %cst_38 = arith.constant dense<0.000000e+00> : vector<256x32xf32>
    %86 = tpu.matmul %79, %85, %cst_38 {dimension_numbers = #tpu.dot_dimension_numbers<[1], [0], [0], [1], [0, 0, 1, 1], [], []>} : vector<256x32xf32>, vector<32x32xf32>, vector<256x32xf32> -> vector<256x32xf32>
    %87 = arith.addf %84, %86 : vector<256x32xf32>
    %88 = vector.broadcast %6 : vector<1x32xf32> to vector<256x32xf32>
    %89 = arith.addf %87, %88 : vector<256x32xf32>
    %c16_i32_39 = arith.constant 16 : i32
    %90 = tpu.dynamic_rotate %89 by %c16_i32_39 dim 0 : vector<256x32xf32>, i32 -> vector<256x32xf32>
    %cst_40 = arith.constant 0.000000e+00 : f32
    %91 = vector.broadcast %cst_40 : f32 to vector<256x32xf32>
    %92 = arith.select %71, %90, %91 : vector<256x32xi1>, vector<256x32xf32>
    %c240_i32_41 = arith.constant 240 : i32
    %93 = tpu.dynamic_rotate %89 by %c240_i32_41 dim 0 : vector<256x32xf32>, i32 -> vector<256x32xf32>
    %cst_42 = arith.constant 0.000000e+00 : f32
    %94 = vector.broadcast %cst_42 : f32 to vector<256x32xf32>
    %95 = arith.select %73, %93, %94 : vector<256x32xi1>, vector<256x32xf32>
    %c192 = arith.constant 192 : index
    %c0_43 = arith.constant 0 : index
    %96 = vector.load %arg2[%c192, %c0_43] : memref<256x32xf32, #tpu.memory_space<vmem>>, vector<32x32xf32>
    %cst_44 = arith.constant dense<0.000000e+00> : vector<256x32xf32>
    %97 = tpu.matmul %89, %96, %cst_44 {dimension_numbers = #tpu.dot_dimension_numbers<[1], [0], [0], [1], [0, 0, 1, 1], [], []>} : vector<256x32xf32>, vector<32x32xf32>, vector<256x32xf32> -> vector<256x32xf32>
    %c160 = arith.constant 160 : index
    %c0_45 = arith.constant 0 : index
    %98 = vector.load %arg2[%c160, %c0_45] : memref<256x32xf32, #tpu.memory_space<vmem>>, vector<32x32xf32>
    %cst_46 = arith.constant dense<0.000000e+00> : vector<256x32xf32>
    %99 = tpu.matmul %92, %98, %cst_46 {dimension_numbers = #tpu.dot_dimension_numbers<[1], [0], [0], [1], [0, 0, 1, 1], [], []>} : vector<256x32xf32>, vector<32x32xf32>, vector<256x32xf32> -> vector<256x32xf32>
    %100 = arith.addf %97, %99 : vector<256x32xf32>
    %c224 = arith.constant 224 : index
    %c0_47 = arith.constant 0 : index
    %101 = vector.load %arg2[%c224, %c0_47] : memref<256x32xf32, #tpu.memory_space<vmem>>, vector<32x32xf32>
    %cst_48 = arith.constant dense<0.000000e+00> : vector<256x32xf32>
    %102 = tpu.matmul %95, %101, %cst_48 {dimension_numbers = #tpu.dot_dimension_numbers<[1], [0], [0], [1], [0, 0, 1, 1], [], []>} : vector<256x32xf32>, vector<32x32xf32>, vector<256x32xf32> -> vector<256x32xf32>
    %103 = arith.addf %100, %102 : vector<256x32xf32>
    %104 = vector.broadcast %7 : vector<1x32xf32> to vector<256x32xf32>
    %105 = arith.addf %103, %104 : vector<256x32xf32>
    %106 = tpu.transpose %105, [1, 0] : vector<256x32xf32> -> vector<32x256xf32>
    %cst_49 = arith.constant dense<0.000000e+00> : vector<8x256xf32>
    %107 = tpu.matmul %8, %106, %cst_49 {dimension_numbers = #tpu.dot_dimension_numbers<[1], [0], [0], [1], [0, 0, 1, 1], [], []>} : vector<8x32xf32>, vector<32x256xf32>, vector<8x256xf32> -> vector<8x256xf32>
    %108 = vector.broadcast %9 : vector<8x1xf32> to vector<8x256xf32>
    %109 = arith.addf %107, %108 : vector<8x256xf32>
    %c0_50 = arith.constant 0 : index
    %c0_51 = arith.constant 0 : index
    %110 = vector.load %arg3[%c0_50, %c0_51] : memref<8x256xf32, #tpu.memory_space<vmem>>, vector<8x256xf32>
    tpu.vector_store %arg3[%c0_50, %c0_51], %109 {strides = array<i32>} : memref<8x256xf32, #tpu.memory_space<vmem>>, vector<8x256xf32>,
    return
  }
}

</mosaic_0001>

<llo_original>
// kernel: stgcn_forward.1
$region0: #{stgcn_forward.1}
  #allocation0 [shape = 'u32[]', space=smem, size = 0x4, offset = 0x4, fixed_abs, tag = 'smem constant byte address 0x4 - core index']
  #allocation1 [shape = 'u32[144,128]{1,0:T(1,128)}', space=vmem, size = 0x12000, scoped, tag = 'internal scratch']
  %s0 = inlined_call_operand.vmem [shape: f32[256,3], index: 0, kind: input, shape index: {}]
  %s1 = inlined_call_operand.vmem [shape: f32[256,256], index: 1, kind: input, shape index: {}]
  %s2 = inlined_call_operand.vmem [shape: f32[256,32], index: 2, kind: input, shape index: {}]
  %s3 = inlined_call_operand.vmem [shape: f32[8,256], index: 3, kind: output, shape index: {}]
  %s4 = sld [smem:[#allocation0]]
  $region22: #{stgcn_forward.1} parent=0
    _
  %s6 = ssub.s32 1, %s4
  %s7 = scalar_select 0, %s6, %s4
  // Predicated region
  $region2: #{stgcn_forward.1} parent=0 // pred_check
    _
  $region3: #{stgcn_forward.1} parent=0 // pred_check_branch
    %9 = sbr.rel (0) target = $region5
  $region4: #{stgcn_forward.1} parent=0 // pred_region
    _
  $region5: #{stgcn_forward.1} parent=0 // pred_fallthru
    _
  // Predicated region
  $region6: #{stgcn_forward.1} parent=0 // pred_check
    _
  $region7: #{stgcn_forward.1} parent=0 // pred_check_branch
    %11 = sbr.rel (0) target = $region9
  $region8: #{stgcn_forward.1} parent=0 // pred_region
    _
  $region9: #{stgcn_forward.1} parent=0 // pred_fallthru
    _
  // Predicated region
  $region10: #{stgcn_forward.1} parent=0 // pred_check
    _
  $region11: #{stgcn_forward.1} parent=0 // pred_check_branch
    %13 = sbr.rel (0) target = $region13
  $region12: #{stgcn_forward.1} parent=0 // pred_region
    _
  $region13: #{stgcn_forward.1} parent=0 // pred_fallthru
    _
  %v14 = vld [vmem:[%s2] sm:$0x1]
  %v15 = vld [vmem:[%s2 + $0x1] sm:$0x1]
  %v16 = vld [vmem:[%s2 + $0x2] sm:$0x1]
  %v17 = vld [vmem:[%s2 + $0x3] sm:$0x1]
  %v18 = vld [vmem:[%s2 + $0x4] sm:$0x1]
  %v19 = vld [vmem:[%s2 + $0x5] sm:$0x1]
  %v20 = vld [vmem:[%s2 + $0x6] sm:$0x1]
  %v21 = vld [vmem:[%s2 + $0x7] sm:$0x1]
  %v22 = vld [vmem:[%s2 + $0x8] sm:$0xff]
  %v23 = vld [vmem:[%s2 + $0x10] sm:$0xff]
  %v24 = vld [vmem:[%s2 + $0x18] sm:$0x7]
  %v25 = vld [vmem:[%s2 + $0x20] sm:$0xff]
  %v26 = vld [vmem:[%s2 + $0x28] sm:$0xff]
  %v27 = vld [vmem:[%s2 + $0x30] sm:$0xff]
  %v28 = vld [vmem:[%s2 + $0x38] sm:$0xff]
  %v29 = vld [vmem:[%s0] sm:$0xff]
  %v30 = vld [vmem:[%s0 + $0x8] sm:$0xff]
  %v31 = vld [vmem:[%s0 + $0x10] sm:$0xff]
  %v32 = vld [vmem:[%s0 + $0x18] sm:$0xff]
  %v33 = vld [vmem:[%s0 + $0x20] sm:$0xff]
  %v34 = vld [vmem:[%s0 + $0x28] sm:$0xff]
  %v35 = vld [vmem:[%s0 + $0x30] sm:$0xff]
  %v36 = vld [vmem:[%s0 + $0x38] sm:$0xff]
  %v37 = vld [vmem:[%s0 + $0x40] sm:$0xff]
  %v38 = vld [vmem:[%s0 + $0x48] sm:$0xff]
  %v39 = vld [vmem:[%s0 + $0x50] sm:$0xff]
  %v40 = vld [vmem:[%s0 + $0x58] sm:$0xff]
  %v41 = vld [vmem:[%s0 + $0x60] sm:$0xff]
  %v42 = vld [vmem:[%s0 + $0x68] sm:$0xff]
  %v43 = vld [vmem:[%s0 + $0x70] sm:$0xff]
  %v44 = vld [vmem:[%s0 + $0x78] sm:$0xff]
  %v45 = vld [vmem:[%s0 + $0x80] sm:$0xff]
  %v46 = vld [vmem:[%s0 + $0x88] sm:$0xff]
  %v47 = vld [vmem:[%s0 + $0x90] sm:$0xff]
  %v48 = vld [vmem:[%s0 + $0x98] sm:$0xff]
  %v49 = vld [vmem:[%s0 + $0xa0] sm:$0xff]
  %v50 = vld [vmem:[%s0 + $0xa8] sm:$0xff]
  %v51 = vld [vmem:[%s0 + $0xb0] sm:$0xff]
  %v52 = vld [vmem:[%s0 + $0xb8] sm:$0xff]
  %v53 = vld [vmem:[%s0 + $0xc0] sm:$0xff]
  %v54 = vld [vmem:[%s0 + $0xc8] sm:$0xff]
  %v55 = vld [vmem:[%s0 + $0xd0] sm:$0xff]
  %v56 = vld [vmem:[%s0 + $0xd8] sm:$0xff]
  %v57 = vld [vmem:[%s0 + $0xe0] sm:$0xff]
  %v58 = vld [vmem:[%s0 + $0xe8] sm:$0xff]
  %v59 = vld [vmem:[%s0 + $0xf0] sm:$0xff]
  %v60 = vld [vmem:[%s0 + $0xf8] sm:$0xff]
  %vm61 = vcmask 23552
  %v63 = vsel %vm61, %v29, 0
  %v66 = vsel %vm61, %v30, 0
  %v69 = vsel %vm61, %v31, 0
  %v72 = vsel %vm61, %v32, 0
  %v75 = vsel %vm61, %v33, 0
  %v78 = vsel %vm61, %v34, 0
  %v81 = vsel %vm61, %v35, 0
  %v84 = vsel %vm61, %v36, 0
  %v87 = vsel %vm61, %v37, 0
  %v90 = vsel %vm61, %v38, 0
  %v93 = vsel %vm61, %v39, 0
  %v96 = vsel %vm61, %v40, 0
  %v99 = vsel %vm61, %v41, 0
  %v102 = vsel %vm61, %v42, 0
  %v105 = vsel %vm61, %v43, 0
  %v108 = vsel %vm61, %v44, 0
  %v111 = vsel %vm61, %v45, 0
  %v114 = vsel %vm61, %v46, 0
  %v117 = vsel %vm61, %v47, 0
  %v120 = vsel %vm61, %v48, 0
  %v123 = vsel %vm61, %v49, 0
  %v126 = vsel %vm61, %v50, 0
  %v129 = vsel %vm61, %v51, 0
  %v132 = vsel %vm61, %v52, 0
  %v135 = vsel %vm61, %v53, 0
  %v138 = vsel %vm61, %v54, 0
  %v141 = vsel %vm61, %v55, 0
  %v144 = vsel %vm61, %v56, 0
  %v147 = vsel %vm61, %v57, 0
  %v150 = vsel %vm61, %v58, 0
  %v153 = vsel %vm61, %v59, 0
  %v156 = vsel %vm61, %v60, 0
  %vm158 = vcmask 1042432
  %v160 = vsel %vm158, %v24, 0
  %162 = vmatprep.subr.mxu0 0.0
  %163 = vmatpush1.msra.mxu0 %v160
  %164 = vmatprep.subr.mxu0 0.0
  %165 = vmatpush1.msra.mxu0 0.0
  %166 = vmatprep.subr.mxu0 0.0
  %167 = vmatpush1.msra.mxu0 0.0
  %168 = vmatprep.subr.mxu0 0.0
  %169 = vmatpush1.msra.mxu0 0.0
  %170 = vmatprep.subr.mxu0 0.0
  %171 = vmatpush1.msra.mxu0 0.0
  %172 = vmatprep.subr.mxu0 0.0
  %173 = vmatpush1.msra.mxu0 0.0
  %174 = vmatprep.subr.mxu0 0.0
  %175 = vmatpush1.msra.mxu0 0.0
  %176 = vmatprep.subr.mxu0 0.0
  %177 = vmatpush1.msra.mxu0 0.0
  %178 = vmatprep.subr.mxu0 0.0
  %179 = vmatpush1.msra.mxu0 0.0
  %180 = vmatprep.subr.mxu0 0.0
  %181 = vmatpush1.msra.mxu0 0.0
  %182 = vmatprep.subr.mxu0 0.0
  %183 = vmatpush1.msra.mxu0 0.0
  %184 = vmatprep.subr.mxu0 0.0
  %185 = vmatpush1.msra.mxu0 0.0
  %186 = vmatprep.subr.mxu0 0.0
  %187 = vmatpush1.msra.mxu0 0.0
  %188 = vmatprep.subr.mxu0 0.0
  %189 = vmatpush1.msra.mxu0 0.0
  %190 = vmatprep.subr.mxu0 0.0
  %191 = vmatpush1.msra.mxu0 0.0
  %192 = vmatprep.subr.mxu0 0.0
  %193 = vmatpush1.msra.mxu0 0.0
  %194 = vmatprep.subr.mxu0 0.0
  %195 = vmatpush1.msra.mxu0 0.0
  %196 = vmatprep.subr.mxu0 0.0
  %197 = vmatpush1.msra.mxu0 0.0
  %198 = vmatprep.subr.mxu0 0.0
  %199 = vmatpush1.msra.mxu0 0.0
  %200 = vmatprep.subr.mxu0 0.0
  %201 = vmatpush1.msra.mxu0 0.0
  %202 = vmatprep.subr.mxu0 0.0
  %203 = vmatpush1.msra.mxu0 0.0
  %204 = vmatprep.subr.mxu0 0.0
  %205 = vmatpush1.msra.mxu0 0.0
  %206 = vmatprep.subr.mxu0 0.0
  %207 = vmatpush1.msra.mxu0 0.0
  %208 = vmatprep.subr.mxu0 0.0
  %209 = vmatpush1.msra.mxu0 0.0
  %210 = vmatprep.subr.mxu0 0.0
  %211 = vmatpush1.msra.mxu0 0.0
  %212 = vmatprep.subr.mxu0 0.0
  %213 = vmatpush1.msra.mxu0 0.0
  %214 = vmatprep.subr.mxu0 0.0
  %215 = vmatpush1.msra.mxu0 0.0
  %216 = vmatprep.subr.mxu0 0.0
  %217 = vmatpush1.msra.mxu0 0.0
  %218 = vmatprep.subr.mxu0 0.0
  %219 = vmatpush1.msra.mxu0 0.0
  %220 = vmatprep.subr.mxu0 0.0
  %221 = vmatpush1.msra.mxu0 0.0
  %222 = vmatprep.subr.mxu0 0.0
  %223 = vmatpush1.msra.mxu0 0.0
  %224 = vmatprep.subr.mxu0 0.0
  %225 = vmatpush1.msra.mxu0 0.0
  %226 = vmatprep.mubr.f32.mxu0 0.0
  %227 = vmatmul.mubr.f32.gmra.mrb[0].mxu0 %v63
  %v228 = vpop.f32.mrb[0].mxu0
  %v229 = vadd.f32 0.0, %v228
  %v230 = vpop.f32.mrb[0].mxu0
  %231 = vmatprep.mubr.f32.mxu0 0.0
  %232 = vmatmul.mubr.f32.gmra.mrb[0].mxu0 %v66
  %v233 = vpop.f32.mrb[0].mxu0
  %v234 = vadd.f32 0.0, %v233
  %v235 = vpop.f32.mrb[0].mxu0
  %236 = vmatprep.mubr.f32.mxu0 0.0
  %237 = vmatmul.mubr.f32.gmra.mrb[0].mxu0 %v69
  %v238 = vpop.f32.mrb[0].mxu0
  %v239 = vadd.f32 0.0, %v238
  %v240 = vpop.f32.mrb[0].mxu0
  %241 = vmatprep.mubr.f32.mxu0 0.0
  %242 = vmatmul.mubr.f32.gmra.mrb[0].mxu0 %v72
  %v243 = vpop.f32.mrb[0].mxu0
  %v244 = vadd.f32 0.0, %v243
  %v245 = vpop.f32.mrb[0].mxu0
  %246 = vmatprep.mubr.f32.mxu0 0.0
  %247 = vmatmul.mubr.f32.gmra.mrb[0].mxu0 %v75
  %v248 = vpop.f32.mrb[0].mxu0
  %v249 = vadd.f32 0.0, %v248
  %v250 = vpop.f32.mrb[0].mxu0
  %251 = vmatprep.mubr.f32.mxu0 0.0
  %252 = vmatmul.mubr.f32.gmra.mrb[0].mxu0 %v78
  %v253 = vpop.f32.mrb[0].mxu0
  %v254 = vadd.f32 0.0, %v253
  %v255 = vpop.f32.mrb[0].mxu0
  %256 = vmatprep.mubr.f32.mxu0 0.0
  %257 = vmatmul.mubr.f32.gmra.mrb[0].mxu0 %v81
  %v258 = vpop.f32.mrb[0].mxu0
  %v259 = vadd.f32 0.0, %v258
  %v260 = vpop.f32.mrb[0].mxu0
  %261 = vmatprep.mubr.f32.mxu0 0.0
  %262 = vmatmul.mubr.f32.gmra.mrb[0].mxu0 %v84
  %v263 = vpop.f32.mrb[0].mxu0
  %v264 = vadd.f32 0.0, %v263
  %v265 = vpop.f32.mrb[0].mxu0
  %266 = vmatprep.mubr.f32.mxu0 0.0
  %267 = vmatmul.mubr.f32.gmra.mrb[0].mxu0 %v87
  %v268 = vpop.f32.mrb[0].mxu0
  %v269 = vadd.f32 0.0, %v268
  %v270 = vpop.f32.mrb[0].mxu0
  %271 = vmatprep.mubr.f32.mxu0 0.0
  %272 = vmatmul.mubr.f32.gmra.mrb[0].mxu0 %v90
  %v273 = vpop.f32.mrb[0].mxu0
  %v274 = vadd.f32 0.0, %v273
  %v275 = vpop.f32.mrb[0].mxu0
  %276 = vmatprep.mubr.f32.mxu0 0.0
  %277 = vmatmul.mubr.f32.gmra.mrb[0].mxu0 %v93
  %v278 = vpop.f32.mrb[0].mxu0
  %v279 = vadd.f32 0.0, %v278
  %v280 = vpop.f32.mrb[0].mxu0
  %281 = vmatprep.mubr.f32.mxu0 0.0
  %282 = vmatmul.mubr.f32.gmra.mrb[0].mxu0 %v96
  %v283 = vpop.f32.mrb[0].mxu0
  %v284 = vadd.f32 0.0, %v283
  %v285 = vpop.f32.mrb[0].mxu0
  %286 = vmatprep.mubr.f32.mxu0 0.0
  %287 = vmatmul.mubr.f32.gmra.mrb[0].mxu0 %v99
  %v288 = vpop.f32.mrb[0].mxu0
  %v289 = vadd.f32 0.0, %v288
  %v290 = vpop.f32.mrb[0].mxu0
  %291 = vmatprep.mubr.f32.mxu0 0.0
  %292 = vmatmul.mubr.f32.gmra.mrb[0].mxu0 %v102
  %v293 = vpop.f32.mrb[0].mxu0
  %v294 = vadd.f32 0.0, %v293
  %v295 = vpop.f32.mrb[0].mxu0
  %296 = vmatprep.mubr.f32.mxu0 0.0
  %297 = vmatmul.mubr.f32.gmra.mrb[0].mxu0 %v105
  %v298 = vpop.f32.mrb[0].mxu0
  %v299 = vadd.f32 0.0, %v298
  %v300 = vpop.f32.mrb[0].mxu0
  %301 = vmatprep.mubr.f32.mxu0 0.0
  %302 = vmatmul.mubr.f32.gmra.mrb[0].mxu0 %v108
  %v303 = vpop.f32.mrb[0].mxu0
  %v304 = vadd.f32 0.0, %v303
  %v305 = vpop.f32.mrb[0].mxu0
  %306 = vmatprep.mubr.f32.mxu0 0.0
  %307 = vmatmul.mubr.f32.gmra.mrb[0].mxu0 %v111
  %v308 = vpop.f32.mrb[0].mxu0
  %v309 = vadd.f32 0.0, %v308
  %v310 = vpop.f32.mrb[0].mxu0
  %311 = vmatprep.mubr.f32.mxu0 0.0
  %312 = vmatmul.mubr.f32.gmra.mrb[0].mxu0 %v114
  %v313 = vpop.f32.mrb[0].mxu0
  %v314 = vadd.f32 0.0, %v313
  %v315 = vpop.f32.mrb[0].mxu0
  %316 = vmatprep.mubr.f32.mxu0 0.0
  %317 = vmatmul.mubr.f32.gmra.mrb[0].mxu0 %v117
  %v318 = vpop.f32.mrb[0].mxu0
  %v319 = vadd.f32 0.0, %v318
  %v320 = vpop.f32.mrb[0].mxu0
  %321 = vmatprep.mubr.f32.mxu0 0.0
  %322 = vmatmul.mubr.f32.gmra.mrb[0].mxu0 %v120
  %v323 = vpop.f32.mrb[0].mxu0
  %v324 = vadd.f32 0.0, %v323
  %v325 = vpop.f32.mrb[0].mxu0
  %326 = vmatprep.mubr.f32.mxu0 0.0
  %327 = vmatmul.mubr.f32.gmra.mrb[0].mxu0 %v123
  %v328 = vpop.f32.mrb[0].mxu0
  %v329 = vadd.f32 0.0, %v328
  %v330 = vpop.f32.mrb[0].mxu0
  %331 = vmatprep.mubr.f32.mxu0 0.0
  %332 = vmatmul.mubr.f32.gmra.mrb[0].mxu0 %v126
  %v333 = vpop.f32.mrb[0].mxu0
  %v334 = vadd.f32 0.0, %v333
  %v335 = vpop.f32.mrb[0].mxu0
  %336 = vmatprep.mubr.f32.mxu0 0.0
  %337 = vmatmul.mubr.f32.gmra.mrb[0].mxu0 %v129
  %v338 = vpop.f32.mrb[0].mxu0
  %v339 = vadd.f32 0.0, %v338
  %v340 = vpop.f32.mrb[0].mxu0
  %341 = vmatprep.mubr.f32.mxu0 0.0
  %342 = vmatmul.mubr.f32.gmra.mrb[0].mxu0 %v132
  %v343 = vpop.f32.mrb[0].mxu0
  %v344 = vadd.f32 0.0, %v343
  %v345 = vpop.f32.mrb[0].mxu0
  %346 = vmatprep.mubr.f32.mxu0 0.0
  %347 = vmatmul.mubr.f32.gmra.mrb[0].mxu0 %v135
  %v348 = vpop.f32.mrb[0].mxu0
  %v349 = vadd.f32 0.0, %v348
  %v350 = vpop.f32.mrb[0].mxu0
  %351 = vmatprep.mubr.f32.mxu0 0.0
  %352 = vmatmul.mubr.f32.gmra.mrb[0].mxu0 %v138
  %v353 = vpop.f32.mrb[0].mxu0
  %v354 = vadd.f32 0.0, %v353
  %v355 = vpop.f32.mrb[0].mxu0
  %356 = vmatprep.mubr.f32.mxu0 0.0
  %357 = vmatmul.mubr.f32.gmra.mrb[0].mxu0 %v141
  %v358 = vpop.f32.mrb[0].mxu0
  %v359 = vadd.f32 0.0, %v358
  %v360 = vpop.f32.mrb[0].mxu0
  %361 = vmatprep.mubr.f32.mxu0 0.0
  %362 = vmatmul.mubr.f32.gmra.mrb[0].mxu0 %v144
  %v363 = vpop.f32.mrb[0].mxu0
  %v364 = vadd.f32 0.0, %v363
  %v365 = vpop.f32.mrb[0].mxu0
  %366 = vmatprep.mubr.f32.mxu0 0.0
  %367 = vmatmul.mubr.f32.gmra.mrb[0].mxu0 %v147
  %v368 = vpop.f32.mrb[0].mxu0
  %v369 = vadd.f32 0.0, %v368
  %v370 = vpop.f32.mrb[0].mxu0
  %371 = vmatprep.mubr.f32.mxu0 0.0
  %372 = vmatmul.mubr.f32.gmra.mrb[0].mxu0 %v150
  %v373 = vpop.f32.mrb[0].mxu0
  %v374 = vadd.f32 0.0, %v373
  %v375 = vpop.f32.mrb[0].mxu0
  %376 = vmatprep.mubr.f32.mxu0 0.0
  %377 = vmatmul.mubr.f32.gmra.mrb[0].mxu0 %v153
  %v378 = vpop.f32.mrb[0].mxu0
  %v379 = vadd.f32 0.0, %v378
  %v380 = vpop.f32.mrb[0].mxu0
  %381 = vmatprep.mubr.f32.mxu0 0.0
  %382 = vmatmul.mubr.f32.gmra.mrb[0].mxu0 %v156
  %v383 = vpop.f32.mrb[0].mxu0
  %v384 = vadd.f32 0.0, %v383
  %v385 = vpop.f32.mrb[0].mxu0
  %386 = vdwg.mxu0
  %v387 = vld [vmem:[%s1] sm:$0xff]
  %v388 = vld [vmem:[%s1 + $0x8] sm:$0xff]
  %v389 = vld [vmem:[%s1 + $0x10] sm:$0xff]
  %v390 = vld [vmem:[%s1 + $0x18] sm:$0xff]
  %v391 = vld [vmem:[%s1 + $0x20] sm:$0xff]
  %v392 = vld [vmem:[%s1 + $0x28] sm:$0xff]
  %v393 = vld [vmem:[%s1 + $0x30] sm:$0xff]
  %v394 = vld [vmem:[%s1 + $0x38] sm:$0xff]
  %v395 = vld [vmem:[%s1 + $0x40] sm:$0xff]
  %v396 = vld [vmem:[%s1 + $0x48] sm:$0xff]
  %v397 = vld [vmem:[%s1 + $0x50] sm:$0xff]
  %v398 = vld [vmem:[%s1 + $0x58] sm:$0xff]
  %v399 = vld [vmem:[%s1 + $0x60] sm:$0xff]
  %v400 = vld [vmem:[%s1 + $0x68] sm:$0xff]
  %v401 = vld [vmem:[%s1 + $0x70] sm:$0xff]
  %v402 = vld [vmem:[%s1 + $0x78] sm:$0xff]
  %v403 = vld [vmem:[%s1 + $0x80] sm:$0xff]
  %v404 = vld [vmem:[%s1 + $0x88] sm:$0xff]
  %v405 = vld [vmem:[%s1 + $0x90] sm:$0xff]
  %v406 = vld [vmem:[%s1 + $0x98] sm:$0xff]
  %v407 = vld [vmem:[%s1 + $0xa0] sm:$0xff]
  %v408 = vld [vmem:[%s1 + $0xa8] sm:$0xff]
  %v409 = vld [vmem:[%s1 + $0xb0] sm:$0xff]
  %v410 = vld [vmem:[%s1 + $0xb8] sm:$0xff]
  %v411 = vld [vmem:[%s1 + $0xc0] sm:$0xff]
  %v412 = vld [vmem:[%s1 + $0xc8] sm:$0xff]
  %v413 = vld [vmem:[%s1 + $0xd0] sm:$0xff]
  %v414 = vld [vmem:[%s1 + $0xd8] sm:$0xff]
  %v415 = vld [vmem:[%s1 + $0xe0] sm:$0xff]
  %v416 = vld [vmem:[%s1 + $0xe8] sm:$0xff]
  %v417 = vld [vmem:[%s1 + $0xf0] sm:$0xff]
  %v418 = vld [vmem:[%s1 + $0xf8] sm:$0xff]
  %v419 = vld [vmem:[%s1 + $0x100] sm:$0xff]
  %v420 = vld [vmem:[%s1 + $0x108] sm:$0xff]
  %v421 = vld [vmem:[%s1 + $0x110] sm:$0xff]
  %v422 = vld [vmem:[%s1 + $0x118] sm:$0xff]
  %v423 = vld [vmem:[%s1 + $0x120] sm:$0xff]
  %v424 = vld [vmem:[%s1 + $0x128] sm:$0xff]
  %v425 = vld [vmem:[%s1 + $0x130] sm:$0xff]
  %v426 = vld [vmem:[%s1 + $0x138] sm:$0xff]
  %v427 = vld [vmem:[%s1 + $0x140] sm:$0xff]
  %v428 = vld [vmem:[%s1 + $0x148] sm:$0xff]
  %v429 = vld [vmem:[%s1 + $0x150] sm:$0xff]
  %v430 = vld [vmem:[%s1 + $0x158] sm:$0xff]
  %v431 = vld [vmem:[%s1 + $0x160] sm:$0xff]
  %v432 = vld [vmem:[%s1 + $0x168] sm:$0xff]
  %v433 = vld [vmem:[%s1 + $0x170] sm:$0xff]
  %v434 = vld [vmem:[%s1 + $0x178] sm:$0xff]
  %v435 = vld [vmem:[%s1 + $0x180] sm:$0xff]
  %v436 = vld [vmem:[%s1 + $0x188] sm:$0xff]
  %v437 = vld [vmem:[%s1 + $0x190] sm:$0xff]
  %v438 = vld [vmem:[%s1 + $0x198] sm:$0xff]
  %v439 = vld [vmem:[%s1 + $0x1a0] sm:$0xff]
  %v440 = vld [vmem:[%s1 + $0x1a8] sm:$0xff]
  %v441 = vld [vmem:[%s1 + $0x1b0] sm:$0xff]
  %v442 = vld [vmem:[%s1 + $0x1b8] sm:$0xff]
  %v443 = vld [vmem:[%s1 + $0x1c0] sm:$0xff]
  %v444 = vld [vmem:[%s1 + $0x1c8] sm:$0xff]
  %v445 = vld [vmem:[%s1 + $0x1d0] sm:$0xff]
  %v446 = vld [vmem:[%s1 + $0x1d8] sm:$0xff]
  %v447 = vld [vmem:[%s1 + $0x1e0] sm:$0xff]
  %v448 = vld [vmem:[%s1 + $0x1e8] sm:$0xff]
  %v449 = vld [vmem:[%s1 + $0x1f0] sm:$0xff]
  %v450 = vld [vmem:[%s1 + $0x1f8] sm:$0xff]
  %v451 = vlaneseq
  %v452 = vshrl.u32 %v451, 7
  %v453 = vsub.s32 0, %v452
  %v454 = vrot.slane %v14, %v453
  %455 = vmatprep.subr.mxu0 0.0
  %456 = vmatpush1.msra.mxu0 %v229
  %457 = vmatprep.subr.mxu0 0.0
  %458 = vmatpush1.msra.mxu0 %v234
  %459 = vmatprep.subr.mxu0 0.0
  %460 = vmatpush1.msra.mxu0 %v239
  %461 = vmatprep.subr.mxu0 0.0
  %462 = vmatpush1.msra.mxu0 %v244
  %463 = vmatprep.subr.mxu0 0.0
  %464 = vmatpush1.msra.mxu0 %v249
  %465 = vmatprep.subr.mxu0 0.0
  %466 = vmatpush1.msra.mxu0 %v254
  %467 = vmatprep.subr.mxu0 0.0
  %468 = vmatpush1.msra.mxu0 %v259
  %469 = vmatprep.subr.mxu0 0.0
  %470 = vmatpush1.msra.mxu0 %v264
  %471 = vmatprep.subr.mxu0 0.0
  %472 = vmatpush1.msra.mxu0 %v269
  %473 = vmatprep.subr.mxu0 0.0
  %474 = vmatpush1.msra.mxu0 %v274
  %475 = vmatprep.subr.mxu0 0.0
  %476 = vmatpush1.msra.mxu0 %v279
  %477 = vmatprep.subr.mxu0 0.0
  %478 = vmatpush1.msra.mxu0 %v284
  %479 = vmatprep.subr.mxu0 0.0
  %480 = vmatpush1.msra.mxu0 %v289
  %481 = vmatprep.subr.mxu0 0.0
  %482 = vmatpush1.msra.mxu0 %v294
  %483 = vmatprep.subr.mxu0 0.0
  %484 = vmatpush1.msra.mxu0 %v299
  %485 = vmatprep.subr.mxu0 0.0
  %486 = vmatpush1.msra.mxu0 %v304
  %487 = vmatprep.subr.mxu0 0.0
  %488 = vmatpush1.msra.mxu0 %v309
  %489 = vmatprep.subr.mxu0 0.0
  %490 = vmatpush1.msra.mxu0 %v314
  %491 = vmatprep.subr.mxu0 0.0
  %492 = vmatpush1.msra.mxu0 %v319
  %493 = vmatprep.subr.mxu0 0.0
  %494 = vmatpush1.msra.mxu0 %v324
  %495 = vmatprep.subr.mxu0 0.0
  %496 = vmatpush1.msra.mxu0 %v329
  %497 = vmatprep.subr.mxu0 0.0
  %498 = vmatpush1.msra.mxu0 %v334
  %499 = vmatprep.subr.mxu0 0.0
  %500 = vmatpush1.msra.mxu0 %v339
  %501 = vmatprep.subr.mxu0 0.0
  %502 = vmatpush1.msra.mxu0 %v344
  %503 = vmatprep.subr.mxu0 0.0
  %504 = vmatpush1.msra.mxu0 %v349
  %505 = vmatprep.subr.mxu0 0.0
  %506 = vmatpush1.msra.mxu0 %v354
  %507 = vmatprep.subr.mxu0 0.0
  %508 = vmatpush1.msra.mxu0 %v359
  %509 = vmatprep.subr.mxu0 0.0
  %510 = vmatpush1.msra.mxu0 %v364
  %511 = vmatprep.subr.mxu0 0.0
  %512 = vmatpush1.msra.mxu0 %v369
  %513 = vmatprep.subr.mxu0 0.0
  %514 = vmatpush1.msra.mxu0 %v374
  %515 = vmatprep.subr.mxu0 0.0
  %516 = vmatpush1.msra.mxu0 %v379
  %517 = vmatprep.subr.mxu0 0.0
  %518 = vmatpush1.msra.mxu0 %v384
  %519 = vmatprep.mubr.f32.mxu0 %v388
  %520 = vmatmul.mubr.f32.gmra.mrb[0].mxu0 %v387
  %v521 = vpop.f32.mrb[0].mxu0
  %v522 = vadd.f32 %v454, %v521
  %v523 = vpop.f32.mrb[0].mxu0
  %524 = vmatprep.mubr.f32.mxu0 %v390
  %525 = vmatmul.mubr.f32.gmra.mrb[0].mxu0 %v389
  %v526 = vpop.f32.mrb[0].mxu0
  %v527 = vadd.f32 %v454, %v526
  %v528 = vpop.f32.mrb[0].mxu0
  %529 = vmatprep.mubr.f32.mxu0 %v392
  %530 = vmatmul.mubr.f32.gmra.mrb[0].mxu0 %v391
  %v531 = vpop.f32.mrb[0].mxu0
  %v532 = vadd.f32 %v454, %v531
  %v533 = vpop.f32.mrb[0].mxu0
  %534 = vmatprep.mubr.f32.mxu0 %v394
  %535 = vmatmul.mubr.f32.gmra.mrb[0].mxu0 %v393
  %v536 = vpop.f32.mrb[0].mxu0
  %v537 = vadd.f32 %v454, %v536
  %v538 = vpop.f32.mrb[0].mxu0
  %539 = vmatprep.mubr.f32.mxu0 %v396
  %540 = vmatmul.mubr.f32.gmra.mrb[0].mxu0 %v395
  %v541 = vpop.f32.mrb[0].mxu0
  %v542 = vadd.f32 %v454, %v541
  %v543 = vpop.f32.mrb[0].mxu0
  %544 = vmatprep.mubr.f32.mxu0 %v398
  %545 = vmatmul.mubr.f32.gmra.mrb[0].mxu0 %v397
  %v546 = vpop.f32.mrb[0].mxu0
  %v547 = vadd.f32 %v454, %v546
  %v548 = vpop.f32.mrb[0].mxu0
  %549 = vmatprep.mubr.f32.mxu0 %v400
  %550 = vmatmul.mubr.f32.gmra.mrb[0].mxu0 %v399
  %v551 = vpop.f32.mrb[0].mxu0
  %v552 = vadd.f32 %v454, %v551
  %v553 = vpop.f32.mrb[0].mxu0
  %554 = vmatprep.mubr.f32.mxu0 %v402
  %555 = vmatmul.mubr.f32.gmra.mrb[0].mxu0 %v401
  %v556 = vpop.f32.mrb[0].mxu0
  %v557 = vadd.f32 %v454, %v556
  %v558 = vpop.f32.mrb[0].mxu0
  %559 = vmatprep.mubr.f32.mxu0 %v404
  %560 = vmatmul.mubr.f32.gmra.mrb[0].mxu0 %v403
  %v561 = vpop.f32.mrb[0].mxu0
  %v562 = vadd.f32 %v454, %v561
  %v563 = vpop.f32.mrb[0].mxu0
  %564 = vmatprep.mubr.f32.mxu0 %v406
  %565 = vmatmul.mubr.f32.gmra.mrb[0].mxu0 %v405
  %v566 = vpop.f32.mrb[0].mxu0
  %v567 = vadd.f32 %v454, %v566
  %v568 = vpop.f32.mrb[0].mxu0
  %569 = vmatprep.mubr.f32.mxu0 %v408
  %570 = vmatmul.mubr.f32.gmra.mrb[0].mxu0 %v407
  %v571 = vpop.f32.mrb[0].mxu0
  %v572 = vadd.f32 %v454, %v571
  %v573 = vpop.f32.mrb[0].mxu0
  %574 = vmatprep.mubr.f32.mxu0 %v410
  %575 = vmatmul.mubr.f32.gmra.mrb[0].mxu0 %v409
  %v576 = vpop.f32.mrb[0].mxu0
  %v577 = vadd.f32 %v454, %v576
  %v578 = vpop.f32.mrb[0].mxu0
  %579 = vmatprep.mubr.f32.mxu0 %v412
  %580 = vmatmul.mubr.f32.gmra.mrb[0].mxu0 %v411
  %v581 = vpop.f32.mrb[0].mxu0
  %v582 = vadd.f32 %v454, %v581
  %v583 = vpop.f32.mrb[0].mxu0
  %584 = vmatprep.mubr.f32.mxu0 %v414
  %585 = vmatmul.mubr.f32.gmra.mrb[0].mxu0 %v413
  %v586 = vpop.f32.mrb[0].mxu0
  %v587 = vadd.f32 %v454, %v586
  %v588 = vpop.f32.mrb[0].mxu0
  %589 = vmatprep.mubr.f32.mxu0 %v416
  %590 = vmatmul.mubr.f32.gmra.mrb[0].mxu0 %v415
  %v591 = vpop.f32.mrb[0].mxu0
  %v592 = vadd.f32 %v454, %v591
  %v593 = vpop.f32.mrb[0].mxu0
  %594 = vmatprep.mubr.f32.mxu0 %v418
  %595 = vmatmul.mubr.f32.gmra.mrb[0].mxu0 %v417
  %v596 = vpop.f32.mrb[0].mxu0
  %v597 = vadd.f32 %v454, %v596
  %v598 = vpop.f32.mrb[0].mxu0
  %599 = vmatprep.mubr.f32.mxu0 %v420
  %600 = vmatmul.mubr.f32.gmra.mrb[0].mxu0 %v419
  %v601 = vpop.f32.mrb[0].mxu0
  %v602 = vadd.f32 %v454, %v601
  %v603 = vpop.f32.mrb[0].mxu0
  %604 = vmatprep.mubr.f32.mxu0 %v422
  %605 = vmatmul.mubr.f32.gmra.mrb[0].mxu0 %v421
  %v606 = vpop.f32.mrb[0].mxu0
  %v607 = vadd.f32 %v454, %v606
  %v608 = vpop.f32.mrb[0].mxu0
  %609 = vmatprep.mubr.f32.mxu0 %v424
  %610 = vmatmul.mubr.f32.gmra.mrb[0].mxu0 %v423
  %v611 = vpop.f32.mrb[0].mxu0
  %v612 = vadd.f32 %v454, %v611
  %v613 = vpop.f32.mrb[0].mxu0
  %614 = vmatprep.mubr.f32.mxu0 %v426
  %615 = vmatmul.mubr.f32.gmra.mrb[0].mxu0 %v425
  %v616 = vpop.f32.mrb[0].mxu0
  %v617 = vadd.f32 %v454, %v616
  %v618 = vpop.f32.mrb[0].mxu0
  %619 = vmatprep.mubr.f32.mxu0 %v428
  %620 = vmatmul.mubr.f32.gmra.mrb[0].mxu0 %v427
  %v621 = vpop.f32.mrb[0].mxu0
  %v622 = vadd.f32 %v454, %v621
  %v623 = vpop.f32.mrb[0].mxu0
  %624 = vmatprep.mubr.f32.mxu0 %v430
  %625 = vmatmul.mubr.f32.gmra.mrb[0].mxu0 %v429
  %v626 = vpop.f32.mrb[0].mxu0
  %v627 = vadd.f32 %v454, %v626
  %v628 = vpop.f32.mrb[0].mxu0
  %629 = vmatprep.mubr.f32.mxu0 %v432
  %630 = vmatmul.mubr.f32.gmra.mrb[0].mxu0 %v431
  %v631 = vpop.f32.mrb[0].mxu0
  %v632 = vadd.f32 %v454, %v631
  %v633 = vpop.f32.mrb[0].mxu0
  %634 = vmatprep.mubr.f32.mxu0 %v434
  %635 = vmatmul.mubr.f32.gmra.mrb[0].mxu0 %v433
  %v636 = vpop.f32.mrb[0].mxu0
  %v637 = vadd.f32 %v454, %v636
  %v638 = vpop.f32.mrb[0].mxu0
  %639 = vmatprep.mubr.f32.mxu0 %v436
  %640 = vmatmul.mubr.f32.gmra.mrb[0].mxu0 %v435
  %v641 = vpop.f32.mrb[0].mxu0
  %v642 = vadd.f32 %v454, %v641
  %v643 = vpop.f32.mrb[0].mxu0
  %644 = vmatprep.mubr.f32.mxu0 %v438
  %645 = vmatmul.mubr.f32.gmra.mrb[0].mxu0 %v437
  %v646 = vpop.f32.mrb[0].mxu0
  %v647 = vadd.f32 %v454, %v646
  %v648 = vpop.f32.mrb[0].mxu0
  %649 = vmatprep.mubr.f32.mxu0 %v440
  %650 = vmatmul.mubr.f32.gmra.mrb[0].mxu0 %v439
  %v651 = vpop.f32.mrb[0].mxu0
  %v652 = vadd.f32 %v454, %v651
  %v653 = vpop.f32.mrb[0].mxu0
  %654 = vmatprep.mubr.f32.mxu0 %v442
  %655 = vmatmul.mubr.f32.gmra.mrb[0].mxu0 %v441
  %v656 = vpop.f32.mrb[0].mxu0
  %v657 = vadd.f32 %v454, %v656
  %v658 = vpop.f32.mrb[0].mxu0
  %659 = vmatprep.mubr.f32.mxu0 %v444
  %660 = vmatmul.mubr.f32.gmra.mrb[0].mxu0 %v443
  %v661 = vpop.f32.mrb[0].mxu0
  %v662 = vadd.f32 %v454, %v661
  %v663 = vpop.f32.mrb[0].mxu0
  %664 = vmatprep.mubr.f32.mxu0 %v446
  %665 = vmatmul.mubr.f32.gmra.mrb[0].mxu0 %v445
  %v666 = vpop.f32.mrb[0].mxu0
  %v667 = vadd.f32 %v454, %v666
  %v668 = vpop.f32.mrb[0].mxu0
  %669 = vmatprep.mubr.f32.mxu0 %v448
  %670 = vmatmul.mubr.f32.gmra.mrb[0].mxu0 %v447
  %v671 = vpop.f32.mrb[0].mxu0
  %v672 = vadd.f32 %v454, %v671
  %v673 = vpop.f32.mrb[0].mxu0
  %674 = vmatprep.mubr.f32.mxu0 %v450
  %675 = vmatmul.mubr.f32.gmra.mrb[0].mxu0 %v449
  %v676 = vpop.f32.mrb[0].mxu0
  %v677 = vadd.f32 %v454, %v676
  %v678 = vpop.f32.mrb[0].mxu0
  %679 = vdwg.mxu0
  %v680 = vmax.f32 %v522, 0.0
  %v681 = vmax.f32 %v527, 0.0
  %v682 = vmax.f32 %v532, 0.0
  %v683 = vmax.f32 %v537, 0.0
  %v684 = vmax.f32 %v542, 0.0
  %v685 = vmax.f32 %v547, 0.0
  %v686 = vmax.f32 %v552, 0.0
  %v687 = vmax.f32 %v557, 0.0
  %v688 = vmax.f32 %v562, 0.0
  %v689 = vmax.f32 %v567, 0.0
  %v690 = vmax.f32 %v572, 0.0
  %v691 = vmax.f32 %v577, 0.0
  %v692 = vmax.f32 %v582, 0.0
  %v693 = vmax.f32 %v587, 0.0
  %v694 = vmax.f32 %v592, 0.0
  %v695 = vmax.f32 %v597, 0.0
  %v696 = vmax.f32 %v602, 0.0
  %v697 = vmax.f32 %v607, 0.0
  %v698 = vmax.f32 %v612, 0.0
  %v699 = vmax.f32 %v617, 0.0
  %v700 = vmax.f32 %v622, 0.0
  %v701 = vmax.f32 %v627, 0.0
  %v702 = vmax.f32 %v632, 0.0
  %v703 = vmax.f32 %v637, 0.0
  %v704 = vmax.f32 %v642, 0.0
  %v705 = vmax.f32 %v647, 0.0
  %v706 = vmax.f32 %v652, 0.0
  %v707 = vmax.f32 %v657, 0.0
  %v708 = vmax.f32 %v662, 0.0
  %v709 = vmax.f32 %v667, 0.0
  %v710 = vmax.f32 %v672, 0.0
  %v711 = vmax.f32 %v677, 0.0
  %vm712 = vcmask 261120
  %v713 = vsel %vm712, %v680, 0.0
  %v714 = vsel %vm712, %v681, 0.0
  %v715 = vadd.f32 %v713, %v714
  %v716 = vsel %vm712, %v682, 0.0
  %v717 = vadd.f32 %v715, %v716
  %v718 = vsel %vm712, %v683, 0.0
  %v719 = vadd.f32 %v717, %v718
  %v720 = vsel %vm712, %v684, 0.0
  %v721 = vadd.f32 %v719, %v720
  %v722 = vsel %vm712, %v685, 0.0
  %v723 = vadd.f32 %v721, %v722
  %v724 = vsel %vm712, %v686, 0.0
  %v725 = vadd.f32 %v723, %v724
  %v726 = vsel %vm712, %v687, 0.0
  %v727 = vadd.f32 %v725, %v726
  %v728 = vsel %vm712, %v688, 0.0
  %v729 = vadd.f32 %v727, %v728
  %v730 = vsel %vm712, %v689, 0.0
  %v731 = vadd.f32 %v729, %v730
  %v732 = vsel %vm712, %v690, 0.0
  %v733 = vadd.f32 %v731, %v732
  %v734 = vsel %vm712, %v691, 0.0
  %v735 = vadd.f32 %v733, %v734
  %v736 = vsel %vm712, %v692, 0.0
  %v737 = vadd.f32 %v735, %v736
  %v738 = vsel %vm712, %v693, 0.0
  %v739 = vadd.f32 %v737, %v738
  %v740 = vsel %vm712, %v694, 0.0
  %v741 = vadd.f32 %v739, %v740
  %v742 = vsel %vm712, %v695, 0.0
  %v743 = vadd.f32 %v741, %v742
  %v744 = vsel %vm712, %v696, 0.0
  %v745 = vadd.f32 %v743, %v744
  %v746 = vsel %vm712, %v697, 0.0
  %v747 = vadd.f32 %v745, %v746
  %v748 = vsel %vm712, %v698, 0.0
  %v749 = vadd.f32 %v747, %v748
  %v750 = vsel %vm712, %v699, 0.0
  %v751 = vadd.f32 %v749, %v750
  %v752 = vsel %vm712, %v700, 0.0
  %v753 = vadd.f32 %v751, %v752
  %v754 = vsel %vm712, %v701, 0.0
  %v755 = vadd.f32 %v753, %v754
  %v756 = vsel %vm712, %v702, 0.0
  %v757 = vadd.f32 %v755, %v756
  %v758 = vsel %vm712, %v703, 0.0
  %v759 = vadd.f32 %v757, %v758
  %v760 = vsel %vm712, %v704, 0.0
  %v761 = vadd.f32 %v759, %v760
  %v762 = vsel %vm712, %v705, 0.0
  %v763 = vadd.f32 %v761, %v762
  %v764 = vsel %vm712, %v706, 0.0
  %v765 = vadd.f32 %v763, %v764
  %v766 = vsel %vm712, %v707, 0.0
  %v767 = vadd.f32 %v765, %v766
  %v768 = vsel %vm712, %v708, 0.0
  %v769 = vadd.f32 %v767, %v768
  %v770 = vsel %vm712, %v709, 0.0
  %v771 = vadd.f32 %v769, %v770
  %v772 = vsel %vm712, %v710, 0.0
  %v773 = vadd.f32 %v771, %v772
  %v774 = vsel %vm712, %v711, 0.0
  %v775 = vadd.f32 %v773, %v774
  %v776 = vrot.slane %v775, 4
  %v777 = vadd.f32 %v775, %v776
  %v778 = vrot.slane %v777, 2
  %v779 = vadd.f32 %v777, %v778
  %v780 = vrot.slane %v779, 1
  %v781 = vadd.f32 %v779, %v780
  %v782 = vmul.f32 %v781, 0.00390625
  %v783 = vmul.f32 %v680, %v680
  %v784 = vmul.f32 %v681, %v681
  %v785 = vmul.f32 %v682, %v682
  %v786 = vmul.f32 %v683, %v683
  %v787 = vmul.f32 %v684, %v684
  %v788 = vmul.f32 %v685, %v685
  %v789 = vmul.f32 %v686, %v686
  %v790 = vmul.f32 %v687, %v687
  %v791 = vmul.f32 %v688, %v688
  %v792 = vmul.f32 %v689, %v689
  %v793 = vmul.f32 %v690, %v690
  %v794 = vmul.f32 %v691, %v691
  %v795 = vmul.f32 %v692, %v692
  %v796 = vmul.f32 %v693, %v693
  %v797 = vmul.f32 %v694, %v694
  %v798 = vmul.f32 %v695, %v695
  %v799 = vmul.f32 %v696, %v696
  %v800 = vmul.f32 %v697, %v697
  %v801 = vmul.f32 %v698, %v698
  %v802 = vmul.f32 %v699, %v699
  %v803 = vmul.f32 %v700, %v700
  %v804 = vmul.f32 %v701, %v701
  %v805 = vmul.f32 %v702, %v702
  %v806 = vmul.f32 %v703, %v703
  %v807 = vmul.f32 %v704, %v704
  %v808 = vmul.f32 %v705, %v705
  %v809 = vmul.f32 %v706, %v706
  %v810 = vmul.f32 %v707, %v707
  %v811 = vmul.f32 %v708, %v708
  %v812 = vmul.f32 %v709, %v709
  %v813 = vmul.f32 %v710, %v710
  %v814 = vmul.f32 %v711, %v711
  %v815 = vsel %vm712, %v783, 0.0
  %v816 = vsel %vm712, %v784, 0.0
  %v817 = vadd.f32 %v815, %v816
  %v818 = vsel %vm712, %v785, 0.0
  %v819 = vadd.f32 %v817, %v818
  %v820 = vsel %vm712, %v786, 0.0
  %v821 = vadd.f32 %v819, %v820
  %v822 = vsel %vm712, %v787, 0.0
  %v823 = vadd.f32 %v821, %v822
  %v824 = vsel %vm712, %v788, 0.0
  %v825 = vadd.f32 %v823, %v824
  %v826 = vsel %vm712, %v789, 0.0
  %v827 = vadd.f32 %v825, %v826
  %v828 = vsel %vm712, %v790, 0.0
  %v829 = vadd.f32 %v827, %v828
  %v830 = vsel %vm712, %v791, 0.0
  %v831 = vadd.f32 %v829, %v830
  %v832 = vsel %vm712, %v792, 0.0
  %v833 = vadd.f32 %v831, %v832
  %v834 = vsel %vm712, %v793, 0.0
  %v835 = vadd.f32 %v833, %v834
  %v836 = vsel %vm712, %v794, 0.0
  %v837 = vadd.f32 %v835, %v836
  %v838 = vsel %vm712, %v795, 0.0
  %v839 = vadd.f32 %v837, %v838
  %v840 = vsel %vm712, %v796, 0.0
  %v841 = vadd.f32 %v839, %v840
  %v842 = vsel %vm712, %v797, 0.0
  %v843 = vadd.f32 %v841, %v842
  %v844 = vsel %vm712, %v798, 0.0
  %v845 = vadd.f32 %v843, %v844
  %v846 = vsel %vm712, %v799, 0.0
  %v847 = vadd.f32 %v845, %v846
  %v848 = vsel %vm712, %v800, 0.0
  %v849 = vadd.f32 %v847, %v848
  %v850 = vsel %vm712, %v801, 0.0
  %v851 = vadd.f32 %v849, %v850
  %v852 = vsel %vm712, %v802, 0.0
  %v853 = vadd.f32 %v851, %v852
  %v854 = vsel %vm712, %v803, 0.0
  %v855 = vadd.f32 %v853, %v854
  %v856 = vsel %vm712, %v804, 0.0
  %v857 = vadd.f32 %v855, %v856
  %v858 = vsel %vm712, %v805, 0.0
  %v859 = vadd.f32 %v857, %v858
  %v860 = vsel %vm712, %v806, 0.0
  %v861 = vadd.f32 %v859, %v860
  %v862 = vsel %vm712, %v807, 0.0
  %v863 = vadd.f32 %v861, %v862
  %v864 = vsel %vm712, %v808, 0.0
  %v865 = vadd.f32 %v863, %v864
  %v866 = vsel %vm712, %v809, 0.0
  %v867 = vadd.f32 %v865, %v866
  %v868 = vsel %vm712, %v810, 0.0
  %v869 = vadd.f32 %v867, %v868
  %v870 = vsel %vm712, %v811, 0.0
  %v871 = vadd.f32 %v869, %v870
  %v872 = vsel %vm712, %v812, 0.0
  %v873 = vadd.f32 %v871, %v872
  %v874 = vsel %vm712, %v813, 0.0
  %v875 = vadd.f32 %v873, %v874
  %v876 = vsel %vm712, %v814, 0.0
  %v877 = vadd.f32 %v875, %v876
  %v878 = vrot.slane %v877, 4
  %v879 = vadd.f32 %v877, %v878
  %v880 = vrot.slane %v879, 2
  %v881 = vadd.f32 %v879, %v880
  %v882 = vrot.slane %v881, 1
  %v883 = vadd.f32 %v881, %v882
  %v884 = vmul.f32 %v883, 0.00390625
  %v885 = vmul.f32 %v782, %v782
  %v886 = vsub.f32 %v884, %v885
  %v887 = vadd.f32 %v886, 1e-05
  %v888 = vrsqrt.pop %v887
  %v889 = vmul.f32 %v15, %v888
  %v890 = vlaneseq
  %v891 = vshrl.u32 %v890, 7
  %v892 = vsub.s32 0, %v891
  %v893 = vrot.slane %v889, %v892
  %v894 = vmul.f32 %v680, %v893
  %v895 = vmul.f32 %v681, %v893
  %v896 = vmul.f32 %v682, %v893
  %v897 = vmul.f32 %v683, %v893
  %v898 = vmul.f32 %v684, %v893
  %v899 = vmul.f32 %v685, %v893
  %v900 = vmul.f32 %v686, %v893
  %v901 = vmul.f32 %v687, %v893
  %v902 = vmul.f32 %v688, %v893
  %v903 = vmul.f32 %v689, %v893
  %v904 = vmul.f32 %v690, %v893
  %v905 = vmul.f32 %v691, %v893
  %v906 = vmul.f32 %v692, %v893
  %v907 = vmul.f32 %v693, %v893
  %v908 = vmul.f32 %v694, %v893
  %v909 = vmul.f32 %v695, %v893
  %v910 = vmul.f32 %v696, %v893
  %v911 = vmul.f32 %v697, %v893
  %v912 = vmul.f32 %v698, %v893
  %v913 = vmul.f32 %v699, %v893
  %v914 = vmul.f32 %v700, %v893
  %v915 = vmul.f32 %v701, %v893
  %v916 = vmul.f32 %v702, %v893
  %v917 = vmul.f32 %v703, %v893
  %v918 = vmul.f32 %v704, %v893
  %v919 = vmul.f32 %v705, %v893
  %v920 = vmul.f32 %v706, %v893
  %v921 = vmul.f32 %v707, %v893
  %v922 = vmul.f32 %v708, %v893
  %v923 = vmul.f32 %v709, %v893
  %v924 = vmul.f32 %v710, %v893
  %v925 = vmul.f32 %v711, %v893
  %v926 = vmul.f32 %v782, %v889
  %v927 = vsub.f32 %v16, %v926
  %v928 = vlaneseq
  %v929 = vshrl.u32 %v928, 7
  %v930 = vsub.s32 0, %v929
  %v931 = vrot.slane %v927, %v930
  %v932 = vadd.f32 %v894, %v931
  %v933 = vadd.f32 %v895, %v931
  %v934 = vadd.f32 %v896, %v931
  %v935 = vadd.f32 %v897, %v931
  %v936 = vadd.f32 %v898, %v931
  %v937 = vadd.f32 %v899, %v931
  %v938 = vadd.f32 %v900, %v931
  %v939 = vadd.f32 %v901, %v931
  %v940 = vadd.f32 %v902, %v931
  %v941 = vadd.f32 %v903, %v931
  %v942 = vadd.f32 %v904, %v931
  %v943 = vadd.f32 %v905, %v931
  %v944 = vadd.f32 %v906, %v931
  %v945 = vadd.f32 %v907, %v931
  %v946 = vadd.f32 %v908, %v931
  %v947 = vadd.f32 %v909, %v931
  %v948 = vadd.f32 %v910, %v931
  %v949 = vadd.f32 %v911, %v931
  %v950 = vadd.f32 %v912, %v931
  %v951 = vadd.f32 %v913, %v931
  %v952 = vadd.f32 %v914, %v931
  %v953 = vadd.f32 %v915, %v931
  %v954 = vadd.f32 %v916, %v931
  %v955 = vadd.f32 %v917, %v931
  %v956 = vadd.f32 %v918, %v931
  %v957 = vadd.f32 %v919, %v931
  %v958 = vadd.f32 %v920, %v931
  %v959 = vadd.f32 %v921, %v931
  %v960 = vadd.f32 %v922, %v931
  %v961 = vadd.f32 %v923, %v931
  %v962 = vadd.f32 %v924, %v931
  %v963 = vadd.f32 %v925, %v931
  %v964 = vlaneseq
  %v965 = vshrl.u32 %v964, 7
  %v966 = vsub.s32 0, %v965
  %v967 = vrot.slane %v17, %v966
  %v969 = vsel %vm712, %v932, 0
  %v972 = vsel %vm712, %v933, 0
  %v975 = vsel %vm712, %v934, 0
  %v978 = vsel %vm712, %v935, 0
  %v981 = vsel %vm712, %v936, 0
  %v984 = vsel %vm712, %v937, 0
  %v987 = vsel %vm712, %v938, 0
  %v990 = vsel %vm712, %v939, 0
  %v993 = vsel %vm712, %v940, 0
  %v996 = vsel %vm712, %v941, 0
  %v999 = vsel %vm712, %v942, 0
  %v1002 = vsel %vm712, %v943, 0
  %v1005 = vsel %vm712, %v944, 0
  %v1008 = vsel %vm712, %v945, 0
  %v1011 = vsel %vm712, %v946, 0
  %v1014 = vsel %vm712, %v947, 0
  %v1017 = vsel %vm712, %v948, 0
  %v1020 = vsel %vm712, %v949, 0
  %v1023 = vsel %vm712, %v950, 0
  %v1026 = vsel %vm712, %v951, 0
  %v1029 = vsel %vm712, %v952, 0
  %v1032 = vsel %vm712, %v953, 0
  %v1035 = vsel %vm712, %v954, 0
  %v1038 = vsel %vm712, %v955, 0
  %v1041 = vsel %vm712, %v956, 0
  %v1044 = vsel %vm712, %v957, 0
  %v1047 = vsel %vm712, %v958, 0
  %v1050 = vsel %vm712, %v959, 0
  %v1053 = vsel %vm712, %v960, 0
  %v1056 = vsel %vm712, %v961, 0
  %v1059 = vsel %vm712, %v962, 0
  %v1062 = vsel %vm712, %v963, 0
  %1064 = vmatprep.subr.mxu0 0.0
  %1065 = vmatpush1.msra.mxu0 %v25
  %1066 = vmatprep.subr.mxu0 0.0
  %1067 = vmatpush1.msra.mxu0 %v26
  %1068 = vmatprep.subr.mxu0 0.0
  %1069 = vmatpush1.msra.mxu0 %v27
  %1070 = vmatprep.subr.mxu0 0.0
  %1071 = vmatpush1.msra.mxu0 %v28
  %1072 = vmatprep.subr.mxu0 0.0
  %1073 = vmatpush1.msra.mxu0 0.0
  %1074 = vmatprep.subr.mxu0 0.0
  %1075 = vmatpush1.msra.mxu0 0.0
  %1076 = vmatprep.subr.mxu0 0.0
  %1077 = vmatpush1.msra.mxu0 0.0
  %1078 = vmatprep.subr.mxu0 0.0
  %1079 = vmatpush1.msra.mxu0 0.0
  %1080 = vmatprep.subr.mxu0 0.0
  %1081 = vmatpush1.msra.mxu0 0.0
  %1082 = vmatprep.subr.mxu0 0.0
  %1083 = vmatpush1.msra.mxu0 0.0
  %1084 = vmatprep.subr.mxu0 0.0
  %1085 = vmatpush1.msra.mxu0 0.0
  %1086 = vmatprep.subr.mxu0 0.0
  %1087 = vmatpush1.msra.mxu0 0.0
  %1088 = vmatprep.subr.mxu0 0.0
  %1089 = vmatpush1.msra.mxu0 0.0
  %1090 = vmatprep.subr.mxu0 0.0
  %1091 = vmatpush1.msra.mxu0 0.0
  %1092 = vmatprep.subr.mxu0 0.0
  %1093 = vmatpush1.msra.mxu0 0.0
  %1094 = vmatprep.subr.mxu0 0.0
  %1095 = vmatpush1.msra.mxu0 0.0
  %1096 = vmatprep.subr.mxu0 0.0
  %1097 = vmatpush1.msra.mxu0 0.0
  %1098 = vmatprep.subr.mxu0 0.0
  %1099 = vmatpush1.msra.mxu0 0.0
  %1100 = vmatprep.subr.mxu0 0.0
  %1101 = vmatpush1.msra.mxu0 0.0
  %1102 = vmatprep.subr.mxu0 0.0
  %1103 = vmatpush1.msra.mxu0 0.0
  %1104 = vmatprep.subr.mxu0 0.0
  %1105 = vmatpush1.msra.mxu0 0.0
  %1106 = vmatprep.subr.mxu0 0.0
  %1107 = vmatpush1.msra.mxu0 0.0
  %1108 = vmatprep.subr.mxu0 0.0
  %1109 = vmatpush1.msra.mxu0 0.0
  %1110 = vmatprep.subr.mxu0 0.0
  %1111 = vmatpush1.msra.mxu0 0.0
  %1112 = vmatprep.subr.mxu0 0.0
  %1113 = vmatpush1.msra.mxu0 0.0
  %1114 = vmatprep.subr.mxu0 0.0
  %1115 = vmatpush1.msra.mxu0 0.0
  %1116 = vmatprep.subr.mxu0 0.0
  %1117 = vmatpush1.msra.mxu0 0.0
  %1118 = vmatprep.subr.mxu0 0.0
  %1119 = vmatpush1.msra.mxu0 0.0
  %1120 = vmatprep.subr.mxu0 0.0
  %1121 = vmatpush1.msra.mxu0 0.0
  %1122 = vmatprep.subr.mxu0 0.0
  %1123 = vmatpush1.msra.mxu0 0.0
  %1124 = vmatprep.subr.mxu0 0.0
  %1125 = vmatpush1.msra.mxu0 0.0
  %1126 = vmatprep.subr.mxu0 0.0
  %1127 = vmatpush1.msra.mxu0 0.0
  %1128 = vmatprep.mubr.f32.mxu0 0.0
  %1129 = vmatmul.mubr.f32.gmra.mrb[0].mxu0 %v969
  %v1130 = vpop.f32.mrb[0].mxu0
  %v1131 = vadd.f32 %v967, %v1130
  %v1132 = vpop.f32.mrb[0].mxu0
  %1133 = vmatprep.mubr.f32.mxu0 0.0
  %1134 = vmatmul.mubr.f32.gmra.mrb[0].mxu0 %v972
  %v1135 = vpop.f32.mrb[0].mxu0
  %v1136 = vadd.f32 %v967, %v1135
  %v1137 = vpop.f32.mrb[0].mxu0
  %1138 = vmatprep.mubr.f32.mxu0 0.0
  %1139 = vmatmul.mubr.f32.gmra.mrb[0].mxu0 %v975
  %v1140 = vpop.f32.mrb[0].mxu0
  %v1141 = vadd.f32 %v967, %v1140
  %v1142 = vpop.f32.mrb[0].mxu0
  %1143 = vmatprep.mubr.f32.mxu0 0.0
  %1144 = vmatmul.mubr.f32.gmra.mrb[0].mxu0 %v978
  %v1145 = vpop.f32.mrb[0].mxu0
  %v1146 = vadd.f32 %v967, %v1145
  %v1147 = vpop.f32.mrb[0].mxu0
  %1148 = vmatprep.mubr.f32.mxu0 0.0
  %1149 = vmatmul.mubr.f32.gmra.mrb[0].mxu0 %v981
  %v1150 = vpop.f32.mrb[0].mxu0
  %v1151 = vadd.f32 %v967, %v1150
  %v1152 = vpop.f32.mrb[0].mxu0
  %1153 = vmatprep.mubr.f32.mxu0 0.0
  %1154 = vmatmul.mubr.f32.gmra.mrb[0].mxu0 %v984
  %v1155 = vpop.f32.mrb[0].mxu0
  %v1156 = vadd.f32 %v967, %v1155
  %v1157 = vpop.f32.mrb[0].mxu0
  %1158 = vmatprep.mubr.f32.mxu0 0.0
  %1159 = vmatmul.mubr.f32.gmra.mrb[0].mxu0 %v987
  %v1160 = vpop.f32.mrb[0].mxu0
  %v1161 = vadd.f32 %v967, %v1160
  %v1162 = vpop.f32.mrb[0].mxu0
  %1163 = vmatprep.mubr.f32.mxu0 0.0
  %1164 = vmatmul.mubr.f32.gmra.mrb[0].mxu0 %v990
  %v1165 = vpop.f32.mrb[0].mxu0
  %v1166 = vadd.f32 %v967, %v1165
  %v1167 = vpop.f32.mrb[0].mxu0
  %1168 = vmatprep.mubr.f32.mxu0 0.0
  %1169 = vmatmul.mubr.f32.gmra.mrb[0].mxu0 %v993
  %v1170 = vpop.f32.mrb[0].mxu0
  %v1171 = vadd.f32 %v967, %v1170
  %v1172 = vpop.f32.mrb[0].mxu0
  %1173 = vmatprep.mubr.f32.mxu0 0.0
  %1174 = vmatmul.mubr.f32.gmra.mrb[0].mxu0 %v996
  %v1175 = vpop.f32.mrb[0].mxu0
  %v1176 = vadd.f32 %v967, %v1175
  %v1177 = vpop.f32.mrb[0].mxu0
  %1178 = vmatprep.mubr.f32.mxu0 0.0
  %1179 = vmatmul.mubr.f32.gmra.mrb[0].mxu0 %v999
  %v1180 = vpop.f32.mrb[0].mxu0
  %v1181 = vadd.f32 %v967, %v1180
  %v1182 = vpop.f32.mrb[0].mxu0
  %1183 = vmatprep.mubr.f32.mxu0 0.0
  %1184 = vmatmul.mubr.f32.gmra.mrb[0].mxu0 %v1002
  %v1185 = vpop.f32.mrb[0].mxu0
  %v1186 = vadd.f32 %v967, %v1185
  %v1187 = vpop.f32.mrb[0].mxu0
  %1188 = vmatprep.mubr.f32.mxu0 0.0
  %1189 = vmatmul.mubr.f32.gmra.mrb[0].mxu0 %v1005
  %v1190 = vpop.f32.mrb[0].mxu0
  %v1191 = vadd.f32 %v967, %v1190
  %v1192 = vpop.f32.mrb[0].mxu0
  %1193 = vmatprep.mubr.f32.mxu0 0.0
  %1194 = vmatmul.mubr.f32.gmra.mrb[0].mxu0 %v1008
  %v1195 = vpop.f32.mrb[0].mxu0
  %v1196 = vadd.f32 %v967, %v1195
  %v1197 = vpop.f32.mrb[0].mxu0
  %1198 = vmatprep.mubr.f32.mxu0 0.0
  %1199 = vmatmul.mubr.f32.gmra.mrb[0].mxu0 %v1011
  %v1200 = vpop.f32.mrb[0].mxu0
  %v1201 = vadd.f32 %v967, %v1200
  %v1202 = vpop.f32.mrb[0].mxu0
  %1203 = vmatprep.mubr.f32.mxu0 0.0
  %1204 = vmatmul.mubr.f32.gmra.mrb[0].mxu0 %v1014
  %v1205 = vpop.f32.mrb[0].mxu0
  %v1206 = vadd.f32 %v967, %v1205
  %v1207 = vpop.f32.mrb[0].mxu0
  %1208 = vmatprep.mubr.f32.mxu0 0.0
  %1209 = vmatmul.mubr.f32.gmra.mrb[0].mxu0 %v1017
  %v1210 = vpop.f32.mrb[0].mxu0
  %v1211 = vadd.f32 %v967, %v1210
  %v1212 = vpop.f32.mrb[0].mxu0
  %1213 = vmatprep.mubr.f32.mxu0 0.0
  %1214 = vmatmul.mubr.f32.gmra.mrb[0].mxu0 %v1020
  %v1215 = vpop.f32.mrb[0].mxu0
  %v1216 = vadd.f32 %v967, %v1215
  %v1217 = vpop.f32.mrb[0].mxu0
  %1218 = vmatprep.mubr.f32.mxu0 0.0
  %1219 = vmatmul.mubr.f32.gmra.mrb[0].mxu0 %v1023
  %v1220 = vpop.f32.mrb[0].mxu0
  %v1221 = vadd.f32 %v967, %v1220
  %v1222 = vpop.f32.mrb[0].mxu0
  %1223 = vmatprep.mubr.f32.mxu0 0.0
  %1224 = vmatmul.mubr.f32.gmra.mrb[0].mxu0 %v1026
  %v1225 = vpop.f32.mrb[0].mxu0
  %v1226 = vadd.f32 %v967, %v1225
  %v1227 = vpop.f32.mrb[0].mxu0
  %1228 = vmatprep.mubr.f32.mxu0 0.0
  %1229 = vmatmul.mubr.f32.gmra.mrb[0].mxu0 %v1029
  %v1230 = vpop.f32.mrb[0].mxu0
  %v1231 = vadd.f32 %v967, %v1230
  %v1232 = vpop.f32.mrb[0].mxu0
  %1233 = vmatprep.mubr.f32.mxu0 0.0
  %1234 = vmatmul.mubr.f32.gmra.mrb[0].mxu0 %v1032
  %v1235 = vpop.f32.mrb[0].mxu0
  %v1236 = vadd.f32 %v967, %v1235
  %v1237 = vpop.f32.mrb[0].mxu0
  %1238 = vmatprep.mubr.f32.mxu0 0.0
  %1239 = vmatmul.mubr.f32.gmra.mrb[0].mxu0 %v1035
  %v1240 = vpop.f32.mrb[0].mxu0
  %v1241 = vadd.f32 %v967, %v1240
  %v1242 = vpop.f32.mrb[0].mxu0
  %1243 = vmatprep.mubr.f32.mxu0 0.0
  %1244 = vmatmul.mubr.f32.gmra.mrb[0].mxu0 %v1038
  %v1245 = vpop.f32.mrb[0].mxu0
  %v1246 = vadd.f32 %v967, %v1245
  %v1247 = vpop.f32.mrb[0].mxu0
  %1248 = vmatprep.mubr.f32.mxu0 0.0
  %1249 = vmatmul.mubr.f32.gmra.mrb[0].mxu0 %v1041
  %v1250 = vpop.f32.mrb[0].mxu0
  %v1251 = vadd.f32 %v967, %v1250
  %v1252 = vpop.f32.mrb[0].mxu0
  %1253 = vmatprep.mubr.f32.mxu0 0.0
  %1254 = vmatmul.mubr.f32.gmra.mrb[0].mxu0 %v1044
  %v1255 = vpop.f32.mrb[0].mxu0
  %v1256 = vadd.f32 %v967, %v1255
  %v1257 = vpop.f32.mrb[0].mxu0
  %1258 = vmatprep.mubr.f32.mxu0 0.0
  %1259 = vmatmul.mubr.f32.gmra.mrb[0].mxu0 %v1047
  %v1260 = vpop.f32.mrb[0].mxu0
  %v1261 = vadd.f32 %v967, %v1260
  %v1262 = vpop.f32.mrb[0].mxu0
  %1263 = vmatprep.mubr.f32.mxu0 0.0
  %1264 = vmatmul.mubr.f32.gmra.mrb[0].mxu0 %v1050
  %v1265 = vpop.f32.mrb[0].mxu0
  %v1266 = vadd.f32 %v967, %v1265
  %v1267 = vpop.f32.mrb[0].mxu0
  %1268 = vmatprep.mubr.f32.mxu0 0.0
  %1269 = vmatmul.mubr.f32.gmra.mrb[0].mxu0 %v1053
  %v1270 = vpop.f32.mrb[0].mxu0
  %v1271 = vadd.f32 %v967, %v1270
  %v1272 = vpop.f32.mrb[0].mxu0
  %1273 = vmatprep.mubr.f32.mxu0 0.0
  %1274 = vmatmul.mubr.f32.gmra.mrb[0].mxu0 %v1056
  %v1275 = vpop.f32.mrb[0].mxu0
  %v1276 = vadd.f32 %v967, %v1275
  %v1277 = vpop.f32.mrb[0].mxu0
  %1278 = vmatprep.mubr.f32.mxu0 0.0
  %1279 = vmatmul.mubr.f32.gmra.mrb[0].mxu0 %v1059
  %v1280 = vpop.f32.mrb[0].mxu0
  %v1281 = vadd.f32 %v967, %v1280
  %v1282 = vpop.f32.mrb[0].mxu0
  %1283 = vmatprep.mubr.f32.mxu0 0.0
  %1284 = vmatmul.mubr.f32.gmra.mrb[0].mxu0 %v1062
  %v1285 = vpop.f32.mrb[0].mxu0
  %v1286 = vadd.f32 %v967, %v1285
  %v1287 = vpop.f32.mrb[0].mxu0
  %1288 = vdwg.mxu0
  %v1289 = vmax.f32 %v1131, 0.0
  %v1290 = vmax.f32 %v1136, 0.0
  %v1291 = vmax.f32 %v1141, 0.0
  %v1292 = vmax.f32 %v1146, 0.0
  %v1293 = vmax.f32 %v1151, 0.0
  %v1294 = vmax.f32 %v1156, 0.0
  %v1295 = vmax.f32 %v1161, 0.0
  %v1296 = vmax.f32 %v1166, 0.0
  %v1297 = vmax.f32 %v1171, 0.0
  %v1298 = vmax.f32 %v1176, 0.0
  %v1299 = vmax.f32 %v1181, 0.0
  %v1300 = vmax.f32 %v1186, 0.0
  %v1301 = vmax.f32 %v1191, 0.0
  %v1302 = vmax.f32 %v1196, 0.0
  %v1303 = vmax.f32 %v1201, 0.0
  %v1304 = vmax.f32 %v1206, 0.0
  %v1305 = vmax.f32 %v1211, 0.0
  %v1306 = vmax.f32 %v1216, 0.0
  %v1307 = vmax.f32 %v1221, 0.0
  %v1308 = vmax.f32 %v1226, 0.0
  %v1309 = vmax.f32 %v1231, 0.0
  %v1310 = vmax.f32 %v1236, 0.0
  %v1311 = vmax.f32 %v1241, 0.0
  %v1312 = vmax.f32 %v1246, 0.0
  %v1313 = vmax.f32 %v1251, 0.0
  %v1314 = vmax.f32 %v1256, 0.0
  %v1315 = vmax.f32 %v1261, 0.0
  %v1316 = vmax.f32 %v1266, 0.0
  %v1317 = vmax.f32 %v1271, 0.0
  %v1318 = vmax.f32 %v1276, 0.0
  %v1319 = vmax.f32 %v1281, 0.0
  %v1320 = vmax.f32 %v1286, 0.0
  %v1321 = vsel %vm712, %v1289, 0.0
  %v1322 = vsel %vm712, %v1290, 0.0
  %v1323 = vadd.f32 %v1321, %v1322
  %v1324 = vsel %vm712, %v1291, 0.0
  %v1325 = vadd.f32 %v1323, %v1324
  %v1326 = vsel %vm712, %v1292, 0.0
  %v1327 = vadd.f32 %v1325, %v1326
  %v1328 = vsel %vm712, %v1293, 0.0
  %v1329 = vadd.f32 %v1327, %v1328
  %v1330 = vsel %vm712, %v1294, 0.0
  %v1331 = vadd.f32 %v1329, %v1330
  %v1332 = vsel %vm712, %v1295, 0.0
  %v1333 = vadd.f32 %v1331, %v1332
  %v1334 = vsel %vm712, %v1296, 0.0
  %v1335 = vadd.f32 %v1333, %v1334
  %v1336 = vsel %vm712, %v1297, 0.0
  %v1337 = vadd.f32 %v1335, %v1336
  %v1338 = vsel %vm712, %v1298, 0.0
  %v1339 = vadd.f32 %v1337, %v1338
  %v1340 = vsel %vm712, %v1299, 0.0
  %v1341 = vadd.f32 %v1339, %v1340
  %v1342 = vsel %vm712, %v1300, 0.0
  %v1343 = vadd.f32 %v1341, %v1342
  %v1344 = vsel %vm712, %v1301, 0.0
  %v1345 = vadd.f32 %v1343, %v1344
  %v1346 = vsel %vm712, %v1302, 0.0
  %v1347 = vadd.f32 %v1345, %v1346
  %v1348 = vsel %vm712, %v1303, 0.0
  %v1349 = vadd.f32 %v1347, %v1348
  %v1350 = vsel %vm712, %v1304, 0.0
  %v1351 = vadd.f32 %v1349, %v1350
  %v1352 = vsel %vm712, %v1305, 0.0
  %v1353 = vadd.f32 %v1351, %v1352
  %v1354 = vsel %vm712, %v1306, 0.0
  %v1355 = vadd.f32 %v1353, %v1354
  %v1356 = vsel %vm712, %v1307, 0.0
  %v1357 = vadd.f32 %v1355, %v1356
  %v1358 = vsel %vm712, %v1308, 0.0
  %v1359 = vadd.f32 %v1357, %v1358
  %v1360 = vsel %vm712, %v1309, 0.0
  %v1361 = vadd.f32 %v1359, %v1360
  %v1362 = vsel %vm712, %v1310, 0.0
  %v1363 = vadd.f32 %v1361, %v1362
  %v1364 = vsel %vm712, %v1311, 0.0
  %v1365 = vadd.f32 %v1363, %v1364
  %v1366 = vsel %vm712, %v1312, 0.0
  %v1367 = vadd.f32 %v1365, %v1366
  %v1368 = vsel %vm712, %v1313, 0.0
  %v1369 = vadd.f32 %v1367, %v1368
  %v1370 = vsel %vm712, %v1314, 0.0
  %v1371 = vadd.f32 %v1369, %v1370
  %v1372 = vsel %vm712, %v1315, 0.0
  %v1373 = vadd.f32 %v1371, %v1372
  %v1374 = vsel %vm712, %v1316, 0.0
  %v1375 = vadd.f32 %v1373, %v1374
  %v1376 = vsel %vm712, %v1317, 0.0
  %v1377 = vadd.f32 %v1375, %v1376
  %v1378 = vsel %vm712, %v1318, 0.0
  %v1379 = vadd.f32 %v1377, %v1378
  %v1380 = vsel %vm712, %v1319, 0.0
  %v1381 = vadd.f32 %v1379, %v1380
  %v1382 = vsel %vm712, %v1320, 0.0
  %v1383 = vadd.f32 %v1381, %v1382
  %v1384 = vrot.slane %v1383, 4
  %v1385 = vadd.f32 %v1383, %v1384
  %v1386 = vrot.slane %v1385, 2
  %v1387 = vadd.f32 %v1385, %v1386
  %v1388 = vrot.slane %v1387, 1
  %v1389 = vadd.f32 %v1387, %v1388
  %v1390 = vmul.f32 %v1389, 0.00390625
  %v1391 = vmul.f32 %v1289, %v1289
  %v1392 = vmul.f32 %v1290, %v1290
  %v1393 = vmul.f32 %v1291, %v1291
  %v1394 = vmul.f32 %v1292, %v1292
  %v1395 = vmul.f32 %v1293, %v1293
  %v1396 = vmul.f32 %v1294, %v1294
  %v1397 = vmul.f32 %v1295, %v1295
  %v1398 = vmul.f32 %v1296, %v1296
  %v1399 = vmul.f32 %v1297, %v1297
  %v1400 = vmul.f32 %v1298, %v1298
  %v1401 = vmul.f32 %v1299, %v1299
  %v1402 = vmul.f32 %v1300, %v1300
  %v1403 = vmul.f32 %v1301, %v1301
  %v1404 = vmul.f32 %v1302, %v1302
  %v1405 = vmul.f32 %v1303, %v1303
  %v1406 = vmul.f32 %v1304, %v1304
  %v1407 = vmul.f32 %v1305, %v1305
  %v1408 = vmul.f32 %v1306, %v1306
  %v1409 = vmul.f32 %v1307, %v1307
  %v1410 = vmul.f32 %v1308, %v1308
  %v1411 = vmul.f32 %v1309, %v1309
  %v1412 = vmul.f32 %v1310, %v1310
  %v1413 = vmul.f32 %v1311, %v1311
  %v1414 = vmul.f32 %v1312, %v1312
  %v1415 = vmul.f32 %v1313, %v1313
  %v1416 = vmul.f32 %v1314, %v1314
  %v1417 = vmul.f32 %v1315, %v1315
  %v1418 = vmul.f32 %v1316, %v1316
  %v1419 = vmul.f32 %v1317, %v1317
  %v1420 = vmul.f32 %v1318, %v1318
  %v1421 = vmul.f32 %v1319, %v1319
  %v1422 = vmul.f32 %v1320, %v1320
  %v1423 = vsel %vm712, %v1391, 0.0
  %v1424 = vsel %vm712, %v1392, 0.0
  %v1425 = vadd.f32 %v1423, %v1424
  %v1426 = vsel %vm712, %v1393, 0.0
  %v1427 = vadd.f32 %v1425, %v1426
  %v1428 = vsel %vm712, %v1394, 0.0
  %v1429 = vadd.f32 %v1427, %v1428
  %v1430 = vsel %vm712, %v1395, 0.0
  %v1431 = vadd.f32 %v1429, %v1430
  %v1432 = vsel %vm712, %v1396, 0.0
  %v1433 = vadd.f32 %v1431, %v1432
  %v1434 = vsel %vm712, %v1397, 0.0
  %v1435 = vadd.f32 %v1433, %v1434
  %v1436 = vsel %vm712, %v1398, 0.0
  %v1437 = vadd.f32 %v1435, %v1436
  %v1438 = vsel %vm712, %v1399, 0.0
  %v1439 = vadd.f32 %v1437, %v1438
  %v1440 = vsel %vm712, %v1400, 0.0
  %v1441 = vadd.f32 %v1439, %v1440
  %v1442 = vsel %vm712, %v1401, 0.0
  %v1443 = vadd.f32 %v1441, %v1442
  %v1444 = vsel %vm712, %v1402, 0.0
  %v1445 = vadd.f32 %v1443, %v1444
  %v1446 = vsel %vm712, %v1403, 0.0
  %v1447 = vadd.f32 %v1445, %v1446
  %v1448 = vsel %vm712, %v1404, 0.0
  %v1449 = vadd.f32 %v1447, %v1448
  %v1450 = vsel %vm712, %v1405, 0.0
  %v1451 = vadd.f32 %v1449, %v1450
  %v1452 = vsel %vm712, %v1406, 0.0
  %v1453 = vadd.f32 %v1451, %v1452
  %v1454 = vsel %vm712, %v1407, 0.0
  %v1455 = vadd.f32 %v1453, %v1454
  %v1456 = vsel %vm712, %v1408, 0.0
  %v1457 = vadd.f32 %v1455, %v1456
  %v1458 = vsel %vm712, %v1409, 0.0
  %v1459 = vadd.f32 %v1457, %v1458
  %v1460 = vsel %vm712, %v1410, 0.0
  %v1461 = vadd.f32 %v1459, %v1460
  %v1462 = vsel %vm712, %v1411, 0.0
  %v1463 = vadd.f32 %v1461, %v1462
  %v1464 = vsel %vm712, %v1412, 0.0
  %v1465 = vadd.f32 %v1463, %v1464
  %v1466 = vsel %vm712, %v1413, 0.0
  %v1467 = vadd.f32 %v1465, %v1466
  %v1468 = vsel %vm712, %v1414, 0.0
  %v1469 = vadd.f32 %v1467, %v1468
  %v1470 = vsel %vm712, %v1415, 0.0
  %v1471 = vadd.f32 %v1469, %v1470
  %v1472 = vsel %vm712, %v1416, 0.0
  %v1473 = vadd.f32 %v1471, %v1472
  %v1474 = vsel %vm712, %v1417, 0.0
  %v1475 = vadd.f32 %v1473, %v1474
  %v1476 = vsel %vm712, %v1418, 0.0
  %v1477 = vadd.f32 %v1475, %v1476
  %v1478 = vsel %vm712, %v1419, 0.0
  %v1479 = vadd.f32 %v1477, %v1478
  %v1480 = vsel %vm712, %v1420, 0.0
  %v1481 = vadd.f32 %v1479, %v1480
  %v1482 = vsel %vm712, %v1421, 0.0
  %v1483 = vadd.f32 %v1481, %v1482
  %v1484 = vsel %vm712, %v1422, 0.0
  %v1485 = vadd.f32 %v1483, %v1484
  %v1486 = vrot.slane %v1485, 4
  %v1487 = vadd.f32 %v1485, %v1486
  %v1488 = vrot.slane %v1487, 2
  %v1489 = vadd.f32 %v1487, %v1488
  %v1490 = vrot.slane %v1489, 1
  %v1491 = vadd.f32 %v1489, %v1490
  %v1492 = vmul.f32 %v1491, 0.00390625
  %v1493 = vmul.f32 %v1390, %v1390
  %v1494 = vsub.f32 %v1492, %v1493
  %v1495 = vadd.f32 %v1494, 1e-05
  %v1496 = vrsqrt.pop %v1495
  %v1497 = vmul.f32 %v18, %v1496
  %v1498 = vlaneseq
  %v1499 = vshrl.u32 %v1498, 7
  %v1500 = vsub.s32 0, %v1499
  %v1501 = vrot.slane %v1497, %v1500
  %v1502 = vmul.f32 %v1289, %v1501
  %v1503 = vmul.f32 %v1290, %v1501
  %v1504 = vmul.f32 %v1291, %v1501
  %v1505 = vmul.f32 %v1292, %v1501
  %v1506 = vmul.f32 %v1293, %v1501
  %v1507 = vmul.f32 %v1294, %v1501
  %v1508 = vmul.f32 %v1295, %v1501
  %v1509 = vmul.f32 %v1296, %v1501
  %v1510 = vmul.f32 %v1297, %v1501
  %v1511 = vmul.f32 %v1298, %v1501
  %v1512 = vmul.f32 %v1299, %v1501
  %v1513 = vmul.f32 %v1300, %v1501
  %v1514 = vmul.f32 %v1301, %v1501
  %v1515 = vmul.f32 %v1302, %v1501
  %v1516 = vmul.f32 %v1303, %v1501
  %v1517 = vmul.f32 %v1304, %v1501
  %v1518 = vmul.f32 %v1305, %v1501
  %v1519 = vmul.f32 %v1306, %v1501
  %v1520 = vmul.f32 %v1307, %v1501
  %v1521 = vmul.f32 %v1308, %v1501
  %v1522 = vmul.f32 %v1309, %v1501
  %v1523 = vmul.f32 %v1310, %v1501
  %v1524 = vmul.f32 %v1311, %v1501
  %v1525 = vmul.f32 %v1312, %v1501
  %v1526 = vmul.f32 %v1313, %v1501
  %v1527 = vmul.f32 %v1314, %v1501
  %v1528 = vmul.f32 %v1315, %v1501
  %v1529 = vmul.f32 %v1316, %v1501
  %v1530 = vmul.f32 %v1317, %v1501
  %v1531 = vmul.f32 %v1318, %v1501
  %v1532 = vmul.f32 %v1319, %v1501
  %v1533 = vmul.f32 %v1320, %v1501
  %v1534 = vmul.f32 %v1390, %v1497
  %v1535 = vsub.f32 %v19, %v1534
  %v1536 = vlaneseq
  %v1537 = vshrl.u32 %v1536, 7
  %v1538 = vsub.s32 0, %v1537
  %v1539 = vrot.slane %v1535, %v1538
  %v1540 = vadd.f32 %v1502, %v1539
  %v1541 = vadd.f32 %v1503, %v1539
  %v1542 = vadd.f32 %v1504, %v1539
  %v1543 = vadd.f32 %v1505, %v1539
  %v1544 = vadd.f32 %v1506, %v1539
  %v1545 = vadd.f32 %v1507, %v1539
  %v1546 = vadd.f32 %v1508, %v1539
  %v1547 = vadd.f32 %v1509, %v1539
  %v1548 = vadd.f32 %v1510, %v1539
  %v1549 = vadd.f32 %v1511, %v1539
  %v1550 = vadd.f32 %v1512, %v1539
  %v1551 = vadd.f32 %v1513, %v1539
  %v1552 = vadd.f32 %v1514, %v1539
  %v1553 = vadd.f32 %v1515, %v1539
  %v1554 = vadd.f32 %v1516, %v1539
  %v1555 = vadd.f32 %v1517, %v1539
  %v1556 = vadd.f32 %v1518, %v1539
  %v1557 = vadd.f32 %v1519, %v1539
  %v1558 = vadd.f32 %v1520, %v1539
  %v1559 = vadd.f32 %v1521, %v1539
  %v1560 = vadd.f32 %v1522, %v1539
  %v1561 = vadd.f32 %v1523, %v1539
  %v1562 = vadd.f32 %v1524, %v1539
  %v1563 = vadd.f32 %v1525, %v1539
  %v1564 = vadd.f32 %v1526, %v1539
  %v1565 = vadd.f32 %v1527, %v1539
  %v1566 = vadd.f32 %v1528, %v1539
  %v1567 = vadd.f32 %v1529, %v1539
  %v1568 = vadd.f32 %v1530, %v1539
  %v1569 = vadd.f32 %v1531, %v1539
  %v1570 = vadd.f32 %v1532, %v1539
  %v1571 = vadd.f32 %v1533, %v1539
  %v1572 = vlaneseq
  %v1573 = vshrl.u32 %v1572, 7
  %v1574 = vadd.s32 %v1573, 8
  %v1575 = vadd.s32 %v1573, 16
  %v1576 = vadd.s32 %v1573, 24
  %v1577 = vadd.s32 %v1573, 32
  %v1578 = vadd.s32 %v1573, 40
  %v1579 = vadd.s32 %v1573, 48
  %v1580 = vadd.s32 %v1573, 56
  %v1581 = vadd.s32 %v1573, 64
  %v1582 = vadd.s32 %v1573, 72
  %v1583 = vadd.s32 %v1573, 80
  %v1584 = vadd.s32 %v1573, 88
  %v1585 = vadd.s32 %v1573, 96
  %v1586 = vadd.s32 %v1573, 104
  %v1587 = vadd.s32 %v1573, 112
  %v1588 = vadd.s32 %v1573, 120
  %v1589 = vadd.s32 %v1573, 128
  %v1590 = vadd.s32 %v1573, 136
  %v1591 = vadd.s32 %v1573, 144
  %v1592 = vadd.s32 %v1573, 152
  %v1593 = vadd.s32 %v1573, 160
  %v1594 = vadd.s32 %v1573, 168
  %v1595 = vadd.s32 %v1573, 176
  %v1596 = vadd.s32 %v1573, 184
  %v1597 = vadd.s32 %v1573, 192
  %v1598 = vadd.s32 %v1573, 200
  %v1599 = vadd.s32 %v1573, 208
  %v1600 = vadd.s32 %v1573, 216
  %v1601 = vadd.s32 %v1573, 224
  %v1602 = vadd.s32 %v1573, 232
  %v1603 = vadd.s32 %v1573, 240
  %v1604 = vadd.s32 %v1573, 248
  %v1605 = vand.u32 %v1573, 127
  %v1606 = vand.u32 %v1574, 127
  %v1607 = vand.u32 %v1575, 127
  %v1608 = vand.u32 %v1576, 127
  %v1609 = vand.u32 %v1577, 127
  %v1610 = vand.u32 %v1578, 127
  %v1611 = vand.u32 %v1579, 127
  %v1612 = vand.u32 %v1580, 127
  %v1613 = vand.u32 %v1581, 127
  %v1614 = vand.u32 %v1582, 127
  %v1615 = vand.u32 %v1583, 127
  %v1616 = vand.u32 %v1584, 127
  %v1617 = vand.u32 %v1585, 127
  %v1618 = vand.u32 %v1586, 127
  %v1619 = vand.u32 %v1587, 127
  %v1620 = vand.u32 %v1588, 127
  %v1621 = vand.u32 %v1589, 127
  %v1622 = vand.u32 %v1590, 127
  %v1623 = vand.u32 %v1591, 127
  %v1624 = vand.u32 %v1592, 127
  %v1625 = vand.u32 %v1593, 127
  %v1626 = vand.u32 %v1594, 127
  %v1627 = vand.u32 %v1595, 127
  %v1628 = vand.u32 %v1596, 127
  %v1629 = vand.u32 %v1597, 127
  %v1630 = vand.u32 %v1598, 127
  %v1631 = vand.u32 %v1599, 127
  %v1632 = vand.u32 %v1600, 127
  %v1633 = vand.u32 %v1601, 127
  %v1634 = vand.u32 %v1602, 127
  %v1635 = vand.u32 %v1603, 127
  %v1636 = vand.u32 %v1604, 127
  %vm1637 = vcmp.ge.s32.totalorder %v1605, 16
  %vm1638 = vcmp.ge.s32.totalorder %v1606, 16
  %vm1639 = vcmp.ge.s32.totalorder %v1607, 16
  %vm1640 = vcmp.ge.s32.totalorder %v1608, 16
  %vm1641 = vcmp.ge.s32.totalorder %v1609, 16
  %vm1642 = vcmp.ge.s32.totalorder %v1610, 16
  %vm1643 = vcmp.ge.s32.totalorder %v1611, 16
  %vm1644 = vcmp.ge.s32.totalorder %v1612, 16
  %vm1645 = vcmp.ge.s32.totalorder %v1613, 16
  %vm1646 = vcmp.ge.s32.totalorder %v1614, 16
  %vm1647 = vcmp.ge.s32.totalorder %v1615, 16
  %vm1648 = vcmp.ge.s32.totalorder %v1616, 16
  %vm1649 = vcmp.ge.s32.totalorder %v1617, 16
  %vm1650 = vcmp.ge.s32.totalorder %v1618, 16
  %vm1651 = vcmp.ge.s32.totalorder %v1619, 16
  %vm1652 = vcmp.ge.s32.totalorder %v1620, 16
  %vm1653 = vcmp.ge.s32.totalorder %v1621, 16
  %vm1654 = vcmp.ge.s32.totalorder %v1622, 16
  %vm1655 = vcmp.ge.s32.totalorder %v1623, 16
  %vm1656 = vcmp.ge.s32.totalorder %v1624, 16
  %vm1657 = vcmp.ge.s32.totalorder %v1625, 16
  %vm1658 = vcmp.ge.s32.totalorder %v1626, 16
  %vm1659 = vcmp.ge.s32.totalorder %v1627, 16
  %vm1660 = vcmp.ge.s32.totalorder %v1628, 16
  %vm1661 = vcmp.ge.s32.totalorder %v1629, 16
  %vm1662 = vcmp.ge.s32.totalorder %v1630, 16
  %vm1663 = vcmp.ge.s32.totalorder %v1631, 16
  %vm1664 = vcmp.ge.s32.totalorder %v1632, 16
  %vm1665 = vcmp.ge.s32.totalorder %v1633, 16
  %vm1666 = vcmp.ge.s32.totalorder %v1634, 16
  %vm1667 = vcmp.ge.s32.totalorder %v1635, 16
  %vm1668 = vcmp.ge.s32.totalorder %v1636, 16
  %vm1669 = vcmp.lt.s32.totalorder %v1605, 112
  %vm1670 = vcmp.lt.s32.totalorder %v1606, 112
  %vm1671 = vcmp.lt.s32.totalorder %v1607, 112
  %vm1672 = vcmp.lt.s32.totalorder %v1608, 112
  %vm1673 = vcmp.lt.s32.totalorder %v1609, 112
  %vm1674 = vcmp.lt.s32.totalorder %v1610, 112
  %vm1675 = vcmp.lt.s32.totalorder %v1611, 112
  %vm1676 = vcmp.lt.s32.totalorder %v1612, 112
  %vm1677 = vcmp.lt.s32.totalorder %v1613, 112
  %vm1678 = vcmp.lt.s32.totalorder %v1614, 112
  %vm1679 = vcmp.lt.s32.totalorder %v1615, 112
  %vm1680 = vcmp.lt.s32.totalorder %v1616, 112
  %vm1681 = vcmp.lt.s32.totalorder %v1617, 112
  %vm1682 = vcmp.lt.s32.totalorder %v1618, 112
  %vm1683 = vcmp.lt.s32.totalorder %v1619, 112
  %vm1684 = vcmp.lt.s32.totalorder %v1620, 112
  %vm1685 = vcmp.lt.s32.totalorder %v1621, 112
  %vm1686 = vcmp.lt.s32.totalorder %v1622, 112
  %vm1687 = vcmp.lt.s32.totalorder %v1623, 112
  %vm1688 = vcmp.lt.s32.totalorder %v1624, 112
  %vm1689 = vcmp.lt.s32.totalorder %v1625, 112
  %vm1690 = vcmp.lt.s32.totalorder %v1626, 112
  %vm1691 = vcmp.lt.s32.totalorder %v1627, 112
  %vm1692 = vcmp.lt.s32.totalorder %v1628, 112
  %vm1693 = vcmp.lt.s32.totalorder %v1629, 112
  %vm1694 = vcmp.lt.s32.totalorder %v1630, 112
  %vm1695 = vcmp.lt.s32.totalorder %v1631, 112
  %vm1696 = vcmp.lt.s32.totalorder %v1632, 112
  %vm1697 = vcmp.lt.s32.totalorder %v1633, 112
  %vm1698 = vcmp.lt.s32.totalorder %v1634, 112
  %vm1699 = vcmp.lt.s32.totalorder %v1635, 112
  %vm1700 = vcmp.lt.s32.totalorder %v1636, 112
  %v1701 = vsel %vm1637, %v1570, 0.0
  %v1702 = vsel %vm1638, %v1571, 0.0
  %v1703 = vsel %vm1639, %v1540, 0.0
  %v1704 = vsel %vm1640, %v1541, 0.0
  %v1705 = vsel %vm1641, %v1542, 0.0
  %v1706 = vsel %vm1642, %v1543, 0.0
  %v1707 = vsel %vm1643, %v1544, 0.0
  %v1708 = vsel %vm1644, %v1545, 0.0
  %v1709 = vsel %vm1645, %v1546, 0.0
  %v1710 = vsel %vm1646, %v1547, 0.0
  %v1711 = vsel %vm1647, %v1548, 0.0
  %v1712 = vsel %vm1648, %v1549, 0.0
  %v1713 = vsel %vm1649, %v1550, 0.0
  %v1714 = vsel %vm1650, %v1551, 0.0
  %v1715 = vsel %vm1651, %v1552, 0.0
  %v1716 = vsel %vm1652, %v1553, 0.0
  %v1717 = vsel %vm1653, %v1554, 0.0
  %v1718 = vsel %vm1654, %v1555, 0.0
  %v1719 = vsel %vm1655, %v1556, 0.0
  %v1720 = vsel %vm1656, %v1557, 0.0
  %v1721 = vsel %vm1657, %v1558, 0.0
  %v1722 = vsel %vm1658, %v1559, 0.0
  %v1723 = vsel %vm1659, %v1560, 0.0
  %v1724 = vsel %vm1660, %v1561, 0.0
  %v1725 = vsel %vm1661, %v1562, 0.0
  %v1726 = vsel %vm1662, %v1563, 0.0
  %v1727 = vsel %vm1663, %v1564, 0.0
  %v1728 = vsel %vm1664, %v1565, 0.0
  %v1729 = vsel %vm1665, %v1566, 0.0
  %v1730 = vsel %vm1666, %v1567, 0.0
  %v1731 = vsel %vm1667, %v1568, 0.0
  %v1732 = vsel %vm1668, %v1569, 0.0
  %v1733 = vsel %vm1669, %v1542, 0.0
  %v1734 = vsel %vm1670, %v1543, 0.0
  %v1735 = vsel %vm1671, %v1544, 0.0
  %v1736 = vsel %vm1672, %v1545, 0.0
  %v1737 = vsel %vm1673, %v1546, 0.0
  %v1738 = vsel %vm1674, %v1547, 0.0
  %v1739 = vsel %vm1675, %v1548, 0.0
  %v1740 = vsel %vm1676, %v1549, 0.0
  %v1741 = vsel %vm1677, %v1550, 0.0
  %v1742 = vsel %vm1678, %v1551, 0.0
  %v1743 = vsel %vm1679, %v1552, 0.0
  %v1744 = vsel %vm1680, %v1553, 0.0
  %v1745 = vsel %vm1681, %v1554, 0.0
  %v1746 = vsel %vm1682, %v1555, 0.0
  %v1747 = vsel %vm1683, %v1556, 0.0
  %v1748 = vsel %vm1684, %v1557, 0.0
  %v1749 = vsel %vm1685, %v1558, 0.0
  %v1750 = vsel %vm1686, %v1559, 0.0
  %v1751 = vsel %vm1687, %v1560, 0.0
  %v1752 = vsel %vm1688, %v1561, 0.0
  %v1753 = vsel %vm1689, %v1562, 0.0
  %v1754 = vsel %vm1690, %v1563, 0.0
  %v1755 = vsel %vm1691, %v1564, 0.0
  %v1756 = vsel %vm1692, %v1565, 0.0
  %v1757 = vsel %vm1693, %v1566, 0.0
  %v1758 = vsel %vm1694, %v1567, 0.0
  %v1759 = vsel %vm1695, %v1568, 0.0
  %v1760 = vsel %vm1696, %v1569, 0.0
  %v1761 = vsel %vm1697, %v1570, 0.0
  %v1762 = vsel %vm1698, %v1571, 0.0
  %v1763 = vsel %vm1699, %v1540, 0.0
  %v1764 = vsel %vm1700, %v1541, 0.0
  %v1765 = vld [vmem:[%s2 + $0x60] sm:$0xff]
  %v1766 = vld [vmem:[%s2 + $0x68] sm:$0xff]
  %v1767 = vld [vmem:[%s2 + $0x70] sm:$0xff]
  %v1768 = vld [vmem:[%s2 + $0x78] sm:$0xff]
  %v1769 = vld [vmem:[%s2 + $0x40] sm:$0xff]
  %v1770 = vld [vmem:[%s2 + $0x48] sm:$0xff]
  %v1771 = vld [vmem:[%s2 + $0x50] sm:$0xff]
  %v1772 = vld [vmem:[%s2 + $0x58] sm:$0xff]
  %v1774 = vsel %vm712, %v1701, 0
  %v1777 = vsel %vm712, %v1702, 0
  %v1780 = vsel %vm712, %v1703, 0
  %v1783 = vsel %vm712, %v1704, 0
  %v1786 = vsel %vm712, %v1705, 0
  %v1789 = vsel %vm712, %v1706, 0
  %v1792 = vsel %vm712, %v1707, 0
  %v1795 = vsel %vm712, %v1708, 0
  %v1798 = vsel %vm712, %v1709, 0
  %v1801 = vsel %vm712, %v1710, 0
  %v1804 = vsel %vm712, %v1711, 0
  %v1807 = vsel %vm712, %v1712, 0
  %v1810 = vsel %vm712, %v1713, 0
  %v1813 = vsel %vm712, %v1714, 0
  %v1816 = vsel %vm712, %v1715, 0
  %v1819 = vsel %vm712, %v1716, 0
  %v1822 = vsel %vm712, %v1717, 0
  %v1825 = vsel %vm712, %v1718, 0
  %v1828 = vsel %vm712, %v1719, 0
  %v1831 = vsel %vm712, %v1720, 0
  %v1834 = vsel %vm712, %v1721, 0
  %v1837 = vsel %vm712, %v1722, 0
  %v1840 = vsel %vm712, %v1723, 0
  %v1843 = vsel %vm712, %v1724, 0
  %v1846 = vsel %vm712, %v1725, 0
  %v1849 = vsel %vm712, %v1726, 0
  %v1852 = vsel %vm712, %v1727, 0
  %v1855 = vsel %vm712, %v1728, 0
  %v1858 = vsel %vm712, %v1729, 0
  %v1861 = vsel %vm712, %v1730, 0
  %v1864 = vsel %vm712, %v1731, 0
  %v1867 = vsel %vm712, %v1732, 0
  %1869 = vmatprep.subr.mxu0 0.0
  %1870 = vmatpush1.msra.mxu0 %v1769
  %1871 = vmatprep.subr.mxu0 0.0
  %1872 = vmatpush1.msra.mxu0 %v1770
  %1873 = vmatprep.subr.mxu0 0.0
  %1874 = vmatpush1.msra.mxu0 %v1771
  %1875 = vmatprep.subr.mxu0 0.0
  %1876 = vmatpush1.msra.mxu0 %v1772
  %1877 = vmatprep.subr.mxu0 0.0
  %1878 = vmatpush1.msra.mxu0 0.0
  %1879 = vmatprep.subr.mxu0 0.0
  %1880 = vmatpush1.msra.mxu0 0.0
  %1881 = vmatprep.subr.mxu0 0.0
  %1882 = vmatpush1.msra.mxu0 0.0
  %1883 = vmatprep.subr.mxu0 0.0
  %1884 = vmatpush1.msra.mxu0 0.0
  %1885 = vmatprep.subr.mxu0 0.0
  %1886 = vmatpush1.msra.mxu0 0.0
  %1887 = vmatprep.subr.mxu0 0.0
  %1888 = vmatpush1.msra.mxu0 0.0
  %1889 = vmatprep.subr.mxu0 0.0
  %1890 = vmatpush1.msra.mxu0 0.0
  %1891 = vmatprep.subr.mxu0 0.0
  %1892 = vmatpush1.msra.mxu0 0.0
  %1893 = vmatprep.subr.mxu0 0.0
  %1894 = vmatpush1.msra.mxu0 0.0
  %1895 = vmatprep.subr.mxu0 0.0
  %1896 = vmatpush1.msra.mxu0 0.0
  %1897 = vmatprep.subr.mxu0 0.0
  %1898 = vmatpush1.msra.mxu0 0.0
  %1899 = vmatprep.subr.mxu0 0.0
  %1900 = vmatpush1.msra.mxu0 0.0
  %1901 = vmatprep.subr.mxu0 0.0
  %1902 = vmatpush1.msra.mxu0 0.0
  %1903 = vmatprep.subr.mxu0 0.0
  %1904 = vmatpush1.msra.mxu0 0.0
  %1905 = vmatprep.subr.mxu0 0.0
  %1906 = vmatpush1.msra.mxu0 0.0
  %1907 = vmatprep.subr.mxu0 0.0
  %1908 = vmatpush1.msra.mxu0 0.0
  %1909 = vmatprep.subr.mxu0 0.0
  %1910 = vmatpush1.msra.mxu0 0.0
  %1911 = vmatprep.subr.mxu0 0.0
  %1912 = vmatpush1.msra.mxu0 0.0
  %1913 = vmatprep.subr.mxu0 0.0
  %1914 = vmatpush1.msra.mxu0 0.0
  %1915 = vmatprep.subr.mxu0 0.0
  %1916 = vmatpush1.msra.mxu0 0.0
  %1917 = vmatprep.subr.mxu0 0.0
  %1918 = vmatpush1.msra.mxu0 0.0
  %1919 = vmatprep.subr.mxu0 0.0
  %1920 = vmatpush1.msra.mxu0 0.0
  %1921 = vmatprep.subr.mxu0 0.0
  %1922 = vmatpush1.msra.mxu0 0.0
  %1923 = vmatprep.subr.mxu0 0.0
  %1924 = vmatpush1.msra.mxu0 0.0
  %1925 = vmatprep.subr.mxu0 0.0
  %1926 = vmatpush1.msra.mxu0 0.0
  %1927 = vmatprep.subr.mxu0 0.0
  %1928 = vmatpush1.msra.mxu0 0.0
  %1929 = vmatprep.subr.mxu0 0.0
  %1930 = vmatpush1.msra.mxu0 0.0
  %1931 = vmatprep.subr.mxu0 0.0
  %1932 = vmatpush1.msra.mxu0 0.0
  %1933 = vmatprep.mubr.f32.mxu0 0.0
  %1934 = vmatmul.mubr.f32.gmra.mrb[0].mxu0 %v1774
  %v1935 = vpop.f32.mrb[0].mxu0
  %v1936 = vadd.f32 0.0, %v1935
  %v1937 = vpop.f32.mrb[0].mxu0
  %1938 = vmatprep.mubr.f32.mxu0 0.0
  %1939 = vmatmul.mubr.f32.gmra.mrb[0].mxu0 %v1777
  %v1940 = vpop.f32.mrb[0].mxu0
  %v1941 = vadd.f32 0.0, %v1940
  %v1942 = vpop.f32.mrb[0].mxu0
  %1943 = vmatprep.mubr.f32.mxu0 0.0
  %1944 = vmatmul.mubr.f32.gmra.mrb[0].mxu0 %v1780
  %v1945 = vpop.f32.mrb[0].mxu0
  %v1946 = vadd.f32 0.0, %v1945
  %v1947 = vpop.f32.mrb[0].mxu0
  %1948 = vmatprep.mubr.f32.mxu0 0.0
  %1949 = vmatmul.mubr.f32.gmra.mrb[0].mxu0 %v1783
  %v1950 = vpop.f32.mrb[0].mxu0
  %v1951 = vadd.f32 0.0, %v1950
  %v1952 = vpop.f32.mrb[0].mxu0
  %1953 = vmatprep.mubr.f32.mxu0 0.0
  %1954 = vmatmul.mubr.f32.gmra.mrb[0].mxu0 %v1786
  %v1955 = vpop.f32.mrb[0].mxu0
  %v1956 = vadd.f32 0.0, %v1955
  %v1957 = vpop.f32.mrb[0].mxu0
  %1958 = vmatprep.mubr.f32.mxu0 0.0
  %1959 = vmatmul.mubr.f32.gmra.mrb[0].mxu0 %v1789
  %v1960 = vpop.f32.mrb[0].mxu0
  %v1961 = vadd.f32 0.0, %v1960
  %v1962 = vpop.f32.mrb[0].mxu0
  %1963 = vmatprep.mubr.f32.mxu0 0.0
  %1964 = vmatmul.mubr.f32.gmra.mrb[0].mxu0 %v1792
  %v1965 = vpop.f32.mrb[0].mxu0
  %v1966 = vadd.f32 0.0, %v1965
  %v1967 = vpop.f32.mrb[0].mxu0
  %1968 = vmatprep.mubr.f32.mxu0 0.0
  %1969 = vmatmul.mubr.f32.gmra.mrb[0].mxu0 %v1795
  %v1970 = vpop.f32.mrb[0].mxu0
  %v1971 = vadd.f32 0.0, %v1970
  %v1972 = vpop.f32.mrb[0].mxu0
  %1973 = vmatprep.mubr.f32.mxu0 0.0
  %1974 = vmatmul.mubr.f32.gmra.mrb[0].mxu0 %v1798
  %v1975 = vpop.f32.mrb[0].mxu0
  %v1976 = vadd.f32 0.0, %v1975
  %v1977 = vpop.f32.mrb[0].mxu0
  %1978 = vmatprep.mubr.f32.mxu0 0.0
  %1979 = vmatmul.mubr.f32.gmra.mrb[0].mxu0 %v1801
  %v1980 = vpop.f32.mrb[0].mxu0
  %v1981 = vadd.f32 0.0, %v1980
  %v1982 = vpop.f32.mrb[0].mxu0
  %1983 = vmatprep.mubr.f32.mxu0 0.0
  %1984 = vmatmul.mubr.f32.gmra.mrb[0].mxu0 %v1804
  %v1985 = vpop.f32.mrb[0].mxu0
  %v1986 = vadd.f32 0.0, %v1985
  %v1987 = vpop.f32.mrb[0].mxu0
  %1988 = vmatprep.mubr.f32.mxu0 0.0
  %1989 = vmatmul.mubr.f32.gmra.mrb[0].mxu0 %v1807
  %v1990 = vpop.f32.mrb[0].mxu0
  %v1991 = vadd.f32 0.0, %v1990
  %v1992 = vpop.f32.mrb[0].mxu0
  %1993 = vmatprep.mubr.f32.mxu0 0.0
  %1994 = vmatmul.mubr.f32.gmra.mrb[0].mxu0 %v1810
  %v1995 = vpop.f32.mrb[0].mxu0
  %v1996 = vadd.f32 0.0, %v1995
  %v1997 = vpop.f32.mrb[0].mxu0
  %1998 = vmatprep.mubr.f32.mxu0 0.0
  %1999 = vmatmul.mubr.f32.gmra.mrb[0].mxu0 %v1813
  %v2000 = vpop.f32.mrb[0].mxu0
  %v2001 = vadd.f32 0.0, %v2000
  %v2002 = vpop.f32.mrb[0].mxu0
  %2003 = vmatprep.mubr.f32.mxu0 0.0
  %2004 = vmatmul.mubr.f32.gmra.mrb[0].mxu0 %v1816
  %v2005 = vpop.f32.mrb[0].mxu0
  %v2006 = vadd.f32 0.0, %v2005
  %v2007 = vpop.f32.mrb[0].mxu0
  %2008 = vmatprep.mubr.f32.mxu0 0.0
  %2009 = vmatmul.mubr.f32.gmra.mrb[0].mxu0 %v1819
  %v2010 = vpop.f32.mrb[0].mxu0
  %v2011 = vadd.f32 0.0, %v2010
  %v2012 = vpop.f32.mrb[0].mxu0
  %2013 = vmatprep.mubr.f32.mxu0 0.0
  %2014 = vmatmul.mubr.f32.gmra.mrb[0].mxu0 %v1822
  %v2015 = vpop.f32.mrb[0].mxu0
  %v2016 = vadd.f32 0.0, %v2015
  %v2017 = vpop.f32.mrb[0].mxu0
  %2018 = vmatprep.mubr.f32.mxu0 0.0
  %2019 = vmatmul.mubr.f32.gmra.mrb[0].mxu0 %v1825
  %v2020 = vpop.f32.mrb[0].mxu0
  %v2021 = vadd.f32 0.0, %v2020
  %v2022 = vpop.f32.mrb[0].mxu0
  %2023 = vmatprep.mubr.f32.mxu0 0.0
  %2024 = vmatmul.mubr.f32.gmra.mrb[0].mxu0 %v1828
  %v2025 = vpop.f32.mrb[0].mxu0
  %v2026 = vadd.f32 0.0, %v2025
  %v2027 = vpop.f32.mrb[0].mxu0
  %2028 = vmatprep.mubr.f32.mxu0 0.0
  %2029 = vmatmul.mubr.f32.gmra.mrb[0].mxu0 %v1831
  %v2030 = vpop.f32.mrb[0].mxu0
  %v2031 = vadd.f32 0.0, %v2030
  %v2032 = vpop.f32.mrb[0].mxu0
  %2033 = vmatprep.mubr.f32.mxu0 0.0
  %2034 = vmatmul.mubr.f32.gmra.mrb[0].mxu0 %v1834
  %v2035 = vpop.f32.mrb[0].mxu0
  %v2036 = vadd.f32 0.0, %v2035
  %v2037 = vpop.f32.mrb[0].mxu0
  %2038 = vmatprep.mubr.f32.mxu0 0.0
  %2039 = vmatmul.mubr.f32.gmra.mrb[0].mxu0 %v1837
  %v2040 = vpop.f32.mrb[0].mxu0
  %v2041 = vadd.f32 0.0, %v2040
  %v2042 = vpop.f32.mrb[0].mxu0
  %2043 = vmatprep.mubr.f32.mxu0 0.0
  %2044 = vmatmul.mubr.f32.gmra.mrb[0].mxu0 %v1840
  %v2045 = vpop.f32.mrb[0].mxu0
  %v2046 = vadd.f32 0.0, %v2045
  %v2047 = vpop.f32.mrb[0].mxu0
  %2048 = vmatprep.mubr.f32.mxu0 0.0
  %2049 = vmatmul.mubr.f32.gmra.mrb[0].mxu0 %v1843
  %v2050 = vpop.f32.mrb[0].mxu0
  %v2051 = vadd.f32 0.0, %v2050
  %v2052 = vpop.f32.mrb[0].mxu0
  %2053 = vmatprep.mubr.f32.mxu0 0.0
  %2054 = vmatmul.mubr.f32.gmra.mrb[0].mxu0 %v1846
  %v2055 = vpop.f32.mrb[0].mxu0
  %v2056 = vadd.f32 0.0, %v2055
  %v2057 = vpop.f32.mrb[0].mxu0
  %2058 = vmatprep.mubr.f32.mxu0 0.0
  %2059 = vmatmul.mubr.f32.gmra.mrb[0].mxu0 %v1849
  %v2060 = vpop.f32.mrb[0].mxu0
  %v2061 = vadd.f32 0.0, %v2060
  %v2062 = vpop.f32.mrb[0].mxu0
  %2063 = vmatprep.mubr.f32.mxu0 0.0
  %2064 = vmatmul.mubr.f32.gmra.mrb[0].mxu0 %v1852
  %v2065 = vpop.f32.mrb[0].mxu0
  %v2066 = vadd.f32 0.0, %v2065
  %v2067 = vpop.f32.mrb[0].mxu0
  %2068 = vmatprep.mubr.f32.mxu0 0.0
  %2069 = vmatmul.mubr.f32.gmra.mrb[0].mxu0 %v1855
  %v2070 = vpop.f32.mrb[0].mxu0
  %v2071 = vadd.f32 0.0, %v2070
  %v2072 = vpop.f32.mrb[0].mxu0
  %2073 = vmatprep.mubr.f32.mxu0 0.0
  %2074 = vmatmul.mubr.f32.gmra.mrb[0].mxu0 %v1858
  %v2075 = vpop.f32.mrb[0].mxu0
  %v2076 = vadd.f32 0.0, %v2075
  %v2077 = vpop.f32.mrb[0].mxu0
  %2078 = vmatprep.mubr.f32.mxu0 0.0
  %2079 = vmatmul.mubr.f32.gmra.mrb[0].mxu0 %v1861
  %v2080 = vpop.f32.mrb[0].mxu0
  %v2081 = vadd.f32 0.0, %v2080
  %v2082 = vpop.f32.mrb[0].mxu0
  %2083 = vmatprep.mubr.f32.mxu0 0.0
  %2084 = vmatmul.mubr.f32.gmra.mrb[0].mxu0 %v1864
  %v2085 = vpop.f32.mrb[0].mxu0
  %v2086 = vadd.f32 0.0, %v2085
  %v2087 = vpop.f32.mrb[0].mxu0
  %2088 = vmatprep.mubr.f32.mxu0 0.0
  %2089 = vmatmul.mubr.f32.gmra.mrb[0].mxu0 %v1867
  %v2090 = vpop.f32.mrb[0].mxu0
  %v2091 = vadd.f32 0.0, %v2090
  %v2092 = vpop.f32.mrb[0].mxu0
  %2093 = vdwg.mxu0
  %v2095 = vsel %vm712, %v1540, 0
  %v2098 = vsel %vm712, %v1541, 0
  %v2101 = vsel %vm712, %v1542, 0
  %v2104 = vsel %vm712, %v1543, 0
  %v2107 = vsel %vm712, %v1544, 0
  %v2110 = vsel %vm712, %v1545, 0
  %v2113 = vsel %vm712, %v1546, 0
  %v2116 = vsel %vm712, %v1547, 0
  %v2119 = vsel %vm712, %v1548, 0
  %v2122 = vsel %vm712, %v1549, 0
  %v2125 = vsel %vm712, %v1550, 0
  %v2128 = vsel %vm712, %v1551, 0
  %v2131 = vsel %vm712, %v1552, 0
  %v2134 = vsel %vm712, %v1553, 0
  %v2137 = vsel %vm712, %v1554, 0
  %v2140 = vsel %vm712, %v1555, 0
  %v2143 = vsel %vm712, %v1556, 0
  %v2146 = vsel %vm712, %v1557, 0
  %v2149 = vsel %vm712, %v1558, 0
  %v2152 = vsel %vm712, %v1559, 0
  %v2155 = vsel %vm712, %v1560, 0
  %v2158 = vsel %vm712, %v1561, 0
  %v2161 = vsel %vm712, %v1562, 0
  %v2164 = vsel %vm712, %v1563, 0
  %v2167 = vsel %vm712, %v1564, 0
  %v2170 = vsel %vm712, %v1565, 0
  %v2173 = vsel %vm712, %v1566, 0
  %v2176 = vsel %vm712, %v1567, 0
  %v2179 = vsel %vm712, %v1568, 0
  %v2182 = vsel %vm712, %v1569, 0
  %v2185 = vsel %vm712, %v1570, 0
  %v2188 = vsel %vm712, %v1571, 0
  %2190 = vmatprep.subr.mxu0 0.0
  %2191 = vmatpush1.msra.mxu0 %v1765
  %2192 = vmatprep.subr.mxu0 0.0
  %2193 = vmatpush1.msra.mxu0 %v1766
  %2194 = vmatprep.subr.mxu0 0.0
  %2195 = vmatpush1.msra.mxu0 %v1767
  %2196 = vmatprep.subr.mxu0 0.0
  %2197 = vmatpush1.msra.mxu0 %v1768
  %2198 = vmatprep.subr.mxu0 0.0
  %2199 = vmatpush1.msra.mxu0 0.0
  %2200 = vmatprep.subr.mxu0 0.0
  %2201 = vmatpush1.msra.mxu0 0.0
  %2202 = vmatprep.subr.mxu0 0.0
  %2203 = vmatpush1.msra.mxu0 0.0
  %2204 = vmatprep.subr.mxu0 0.0
  %2205 = vmatpush1.msra.mxu0 0.0
  %2206 = vmatprep.subr.mxu0 0.0
  %2207 = vmatpush1.msra.mxu0 0.0
  %2208 = vmatprep.subr.mxu0 0.0
  %2209 = vmatpush1.msra.mxu0 0.0
  %2210 = vmatprep.subr.mxu0 0.0
  %2211 = vmatpush1.msra.mxu0 0.0
  %2212 = vmatprep.subr.mxu0 0.0
  %2213 = vmatpush1.msra.mxu0 0.0
  %2214 = vmatprep.subr.mxu0 0.0
  %2215 = vmatpush1.msra.mxu0 0.0
  %2216 = vmatprep.subr.mxu0 0.0
  %2217 = vmatpush1.msra.mxu0 0.0
  %2218 = vmatprep.subr.mxu0 0.0
  %2219 = vmatpush1.msra.mxu0 0.0
  %2220 = vmatprep.subr.mxu0 0.0
  %2221 = vmatpush1.msra.mxu0 0.0
  %2222 = vmatprep.subr.mxu0 0.0
  %2223 = vmatpush1.msra.mxu0 0.0
  %2224 = vmatprep.subr.mxu0 0.0
  %2225 = vmatpush1.msra.mxu0 0.0
  %2226 = vmatprep.subr.mxu0 0.0
  %2227 = vmatpush1.msra.mxu0 0.0
  %2228 = vmatprep.subr.mxu0 0.0
  %2229 = vmatpush1.msra.mxu0 0.0
  %2230 = vmatprep.subr.mxu0 0.0
  %2231 = vmatpush1.msra.mxu0 0.0
  %2232 = vmatprep.subr.mxu0 0.0
  %2233 = vmatpush1.msra.mxu0 0.0
  %2234 = vmatprep.subr.mxu0 0.0
  %2235 = vmatpush1.msra.mxu0 0.0
  %2236 = vmatprep.subr.mxu0 0.0
  %2237 = vmatpush1.msra.mxu0 0.0
  %2238 = vmatprep.subr.mxu0 0.0
  %2239 = vmatpush1.msra.mxu0 0.0
  %2240 = vmatprep.subr.mxu0 0.0
  %2241 = vmatpush1.msra.mxu0 0.0
  %2242 = vmatprep.subr.mxu0 0.0
  %2243 = vmatpush1.msra.mxu0 0.0
  %2244 = vmatprep.subr.mxu0 0.0
  %2245 = vmatpush1.msra.mxu0 0.0
  %2246 = vmatprep.subr.mxu0 0.0
  %2247 = vmatpush1.msra.mxu0 0.0
  %2248 = vmatprep.subr.mxu0 0.0
  %2249 = vmatpush1.msra.mxu0 0.0
  %2250 = vmatprep.subr.mxu0 0.0
  %2251 = vmatpush1.msra.mxu0 0.0
  %2252 = vmatprep.subr.mxu0 0.0
  %2253 = vmatpush1.msra.mxu0 0.0
  %2254 = vmatprep.mubr.f32.mxu0 0.0
  %2255 = vmatmul.mubr.f32.gmra.mrb[0].mxu0 %v2095
  %v2256 = vpop.f32.mrb[0].mxu0
  %v2257 = vadd.f32 %v1936, %v2256
  %v2258 = vpop.f32.mrb[0].mxu0
  %2259 = vmatprep.mubr.f32.mxu0 0.0
  %2260 = vmatmul.mubr.f32.gmra.mrb[0].mxu0 %v2098
  %v2261 = vpop.f32.mrb[0].mxu0
  %v2262 = vadd.f32 %v1941, %v2261
  %v2263 = vpop.f32.mrb[0].mxu0
  %2264 = vmatprep.mubr.f32.mxu0 0.0
  %2265 = vmatmul.mubr.f32.gmra.mrb[0].mxu0 %v2101
  %v2266 = vpop.f32.mrb[0].mxu0
  %v2267 = vadd.f32 %v1946, %v2266
  %v2268 = vpop.f32.mrb[0].mxu0
  %2269 = vmatprep.mubr.f32.mxu0 0.0
  %2270 = vmatmul.mubr.f32.gmra.mrb[0].mxu0 %v2104
  %v2271 = vpop.f32.mrb[0].mxu0
  %v2272 = vadd.f32 %v1951, %v2271
  %v2273 = vpop.f32.mrb[0].mxu0
  %2274 = vmatprep.mubr.f32.mxu0 0.0
  %2275 = vmatmul.mubr.f32.gmra.mrb[0].mxu0 %v2107
  %v2276 = vpop.f32.mrb[0].mxu0
  %v2277 = vadd.f32 %v1956, %v2276
  %v2278 = vpop.f32.mrb[0].mxu0
  %2279 = vmatprep.mubr.f32.mxu0 0.0
  %2280 = vmatmul.mubr.f32.gmra.mrb[0].mxu0 %v2110
  %v2281 = vpop.f32.mrb[0].mxu0
  %v2282 = vadd.f32 %v1961, %v2281
  %v2283 = vpop.f32.mrb[0].mxu0
  %2284 = vmatprep.mubr.f32.mxu0 0.0
  %2285 = vmatmul.mubr.f32.gmra.mrb[0].mxu0 %v2113
  %v2286 = vpop.f32.mrb[0].mxu0
  %v2287 = vadd.f32 %v1966, %v2286
  %v2288 = vpop.f32.mrb[0].mxu0
  %2289 = vmatprep.mubr.f32.mxu0 0.0
  %2290 = vmatmul.mubr.f32.gmra.mrb[0].mxu0 %v2116
  %v2291 = vpop.f32.mrb[0].mxu0
  %v2292 = vadd.f32 %v1971, %v2291
  %v2293 = vpop.f32.mrb[0].mxu0
  %2294 = vmatprep.mubr.f32.mxu0 0.0
  %2295 = vmatmul.mubr.f32.gmra.mrb[0].mxu0 %v2119
  %v2296 = vpop.f32.mrb[0].mxu0
  %v2297 = vadd.f32 %v1976, %v2296
  %v2298 = vpop.f32.mrb[0].mxu0
  %2299 = vmatprep.mubr.f32.mxu0 0.0
  %2300 = vmatmul.mubr.f32.gmra.mrb[0].mxu0 %v2122
  %v2301 = vpop.f32.mrb[0].mxu0
  %v2302 = vadd.f32 %v1981, %v2301
  %v2303 = vpop.f32.mrb[0].mxu0
  %2304 = vmatprep.mubr.f32.mxu0 0.0
  %2305 = vmatmul.mubr.f32.gmra.mrb[0].mxu0 %v2125
  %v2306 = vpop.f32.mrb[0].mxu0
  %v2307 = vadd.f32 %v1986, %v2306
  %v2308 = vpop.f32.mrb[0].mxu0
  %2309 = vmatprep.mubr.f32.mxu0 0.0
  %2310 = vmatmul.mubr.f32.gmra.mrb[0].mxu0 %v2128
  %v2311 = vpop.f32.mrb[0].mxu0
  %v2312 = vadd.f32 %v1991, %v2311
  %v2313 = vpop.f32.mrb[0].mxu0
  %2314 = vmatprep.mubr.f32.mxu0 0.0
  %2315 = vmatmul.mubr.f32.gmra.mrb[0].mxu0 %v2131
  %v2316 = vpop.f32.mrb[0].mxu0
  %v2317 = vadd.f32 %v1996, %v2316
  %v2318 = vpop.f32.mrb[0].mxu0
  %2319 = vmatprep.mubr.f32.mxu0 0.0
  %2320 = vmatmul.mubr.f32.gmra.mrb[0].mxu0 %v2134
  %v2321 = vpop.f32.mrb[0].mxu0
  %v2322 = vadd.f32 %v2001, %v2321
  %v2323 = vpop.f32.mrb[0].mxu0
  %2324 = vmatprep.mubr.f32.mxu0 0.0
  %2325 = vmatmul.mubr.f32.gmra.mrb[0].mxu0 %v2137
  %v2326 = vpop.f32.mrb[0].mxu0
  %v2327 = vadd.f32 %v2006, %v2326
  %v2328 = vpop.f32.mrb[0].mxu0
  %2329 = vmatprep.mubr.f32.mxu0 0.0
  %2330 = vmatmul.mubr.f32.gmra.mrb[0].mxu0 %v2140
  %v2331 = vpop.f32.mrb[0].mxu0
  %v2332 = vadd.f32 %v2011, %v2331
  %v2333 = vpop.f32.mrb[0].mxu0
  %2334 = vmatprep.mubr.f32.mxu0 0.0
  %2335 = vmatmul.mubr.f32.gmra.mrb[0].mxu0 %v2143
  %v2336 = vpop.f32.mrb[0].mxu0
  %v2337 = vadd.f32 %v2016, %v2336
  %v2338 = vpop.f32.mrb[0].mxu0
  %2339 = vmatprep.mubr.f32.mxu0 0.0
  %2340 = vmatmul.mubr.f32.gmra.mrb[0].mxu0 %v2146
  %v2341 = vpop.f32.mrb[0].mxu0
  %v2342 = vadd.f32 %v2021, %v2341
  %v2343 = vpop.f32.mrb[0].mxu0
  %2344 = vmatprep.mubr.f32.mxu0 0.0
  %2345 = vmatmul.mubr.f32.gmra.mrb[0].mxu0 %v2149
  %v2346 = vpop.f32.mrb[0].mxu0
  %v2347 = vadd.f32 %v2026, %v2346
  %v2348 = vpop.f32.mrb[0].mxu0
  %2349 = vmatprep.mubr.f32.mxu0 0.0
  %2350 = vmatmul.mubr.f32.gmra.mrb[0].mxu0 %v2152
  %v2351 = vpop.f32.mrb[0].mxu0
  %v2352 = vadd.f32 %v2031, %v2351
  %v2353 = vpop.f32.mrb[0].mxu0
  %2354 = vmatprep.mubr.f32.mxu0 0.0
  %2355 = vmatmul.mubr.f32.gmra.mrb[0].mxu0 %v2155
  %v2356 = vpop.f32.mrb[0].mxu0
  %v2357 = vadd.f32 %v2036, %v2356
  %v2358 = vpop.f32.mrb[0].mxu0
  %2359 = vmatprep.mubr.f32.mxu0 0.0
  %2360 = vmatmul.mubr.f32.gmra.mrb[0].mxu0 %v2158
  %v2361 = vpop.f32.mrb[0].mxu0
  %v2362 = vadd.f32 %v2041, %v2361
  %v2363 = vpop.f32.mrb[0].mxu0
  %2364 = vmatprep.mubr.f32.mxu0 0.0
  %2365 = vmatmul.mubr.f32.gmra.mrb[0].mxu0 %v2161
  %v2366 = vpop.f32.mrb[0].mxu0
  %v2367 = vadd.f32 %v2046, %v2366
  %v2368 = vpop.f32.mrb[0].mxu0
  %2369 = vmatprep.mubr.f32.mxu0 0.0
  %2370 = vmatmul.mubr.f32.gmra.mrb[0].mxu0 %v2164
  %v2371 = vpop.f32.mrb[0].mxu0
  %v2372 = vadd.f32 %v2051, %v2371
  %v2373 = vpop.f32.mrb[0].mxu0
  %2374 = vmatprep.mubr.f32.mxu0 0.0
  %2375 = vmatmul.mubr.f32.gmra.mrb[0].mxu0 %v2167
  %v2376 = vpop.f32.mrb[0].mxu0
  %v2377 = vadd.f32 %v2056, %v2376
  %v2378 = vpop.f32.mrb[0].mxu0
  %2379 = vmatprep.mubr.f32.mxu0 0.0
  %2380 = vmatmul.mubr.f32.gmra.mrb[0].mxu0 %v2170
  %v2381 = vpop.f32.mrb[0].mxu0
  %v2382 = vadd.f32 %v2061, %v2381
  %v2383 = vpop.f32.mrb[0].mxu0
  %2384 = vmatprep.mubr.f32.mxu0 0.0
  %2385 = vmatmul.mubr.f32.gmra.mrb[0].mxu0 %v2173
  %v2386 = vpop.f32.mrb[0].mxu0
  %v2387 = vadd.f32 %v2066, %v2386
  %v2388 = vpop.f32.mrb[0].mxu0
  %2389 = vmatprep.mubr.f32.mxu0 0.0
  %2390 = vmatmul.mubr.f32.gmra.mrb[0].mxu0 %v2176
  %v2391 = vpop.f32.mrb[0].mxu0
  %v2392 = vadd.f32 %v2071, %v2391
  %v2393 = vpop.f32.mrb[0].mxu0
  %2394 = vmatprep.mubr.f32.mxu0 0.0
  %2395 = vmatmul.mubr.f32.gmra.mrb[0].mxu0 %v2179
  %v2396 = vpop.f32.mrb[0].mxu0
  %v2397 = vadd.f32 %v2076, %v2396
  %v2398 = vpop.f32.mrb[0].mxu0
  %2399 = vmatprep.mubr.f32.mxu0 0.0
  %2400 = vmatmul.mubr.f32.gmra.mrb[0].mxu0 %v2182
  %v2401 = vpop.f32.mrb[0].mxu0
  %v2402 = vadd.f32 %v2081, %v2401
  %v2403 = vpop.f32.mrb[0].mxu0
  %2404 = vmatprep.mubr.f32.mxu0 0.0
  %2405 = vmatmul.mubr.f32.gmra.mrb[0].mxu0 %v2185
  %v2406 = vpop.f32.mrb[0].mxu0
  %v2407 = vadd.f32 %v2086, %v2406
  %v2408 = vpop.f32.mrb[0].mxu0
  %2409 = vmatprep.mubr.f32.mxu0 0.0
  %2410 = vmatmul.mubr.f32.gmra.mrb[0].mxu0 %v2188
  %v2411 = vpop.f32.mrb[0].mxu0
  %v2412 = vadd.f32 %v2091, %v2411
  %v2413 = vpop.f32.mrb[0].mxu0
  %2414 = vdwg.mxu0
  %v2415 = vld [vmem:[%s2 + $0x80] sm:$0xff]
  %v2416 = vld [vmem:[%s2 + $0x88] sm:$0xff]
  %v2417 = vld [vmem:[%s2 + $0x90] sm:$0xff]
  %v2418 = vld [vmem:[%s2 + $0x98] sm:$0xff]
  %v2420 = vsel %vm712, %v1733, 0
  %v2423 = vsel %vm712, %v1734, 0
  %v2426 = vsel %vm712, %v1735, 0
  %v2429 = vsel %vm712, %v1736, 0
  %v2432 = vsel %vm712, %v1737, 0
  %v2435 = vsel %vm712, %v1738, 0
  %v2438 = vsel %vm712, %v1739, 0
  %v2441 = vsel %vm712, %v1740, 0
  %v2444 = vsel %vm712, %v1741, 0
  %v2447 = vsel %vm712, %v1742, 0
  %v2450 = vsel %vm712, %v1743, 0
  %v2453 = vsel %vm712, %v1744, 0
  %v2456 = vsel %vm712, %v1745, 0
  %v2459 = vsel %vm712, %v1746, 0
  %v2462 = vsel %vm712, %v1747, 0
  %v2465 = vsel %vm712, %v1748, 0
  %v2468 = vsel %vm712, %v1749, 0
  %v2471 = vsel %vm712, %v1750, 0
  %v2474 = vsel %vm712, %v1751, 0
  %v2477 = vsel %vm712, %v1752, 0
  %v2480 = vsel %vm712, %v1753, 0
  %v2483 = vsel %vm712, %v1754, 0
  %v2486 = vsel %vm712, %v1755, 0
  %v2489 = vsel %vm712, %v1756, 0
  %v2492 = vsel %vm712, %v1757, 0
  %v2495 = vsel %vm712, %v1758, 0
  %v2498 = vsel %vm712, %v1759, 0
  %v2501 = vsel %vm712, %v1760, 0
  %v2504 = vsel %vm712, %v1761, 0
  %v2507 = vsel %vm712, %v1762, 0
  %v2510 = vsel %vm712, %v1763, 0
  %v2513 = vsel %vm712, %v1764, 0
  %2515 = vmatprep.subr.mxu0 0.0
  %2516 = vmatpush1.msra.mxu0 %v2415
  %2517 = vmatprep.subr.mxu0 0.0
  %2518 = vmatpush1.msra.mxu0 %v2416
  %2519 = vmatprep.subr.mxu0 0.0
  %2520 = vmatpush1.msra.mxu0 %v2417
  %2521 = vmatprep.subr.mxu0 0.0
  %2522 = vmatpush1.msra.mxu0 %v2418
  %2523 = vmatprep.subr.mxu0 0.0
  %2524 = vmatpush1.msra.mxu0 0.0
  %2525 = vmatprep.subr.mxu0 0.0
  %2526 = vmatpush1.msra.mxu0 0.0
  %2527 = vmatprep.subr.mxu0 0.0
  %2528 = vmatpush1.msra.mxu0 0.0
  %2529 = vmatprep.subr.mxu0 0.0
  %2530 = vmatpush1.msra.mxu0 0.0
  %2531 = vmatprep.subr.mxu0 0.0
  %2532 = vmatpush1.msra.mxu0 0.0
  %2533 = vmatprep.subr.mxu0 0.0
  %2534 = vmatpush1.msra.mxu0 0.0
  %2535 = vmatprep.subr.mxu0 0.0
  %2536 = vmatpush1.msra.mxu0 0.0
  %2537 = vmatprep.subr.mxu0 0.0
  %2538 = vmatpush1.msra.mxu0 0.0
  %2539 = vmatprep.subr.mxu0 0.0
  %2540 = vmatpush1.msra.mxu0 0.0
  %2541 = vmatprep.subr.mxu0 0.0
  %2542 = vmatpush1.msra.mxu0 0.0
  %2543 = vmatprep.subr.mxu0 0.0
  %2544 = vmatpush1.msra.mxu0 0.0
  %2545 = vmatprep.subr.mxu0 0.0
  %2546 = vmatpush1.msra.mxu0 0.0
  %2547 = vmatprep.subr.mxu0 0.0
  %2548 = vmatpush1.msra.mxu0 0.0
  %2549 = vmatprep.subr.mxu0 0.0
  %2550 = vmatpush1.msra.mxu0 0.0
  %2551 = vmatprep.subr.mxu0 0.0
  %2552 = vmatpush1.msra.mxu0 0.0
  %2553 = vmatprep.subr.mxu0 0.0
  %2554 = vmatpush1.msra.mxu0 0.0
  %2555 = vmatprep.subr.mxu0 0.0
  %2556 = vmatpush1.msra.mxu0 0.0
  %2557 = vmatprep.subr.mxu0 0.0
  %2558 = vmatpush1.msra.mxu0 0.0
  %2559 = vmatprep.subr.mxu0 0.0
  %2560 = vmatpush1.msra.mxu0 0.0
  %2561 = vmatprep.subr.mxu0 0.0
  %2562 = vmatpush1.msra.mxu0 0.0
  %2563 = vmatprep.subr.mxu0 0.0
  %2564 = vmatpush1.msra.mxu0 0.0
  %2565 = vmatprep.subr.mxu0 0.0
  %2566 = vmatpush1.msra.mxu0 0.0
  %2567 = vmatprep.subr.mxu0 0.0
  %2568 = vmatpush1.msra.mxu0 0.0
  %2569 = vmatprep.subr.mxu0 0.0
  %2570 = vmatpush1.msra.mxu0 0.0
  %2571 = vmatprep.subr.mxu0 0.0
  %2572 = vmatpush1.msra.mxu0 0.0
  %2573 = vmatprep.subr.mxu0 0.0
  %2574 = vmatpush1.msra.mxu0 0.0
  %2575 = vmatprep.subr.mxu0 0.0
  %2576 = vmatpush1.msra.mxu0 0.0
  %2577 = vmatprep.subr.mxu0 0.0
  %2578 = vmatpush1.msra.mxu0 0.0
  %2579 = vmatprep.mubr.f32.mxu0 0.0
  %2580 = vmatmul.mubr.f32.gmra.mrb[0].mxu0 %v2420
  %v2581 = vpop.f32.mrb[0].mxu0
  %v2582 = vadd.f32 0.0, %v2581
  %v2583 = vpop.f32.mrb[0].mxu0
  %2584 = vmatprep.mubr.f32.mxu0 0.0
  %2585 = vmatmul.mubr.f32.gmra.mrb[0].mxu0 %v2423
  %v2586 = vpop.f32.mrb[0].mxu0
  %v2587 = vadd.f32 0.0, %v2586
  %v2588 = vpop.f32.mrb[0].mxu0
  %2589 = vmatprep.mubr.f32.mxu0 0.0
  %2590 = vmatmul.mubr.f32.gmra.mrb[0].mxu0 %v2426
  %v2591 = vpop.f32.mrb[0].mxu0
  %v2592 = vadd.f32 0.0, %v2591
  %v2593 = vpop.f32.mrb[0].mxu0
  %2594 = vmatprep.mubr.f32.mxu0 0.0
  %2595 = vmatmul.mubr.f32.gmra.mrb[0].mxu0 %v2429
  %v2596 = vpop.f32.mrb[0].mxu0
  %v2597 = vadd.f32 0.0, %v2596
  %v2598 = vpop.f32.mrb[0].mxu0
  %2599 = vmatprep.mubr.f32.mxu0 0.0
  %2600 = vmatmul.mubr.f32.gmra.mrb[0].mxu0 %v2432
  %v2601 = vpop.f32.mrb[0].mxu0
  %v2602 = vadd.f32 0.0, %v2601
  %v2603 = vpop.f32.mrb[0].mxu0
  %2604 = vmatprep.mubr.f32.mxu0 0.0
  %2605 = vmatmul.mubr.f32.gmra.mrb[0].mxu0 %v2435
  %v2606 = vpop.f32.mrb[0].mxu0
  %v2607 = vadd.f32 0.0, %v2606
  %v2608 = vpop.f32.mrb[0].mxu0
  %2609 = vmatprep.mubr.f32.mxu0 0.0
  %2610 = vmatmul.mubr.f32.gmra.mrb[0].mxu0 %v2438
  %v2611 = vpop.f32.mrb[0].mxu0
  %v2612 = vadd.f32 0.0, %v2611
  %v2613 = vpop.f32.mrb[0].mxu0
  %2614 = vmatprep.mubr.f32.mxu0 0.0
  %2615 = vmatmul.mubr.f32.gmra.mrb[0].mxu0 %v2441
  %v2616 = vpop.f32.mrb[0].mxu0
  %v2617 = vadd.f32 0.0, %v2616
  %v2618 = vpop.f32.mrb[0].mxu0
  %2619 = vmatprep.mubr.f32.mxu0 0.0
  %2620 = vmatmul.mubr.f32.gmra.mrb[0].mxu0 %v2444
  %v2621 = vpop.f32.mrb[0].mxu0
  %v2622 = vadd.f32 0.0, %v2621
  %v2623 = vpop.f32.mrb[0].mxu0
  %2624 = vmatprep.mubr.f32.mxu0 0.0
  %2625 = vmatmul.mubr.f32.gmra.mrb[0].mxu0 %v2447
  %v2626 = vpop.f32.mrb[0].mxu0
  %v2627 = vadd.f32 0.0, %v2626
  %v2628 = vpop.f32.mrb[0].mxu0
  %2629 = vmatprep.mubr.f32.mxu0 0.0
  %2630 = vmatmul.mubr.f32.gmra.mrb[0].mxu0 %v2450
  %v2631 = vpop.f32.mrb[0].mxu0
  %v2632 = vadd.f32 0.0, %v2631
  %v2633 = vpop.f32.mrb[0].mxu0
  %2634 = vmatprep.mubr.f32.mxu0 0.0
  %2635 = vmatmul.mubr.f32.gmra.mrb[0].mxu0 %v2453
  %v2636 = vpop.f32.mrb[0].mxu0
  %v2637 = vadd.f32 0.0, %v2636
  %v2638 = vpop.f32.mrb[0].mxu0
  %2639 = vmatprep.mubr.f32.mxu0 0.0
  %2640 = vmatmul.mubr.f32.gmra.mrb[0].mxu0 %v2456
  %v2641 = vpop.f32.mrb[0].mxu0
  %v2642 = vadd.f32 0.0, %v2641
  %v2643 = vpop.f32.mrb[0].mxu0
  %2644 = vmatprep.mubr.f32.mxu0 0.0
  %2645 = vmatmul.mubr.f32.gmra.mrb[0].mxu0 %v2459
  %v2646 = vpop.f32.mrb[0].mxu0
  %v2647 = vadd.f32 0.0, %v2646
  %v2648 = vpop.f32.mrb[0].mxu0
  %2649 = vmatprep.mubr.f32.mxu0 0.0
  %2650 = vmatmul.mubr.f32.gmra.mrb[0].mxu0 %v2462
  %v2651 = vpop.f32.mrb[0].mxu0
  %v2652 = vadd.f32 0.0, %v2651
  %v2653 = vpop.f32.mrb[0].mxu0
  %2654 = vmatprep.mubr.f32.mxu0 0.0
  %2655 = vmatmul.mubr.f32.gmra.mrb[0].mxu0 %v2465
  %v2656 = vpop.f32.mrb[0].mxu0
  %v2657 = vadd.f32 0.0, %v2656
  %v2658 = vpop.f32.mrb[0].mxu0
  %2659 = vmatprep.mubr.f32.mxu0 0.0
  %2660 = vmatmul.mubr.f32.gmra.mrb[0].mxu0 %v2468
  %v2661 = vpop.f32.mrb[0].mxu0
  %v2662 = vadd.f32 0.0, %v2661
  %v2663 = vpop.f32.mrb[0].mxu0
  %2664 = vmatprep.mubr.f32.mxu0 0.0
  %2665 = vmatmul.mubr.f32.gmra.mrb[0].mxu0 %v2471
  %v2666 = vpop.f32.mrb[0].mxu0
  %v2667 = vadd.f32 0.0, %v2666
  %v2668 = vpop.f32.mrb[0].mxu0
  %2669 = vmatprep.mubr.f32.mxu0 0.0
  %2670 = vmatmul.mubr.f32.gmra.mrb[0].mxu0 %v2474
  %v2671 = vpop.f32.mrb[0].mxu0
  %v2672 = vadd.f32 0.0, %v2671
  %v2673 = vpop.f32.mrb[0].mxu0
  %2674 = vmatprep.mubr.f32.mxu0 0.0
  %2675 = vmatmul.mubr.f32.gmra.mrb[0].mxu0 %v2477
  %v2676 = vpop.f32.mrb[0].mxu0
  %v2677 = vadd.f32 0.0, %v2676
  %v2678 = vpop.f32.mrb[0].mxu0
  %2679 = vmatprep.mubr.f32.mxu0 0.0
  %2680 = vmatmul.mubr.f32.gmra.mrb[0].mxu0 %v2480
  %v2681 = vpop.f32.mrb[0].mxu0
  %v2682 = vadd.f32 0.0, %v2681
  %v2683 = vpop.f32.mrb[0].mxu0
  %2684 = vmatprep.mubr.f32.mxu0 0.0
  %2685 = vmatmul.mubr.f32.gmra.mrb[0].mxu0 %v2483
  %v2686 = vpop.f32.mrb[0].mxu0
  %v2687 = vadd.f32 0.0, %v2686
  %v2688 = vpop.f32.mrb[0].mxu0
  %2689 = vmatprep.mubr.f32.mxu0 0.0
  %2690 = vmatmul.mubr.f32.gmra.mrb[0].mxu0 %v2486
  %v2691 = vpop.f32.mrb[0].mxu0
  %v2692 = vadd.f32 0.0, %v2691
  %v2693 = vpop.f32.mrb[0].mxu0
  %2694 = vmatprep.mubr.f32.mxu0 0.0
  %2695 = vmatmul.mubr.f32.gmra.mrb[0].mxu0 %v2489
  %v2696 = vpop.f32.mrb[0].mxu0
  %v2697 = vadd.f32 0.0, %v2696
  %v2698 = vpop.f32.mrb[0].mxu0
  %2699 = vmatprep.mubr.f32.mxu0 0.0
  %2700 = vmatmul.mubr.f32.gmra.mrb[0].mxu0 %v2492
  %v2701 = vpop.f32.mrb[0].mxu0
  %v2702 = vadd.f32 0.0, %v2701
  %v2703 = vpop.f32.mrb[0].mxu0
  %2704 = vmatprep.mubr.f32.mxu0 0.0
  %2705 = vmatmul.mubr.f32.gmra.mrb[0].mxu0 %v2495
  %v2706 = vpop.f32.mrb[0].mxu0
  %v2707 = vadd.f32 0.0, %v2706
  %v2708 = vpop.f32.mrb[0].mxu0
  %2709 = vmatprep.mubr.f32.mxu0 0.0
  %2710 = vmatmul.mubr.f32.gmra.mrb[0].mxu0 %v2498
  %v2711 = vpop.f32.mrb[0].mxu0
  %v2712 = vadd.f32 0.0, %v2711
  %v2713 = vpop.f32.mrb[0].mxu0
  %2714 = vmatprep.mubr.f32.mxu0 0.0
  %2715 = vmatmul.mubr.f32.gmra.mrb[0].mxu0 %v2501
  %v2716 = vpop.f32.mrb[0].mxu0
  %v2717 = vadd.f32 0.0, %v2716
  %v2718 = vpop.f32.mrb[0].mxu0
  %2719 = vmatprep.mubr.f32.mxu0 0.0
  %2720 = vmatmul.mubr.f32.gmra.mrb[0].mxu0 %v2504
  %v2721 = vpop.f32.mrb[0].mxu0
  %v2722 = vadd.f32 0.0, %v2721
  %v2723 = vpop.f32.mrb[0].mxu0
  %2724 = vmatprep.mubr.f32.mxu0 0.0
  %2725 = vmatmul.mubr.f32.gmra.mrb[0].mxu0 %v2507
  %v2726 = vpop.f32.mrb[0].mxu0
  %v2727 = vadd.f32 0.0, %v2726
  %v2728 = vpop.f32.mrb[0].mxu0
  %2729 = vmatprep.mubr.f32.mxu0 0.0
  %2730 = vmatmul.mubr.f32.gmra.mrb[0].mxu0 %v2510
  %v2731 = vpop.f32.mrb[0].mxu0
  %v2732 = vadd.f32 0.0, %v2731
  %v2733 = vpop.f32.mrb[0].mxu0
  %2734 = vmatprep.mubr.f32.mxu0 0.0
  %2735 = vmatmul.mubr.f32.gmra.mrb[0].mxu0 %v2513
  %v2736 = vpop.f32.mrb[0].mxu0
  %v2737 = vadd.f32 0.0, %v2736
  %v2738 = vpop.f32.mrb[0].mxu0
  %2739 = vdwg.mxu0
  %v2740 = vadd.f32 %v2257, %v2582
  %v2741 = vadd.f32 %v2262, %v2587
  %v2742 = vadd.f32 %v2267, %v2592
  %v2743 = vadd.f32 %v2272, %v2597
  %v2744 = vadd.f32 %v2277, %v2602
  %v2745 = vadd.f32 %v2282, %v2607
  %v2746 = vadd.f32 %v2287, %v2612
  %v2747 = vadd.f32 %v2292, %v2617
  %v2748 = vadd.f32 %v2297, %v2622
  %v2749 = vadd.f32 %v2302, %v2627
  %v2750 = vadd.f32 %v2307, %v2632
  %v2751 = vadd.f32 %v2312, %v2637
  %v2752 = vadd.f32 %v2317, %v2642
  %v2753 = vadd.f32 %v2322, %v2647
  %v2754 = vadd.f32 %v2327, %v2652
  %v2755 = vadd.f32 %v2332, %v2657
  %v2756 = vadd.f32 %v2337, %v2662
  %v2757 = vadd.f32 %v2342, %v2667
  %v2758 = vadd.f32 %v2347, %v2672
  %v2759 = vadd.f32 %v2352, %v2677
  %v2760 = vadd.f32 %v2357, %v2682
  %v2761 = vadd.f32 %v2362, %v2687
  %v2762 = vadd.f32 %v2367, %v2692
  %v2763 = vadd.f32 %v2372, %v2697
  %v2764 = vadd.f32 %v2377, %v2702
  %v2765 = vadd.f32 %v2382, %v2707
  %v2766 = vadd.f32 %v2387, %v2712
  %v2767 = vadd.f32 %v2392, %v2717
  %v2768 = vadd.f32 %v2397, %v2722
  %v2769 = vadd.f32 %v2402, %v2727
  %v2770 = vadd.f32 %v2407, %v2732
  %v2771 = vadd.f32 %v2412, %v2737
  %v2772 = vlaneseq
  %v2773 = vshrl.u32 %v2772, 7
  %v2774 = vsub.s32 0, %v2773
  %v2775 = vrot.slane %v20, %v2774
  %v2776 = vadd.f32 %v2740, %v2775
  %v2777 = vadd.f32 %v2741, %v2775
  %v2778 = vadd.f32 %v2742, %v2775
  %v2779 = vadd.f32 %v2743, %v2775
  %v2780 = vadd.f32 %v2744, %v2775
  %v2781 = vadd.f32 %v2745, %v2775
  %v2782 = vadd.f32 %v2746, %v2775
  %v2783 = vadd.f32 %v2747, %v2775
  %v2784 = vadd.f32 %v2748, %v2775
  %v2785 = vadd.f32 %v2749, %v2775
  %v2786 = vadd.f32 %v2750, %v2775
  %v2787 = vadd.f32 %v2751, %v2775
  %v2788 = vadd.f32 %v2752, %v2775
  %v2789 = vadd.f32 %v2753, %v2775
  %v2790 = vadd.f32 %v2754, %v2775
  %v2791 = vadd.f32 %v2755, %v2775
  %v2792 = vadd.f32 %v2756, %v2775
  %v2793 = vadd.f32 %v2757, %v2775
  %v2794 = vadd.f32 %v2758, %v2775
  %v2795 = vadd.f32 %v2759, %v2775
  %v2796 = vadd.f32 %v2760, %v2775
  %v2797 = vadd.f32 %v2761, %v2775
  %v2798 = vadd.f32 %v2762, %v2775
  %v2799 = vadd.f32 %v2763, %v2775
  %v2800 = vadd.f32 %v2764, %v2775
  %v2801 = vadd.f32 %v2765, %v2775
  %v2802 = vadd.f32 %v2766, %v2775
  %v2803 = vadd.f32 %v2767, %v2775
  %v2804 = vadd.f32 %v2768, %v2775
  %v2805 = vadd.f32 %v2769, %v2775
  %v2806 = vadd.f32 %v2770, %v2775
  %v2807 = vadd.f32 %v2771, %v2775
  %v2808 = vsel %vm1637, %v2806, 0.0
  %v2809 = vsel %vm1638, %v2807, 0.0
  %v2810 = vsel %vm1639, %v2776, 0.0
  %v2811 = vsel %vm1640, %v2777, 0.0
  %v2812 = vsel %vm1641, %v2778, 0.0
  %v2813 = vsel %vm1642, %v2779, 0.0
  %v2814 = vsel %vm1643, %v2780, 0.0
  %v2815 = vsel %vm1644, %v2781, 0.0
  %v2816 = vsel %vm1645, %v2782, 0.0
  %v2817 = vsel %vm1646, %v2783, 0.0
  %v2818 = vsel %vm1647, %v2784, 0.0
  %v2819 = vsel %vm1648, %v2785, 0.0
  %v2820 = vsel %vm1649, %v2786, 0.0
  %v2821 = vsel %vm1650, %v2787, 0.0
  %v2822 = vsel %vm1651, %v2788, 0.0
  %v2823 = vsel %vm1652, %v2789, 0.0
  %v2824 = vsel %vm1653, %v2790, 0.0
  %v2825 = vsel %vm1654, %v2791, 0.0
  %v2826 = vsel %vm1655, %v2792, 0.0
  %v2827 = vsel %vm1656, %v2793, 0.0
  %v2828 = vsel %vm1657, %v2794, 0.0
  %v2829 = vsel %vm1658, %v2795, 0.0
  %v2830 = vsel %vm1659, %v2796, 0.0
  %v2831 = vsel %vm1660, %v2797, 0.0
  %v2832 = vsel %vm1661, %v2798, 0.0
  %v2833 = vsel %vm1662, %v2799, 0.0
  %v2834 = vsel %vm1663, %v2800, 0.0
  %v2835 = vsel %vm1664, %v2801, 0.0
  %v2836 = vsel %vm1665, %v2802, 0.0
  %v2837 = vsel %vm1666, %v2803, 0.0
  %v2838 = vsel %vm1667, %v2804, 0.0
  %v2839 = vsel %vm1668, %v2805, 0.0
  %v2840 = vsel %vm1669, %v2778, 0.0
  %v2841 = vsel %vm1670, %v2779, 0.0
  %v2842 = vsel %vm1671, %v2780, 0.0
  %v2843 = vsel %vm1672, %v2781, 0.0
  %v2844 = vsel %vm1673, %v2782, 0.0
  %v2845 = vsel %vm1674, %v2783, 0.0
  %v2846 = vsel %vm1675, %v2784, 0.0
  %v2847 = vsel %vm1676, %v2785, 0.0
  %v2848 = vsel %vm1677, %v2786, 0.0
  %v2849 = vsel %vm1678, %v2787, 0.0
  %v2850 = vsel %vm1679, %v2788, 0.0
  %v2851 = vsel %vm1680, %v2789, 0.0
  %v2852 = vsel %vm1681, %v2790, 0.0
  %v2853 = vsel %vm1682, %v2791, 0.0
  %v2854 = vsel %vm1683, %v2792, 0.0
  %v2855 = vsel %vm1684, %v2793, 0.0
  %v2856 = vsel %vm1685, %v2794, 0.0
  %v2857 = vsel %vm1686, %v2795, 0.0
  %v2858 = vsel %vm1687, %v2796, 0.0
  %v2859 = vsel %vm1688, %v2797, 0.0
  %v2860 = vsel %vm1689, %v2798, 0.0
  %v2861 = vsel %vm1690, %v2799, 0.0
  %v2862 = vsel %vm1691, %v2800, 0.0
  %v2863 = vsel %vm1692, %v2801, 0.0
  %v2864 = vsel %vm1693, %v2802, 0.0
  %v2865 = vsel %vm1694, %v2803, 0.0
  %v2866 = vsel %vm1695, %v2804, 0.0
  %v2867 = vsel %vm1696, %v2805, 0.0
  %v2868 = vsel %vm1697, %v2806, 0.0
  %v2869 = vsel %vm1698, %v2807, 0.0
  %v2870 = vsel %vm1699, %v2776, 0.0
  %v2871 = vsel %vm1700, %v2777, 0.0
  %v2872 = vld [vmem:[%s2 + $0xc0] sm:$0xff]
  %v2873 = vld [vmem:[%s2 + $0xc8] sm:$0xff]
  %v2874 = vld [vmem:[%s2 + $0xd0] sm:$0xff]
  %v2875 = vld [vmem:[%s2 + $0xd8] sm:$0xff]
  %v2876 = vld [vmem:[%s2 + $0xa0] sm:$0xff]
  %v2877 = vld [vmem:[%s2 + $0xa8] sm:$0xff]
  %v2878 = vld [vmem:[%s2 + $0xb0] sm:$0xff]
  %v2879 = vld [vmem:[%s2 + $0xb8] sm:$0xff]
  %v2881 = vsel %vm712, %v2808, 0
  %v2884 = vsel %vm712, %v2809, 0
  %v2887 = vsel %vm712, %v2810, 0
  %v2890 = vsel %vm712, %v2811, 0
  %v2893 = vsel %vm712, %v2812, 0
  %v2896 = vsel %vm712, %v2813, 0
  %v2899 = vsel %vm712, %v2814, 0
  %v2902 = vsel %vm712, %v2815, 0
  %v2905 = vsel %vm712, %v2816, 0
  %v2908 = vsel %vm712, %v2817, 0
  %v2911 = vsel %vm712, %v2818, 0
  %v2914 = vsel %vm712, %v2819, 0
  %v2917 = vsel %vm712, %v2820, 0
  %v2920 = vsel %vm712, %v2821, 0
  %v2923 = vsel %vm712, %v2822, 0
  %v2926 = vsel %vm712, %v2823, 0
  %v2929 = vsel %vm712, %v2824, 0
  %v2932 = vsel %vm712, %v2825, 0
  %v2935 = vsel %vm712, %v2826, 0
  %v2938 = vsel %vm712, %v2827, 0
  %v2941 = vsel %vm712, %v2828, 0
  %v2944 = vsel %vm712, %v2829, 0
  %v2947 = vsel %vm712, %v2830, 0
  %v2950 = vsel %vm712, %v2831, 0
  %v2953 = vsel %vm712, %v2832, 0
  %v2956 = vsel %vm712, %v2833, 0
  %v2959 = vsel %vm712, %v2834, 0
  %v2962 = vsel %vm712, %v2835, 0
  %v2965 = vsel %vm712, %v2836, 0
  %v2968 = vsel %vm712, %v2837, 0
  %v2971 = vsel %vm712, %v2838, 0
  %v2974 = vsel %vm712, %v2839, 0
  %2976 = vmatprep.subr.mxu0 0.0
  %2977 = vmatpush1.msra.mxu0 %v2876
  %2978 = vmatprep.subr.mxu0 0.0
  %2979 = vmatpush1.msra.mxu0 %v2877
  %2980 = vmatprep.subr.mxu0 0.0
  %2981 = vmatpush1.msra.mxu0 %v2878
  %2982 = vmatprep.subr.mxu0 0.0
  %2983 = vmatpush1.msra.mxu0 %v2879
  %2984 = vmatprep.subr.mxu0 0.0
  %2985 = vmatpush1.msra.mxu0 0.0
  %2986 = vmatprep.subr.mxu0 0.0
  %2987 = vmatpush1.msra.mxu0 0.0
  %2988 = vmatprep.subr.mxu0 0.0
  %2989 = vmatpush1.msra.mxu0 0.0
  %2990 = vmatprep.subr.mxu0 0.0
  %2991 = vmatpush1.msra.mxu0 0.0
  %2992 = vmatprep.subr.mxu0 0.0
  %2993 = vmatpush1.msra.mxu0 0.0
  %2994 = vmatprep.subr.mxu0 0.0
  %2995 = vmatpush1.msra.mxu0 0.0
  %2996 = vmatprep.subr.mxu0 0.0
  %2997 = vmatpush1.msra.mxu0 0.0
  %2998 = vmatprep.subr.mxu0 0.0
  %2999 = vmatpush1.msra.mxu0 0.0
  %3000 = vmatprep.subr.mxu0 0.0
  %3001 = vmatpush1.msra.mxu0 0.0
  %3002 = vmatprep.subr.mxu0 0.0
  %3003 = vmatpush1.msra.mxu0 0.0
  %3004 = vmatprep.subr.mxu0 0.0
  %3005 = vmatpush1.msra.mxu0 0.0
  %3006 = vmatprep.subr.mxu0 0.0
  %3007 = vmatpush1.msra.mxu0 0.0
  %3008 = vmatprep.subr.mxu0 0.0
  %3009 = vmatpush1.msra.mxu0 0.0
  %3010 = vmatprep.subr.mxu0 0.0
  %3011 = vmatpush1.msra.mxu0 0.0
  %3012 = vmatprep.subr.mxu0 0.0
  %3013 = vmatpush1.msra.mxu0 0.0
  %3014 = vmatprep.subr.mxu0 0.0
  %3015 = vmatpush1.msra.mxu0 0.0
  %3016 = vmatprep.subr.mxu0 0.0
  %3017 = vmatpush1.msra.mxu0 0.0
  %3018 = vmatprep.subr.mxu0 0.0
  %3019 = vmatpush1.msra.mxu0 0.0
  %3020 = vmatprep.subr.mxu0 0.0
  %3021 = vmatpush1.msra.mxu0 0.0
  %3022 = vmatprep.subr.mxu0 0.0
  %3023 = vmatpush1.msra.mxu0 0.0
  %3024 = vmatprep.subr.mxu0 0.0
  %3025 = vmatpush1.msra.mxu0 0.0
  %3026 = vmatprep.subr.mxu0 0.0
  %3027 = vmatpush1.msra.mxu0 0.0
  %3028 = vmatprep.subr.mxu0 0.0
  %3029 = vmatpush1.msra.mxu0 0.0
  %3030 = vmatprep.subr.mxu0 0.0
  %3031 = vmatpush1.msra.mxu0 0.0
  %3032 = vmatprep.subr.mxu0 0.0
  %3033 = vmatpush1.msra.mxu0 0.0
  %3034 = vmatprep.subr.mxu0 0.0
  %3035 = vmatpush1.msra.mxu0 0.0
  %3036 = vmatprep.subr.mxu0 0.0
  %3037 = vmatpush1.msra.mxu0 0.0
  %3038 = vmatprep.subr.mxu0 0.0
  %3039 = vmatpush1.msra.mxu0 0.0
  %3040 = vmatprep.mubr.f32.mxu0 0.0
  %3041 = vmatmul.mubr.f32.gmra.mrb[0].mxu0 %v2881
  %v3042 = vpop.f32.mrb[0].mxu0
  %v3043 = vadd.f32 0.0, %v3042
  %v3044 = vpop.f32.mrb[0].mxu0
  %3045 = vmatprep.mubr.f32.mxu0 0.0
  %3046 = vmatmul.mubr.f32.gmra.mrb[0].mxu0 %v2884
  %v3047 = vpop.f32.mrb[0].mxu0
  %v3048 = vadd.f32 0.0, %v3047
  %v3049 = vpop.f32.mrb[0].mxu0
  %3050 = vmatprep.mubr.f32.mxu0 0.0
  %3051 = vmatmul.mubr.f32.gmra.mrb[0].mxu0 %v2887
  %v3052 = vpop.f32.mrb[0].mxu0
  %v3053 = vadd.f32 0.0, %v3052
  %v3054 = vpop.f32.mrb[0].mxu0
  %3055 = vmatprep.mubr.f32.mxu0 0.0
  %3056 = vmatmul.mubr.f32.gmra.mrb[0].mxu0 %v2890
  %v3057 = vpop.f32.mrb[0].mxu0
  %v3058 = vadd.f32 0.0, %v3057
  %v3059 = vpop.f32.mrb[0].mxu0
  %3060 = vmatprep.mubr.f32.mxu0 0.0
  %3061 = vmatmul.mubr.f32.gmra.mrb[0].mxu0 %v2893
  %v3062 = vpop.f32.mrb[0].mxu0
  %v3063 = vadd.f32 0.0, %v3062
  %v3064 = vpop.f32.mrb[0].mxu0
  %3065 = vmatprep.mubr.f32.mxu0 0.0
  %3066 = vmatmul.mubr.f32.gmra.mrb[0].mxu0 %v2896
  %v3067 = vpop.f32.mrb[0].mxu0
  %v3068 = vadd.f32 0.0, %v3067
  %v3069 = vpop.f32.mrb[0].mxu0
  %3070 = vmatprep.mubr.f32.mxu0 0.0
  %3071 = vmatmul.mubr.f32.gmra.mrb[0].mxu0 %v2899
  %v3072 = vpop.f32.mrb[0].mxu0
  %v3073 = vadd.f32 0.0, %v3072
  %v3074 = vpop.f32.mrb[0].mxu0
  %3075 = vmatprep.mubr.f32.mxu0 0.0
  %3076 = vmatmul.mubr.f32.gmra.mrb[0].mxu0 %v2902
  %v3077 = vpop.f32.mrb[0].mxu0
  %v3078 = vadd.f32 0.0, %v3077
  %v3079 = vpop.f32.mrb[0].mxu0
  %3080 = vmatprep.mubr.f32.mxu0 0.0
  %3081 = vmatmul.mubr.f32.gmra.mrb[0].mxu0 %v2905
  %v3082 = vpop.f32.mrb[0].mxu0
  %v3083 = vadd.f32 0.0, %v3082
  %v3084 = vpop.f32.mrb[0].mxu0
  %3085 = vmatprep.mubr.f32.mxu0 0.0
  %3086 = vmatmul.mubr.f32.gmra.mrb[0].mxu0 %v2908
  %v3087 = vpop.f32.mrb[0].mxu0
  %v3088 = vadd.f32 0.0, %v3087
  %v3089 = vpop.f32.mrb[0].mxu0
  %3090 = vmatprep.mubr.f32.mxu0 0.0
  %3091 = vmatmul.mubr.f32.gmra.mrb[0].mxu0 %v2911
  %v3092 = vpop.f32.mrb[0].mxu0
  %v3093 = vadd.f32 0.0, %v3092
  %v3094 = vpop.f32.mrb[0].mxu0
  %3095 = vmatprep.mubr.f32.mxu0 0.0
  %3096 = vmatmul.mubr.f32.gmra.mrb[0].mxu0 %v2914
  %v3097 = vpop.f32.mrb[0].mxu0
  %v3098 = vadd.f32 0.0, %v3097
  %v3099 = vpop.f32.mrb[0].mxu0
  %3100 = vmatprep.mubr.f32.mxu0 0.0
  %3101 = vmatmul.mubr.f32.gmra.mrb[0].mxu0 %v2917
  %v3102 = vpop.f32.mrb[0].mxu0
  %v3103 = vadd.f32 0.0, %v3102
  %v3104 = vpop.f32.mrb[0].mxu0
  %3105 = vmatprep.mubr.f32.mxu0 0.0
  %3106 = vmatmul.mubr.f32.gmra.mrb[0].mxu0 %v2920
  %v3107 = vpop.f32.mrb[0].mxu0
  %v3108 = vadd.f32 0.0, %v3107
  %v3109 = vpop.f32.mrb[0].mxu0
  %3110 = vmatprep.mubr.f32.mxu0 0.0
  %3111 = vmatmul.mubr.f32.gmra.mrb[0].mxu0 %v2923
  %v3112 = vpop.f32.mrb[0].mxu0
  %v3113 = vadd.f32 0.0, %v3112
  %v3114 = vpop.f32.mrb[0].mxu0
  %3115 = vmatprep.mubr.f32.mxu0 0.0
  %3116 = vmatmul.mubr.f32.gmra.mrb[0].mxu0 %v2926
  %v3117 = vpop.f32.mrb[0].mxu0
  %v3118 = vadd.f32 0.0, %v3117
  %v3119 = vpop.f32.mrb[0].mxu0
  %3120 = vmatprep.mubr.f32.mxu0 0.0
  %3121 = vmatmul.mubr.f32.gmra.mrb[0].mxu0 %v2929
  %v3122 = vpop.f32.mrb[0].mxu0
  %v3123 = vadd.f32 0.0, %v3122
  %v3124 = vpop.f32.mrb[0].mxu0
  %3125 = vmatprep.mubr.f32.mxu0 0.0
  %3126 = vmatmul.mubr.f32.gmra.mrb[0].mxu0 %v2932
  %v3127 = vpop.f32.mrb[0].mxu0
  %v3128 = vadd.f32 0.0, %v3127
  %v3129 = vpop.f32.mrb[0].mxu0
  %3130 = vmatprep.mubr.f32.mxu0 0.0
  %3131 = vmatmul.mubr.f32.gmra.mrb[0].mxu0 %v2935
  %v3132 = vpop.f32.mrb[0].mxu0
  %v3133 = vadd.f32 0.0, %v3132
  %v3134 = vpop.f32.mrb[0].mxu0
  %3135 = vmatprep.mubr.f32.mxu0 0.0
  %3136 = vmatmul.mubr.f32.gmra.mrb[0].mxu0 %v2938
  %v3137 = vpop.f32.mrb[0].mxu0
  %v3138 = vadd.f32 0.0, %v3137
  %v3139 = vpop.f32.mrb[0].mxu0
  %3140 = vmatprep.mubr.f32.mxu0 0.0
  %3141 = vmatmul.mubr.f32.gmra.mrb[0].mxu0 %v2941
  %v3142 = vpop.f32.mrb[0].mxu0
  %v3143 = vadd.f32 0.0, %v3142
  %v3144 = vpop.f32.mrb[0].mxu0
  %3145 = vmatprep.mubr.f32.mxu0 0.0
  %3146 = vmatmul.mubr.f32.gmra.mrb[0].mxu0 %v2944
  %v3147 = vpop.f32.mrb[0].mxu0
  %v3148 = vadd.f32 0.0, %v3147
  %v3149 = vpop.f32.mrb[0].mxu0
  %3150 = vmatprep.mubr.f32.mxu0 0.0
  %3151 = vmatmul.mubr.f32.gmra.mrb[0].mxu0 %v2947
  %v3152 = vpop.f32.mrb[0].mxu0
  %v3153 = vadd.f32 0.0, %v3152
  %v3154 = vpop.f32.mrb[0].mxu0
  %3155 = vmatprep.mubr.f32.mxu0 0.0
  %3156 = vmatmul.mubr.f32.gmra.mrb[0].mxu0 %v2950
  %v3157 = vpop.f32.mrb[0].mxu0
  %v3158 = vadd.f32 0.0, %v3157
  %v3159 = vpop.f32.mrb[0].mxu0
  %3160 = vmatprep.mubr.f32.mxu0 0.0
  %3161 = vmatmul.mubr.f32.gmra.mrb[0].mxu0 %v2953
  %v3162 = vpop.f32.mrb[0].mxu0
  %v3163 = vadd.f32 0.0, %v3162
  %v3164 = vpop.f32.mrb[0].mxu0
  %3165 = vmatprep.mubr.f32.mxu0 0.0
  %3166 = vmatmul.mubr.f32.gmra.mrb[0].mxu0 %v2956
  %v3167 = vpop.f32.mrb[0].mxu0
  %v3168 = vadd.f32 0.0, %v3167
  %v3169 = vpop.f32.mrb[0].mxu0
  %3170 = vmatprep.mubr.f32.mxu0 0.0
  %3171 = vmatmul.mubr.f32.gmra.mrb[0].mxu0 %v2959
  %v3172 = vpop.f32.mrb[0].mxu0
  %v3173 = vadd.f32 0.0, %v3172
  %v3174 = vpop.f32.mrb[0].mxu0
  %3175 = vmatprep.mubr.f32.mxu0 0.0
  %3176 = vmatmul.mubr.f32.gmra.mrb[0].mxu0 %v2962
  %v3177 = vpop.f32.mrb[0].mxu0
  %v3178 = vadd.f32 0.0, %v3177
  %v3179 = vpop.f32.mrb[0].mxu0
  %3180 = vmatprep.mubr.f32.mxu0 0.0
  %3181 = vmatmul.mubr.f32.gmra.mrb[0].mxu0 %v2965
  %v3182 = vpop.f32.mrb[0].mxu0
  %v3183 = vadd.f32 0.0, %v3182
  %v3184 = vpop.f32.mrb[0].mxu0
  %3185 = vmatprep.mubr.f32.mxu0 0.0
  %3186 = vmatmul.mubr.f32.gmra.mrb[0].mxu0 %v2968
  %v3187 = vpop.f32.mrb[0].mxu0
  %v3188 = vadd.f32 0.0, %v3187
  %v3189 = vpop.f32.mrb[0].mxu0
  %3190 = vmatprep.mubr.f32.mxu0 0.0
  %3191 = vmatmul.mubr.f32.gmra.mrb[0].mxu0 %v2971
  %v3192 = vpop.f32.mrb[0].mxu0
  %v3193 = vadd.f32 0.0, %v3192
  %v3194 = vpop.f32.mrb[0].mxu0
  %3195 = vmatprep.mubr.f32.mxu0 0.0
  %3196 = vmatmul.mubr.f32.gmra.mrb[0].mxu0 %v2974
  %v3197 = vpop.f32.mrb[0].mxu0
  %v3198 = vadd.f32 0.0, %v3197
  %v3199 = vpop.f32.mrb[0].mxu0
  %3200 = vdwg.mxu0
  %v3202 = vsel %vm712, %v2776, 0
  %v3205 = vsel %vm712, %v2777, 0
  %v3208 = vsel %vm712, %v2778, 0
  %v3211 = vsel %vm712, %v2779, 0
  %v3214 = vsel %vm712, %v2780, 0
  %v3217 = vsel %vm712, %v2781, 0
  %v3220 = vsel %vm712, %v2782, 0
  %v3223 = vsel %vm712, %v2783, 0
  %v3226 = vsel %vm712, %v2784, 0
  %v3229 = vsel %vm712, %v2785, 0
  %v3232 = vsel %vm712, %v2786, 0
  %v3235 = vsel %vm712, %v2787, 0
  %v3238 = vsel %vm712, %v2788, 0
  %v3241 = vsel %vm712, %v2789, 0
  %v3244 = vsel %vm712, %v2790, 0
  %v3247 = vsel %vm712, %v2791, 0
  %v3250 = vsel %vm712, %v2792, 0
  %v3253 = vsel %vm712, %v2793, 0
  %v3256 = vsel %vm712, %v2794, 0
  %v3259 = vsel %vm712, %v2795, 0
  %v3262 = vsel %vm712, %v2796, 0
  %v3265 = vsel %vm712, %v2797, 0
  %v3268 = vsel %vm712, %v2798, 0
  %v3271 = vsel %vm712, %v2799, 0
  %v3274 = vsel %vm712, %v2800, 0
  %v3277 = vsel %vm712, %v2801, 0
  %v3280 = vsel %vm712, %v2802, 0
  %v3283 = vsel %vm712, %v2803, 0
  %v3286 = vsel %vm712, %v2804, 0
  %v3289 = vsel %vm712, %v2805, 0
  %v3292 = vsel %vm712, %v2806, 0
  %v3295 = vsel %vm712, %v2807, 0
  %3297 = vmatprep.subr.mxu0 0.0
  %3298 = vmatpush1.msra.mxu0 %v2872
  %3299 = vmatprep.subr.mxu0 0.0
  %3300 = vmatpush1.msra.mxu0 %v2873
  %3301 = vmatprep.subr.mxu0 0.0
  %3302 = vmatpush1.msra.mxu0 %v2874
  %3303 = vmatprep.subr.mxu0 0.0
  %3304 = vmatpush1.msra.mxu0 %v2875
  %3305 = vmatprep.subr.mxu0 0.0
  %3306 = vmatpush1.msra.mxu0 0.0
  %3307 = vmatprep.subr.mxu0 0.0
  %3308 = vmatpush1.msra.mxu0 0.0
  %3309 = vmatprep.subr.mxu0 0.0
  %3310 = vmatpush1.msra.mxu0 0.0
  %3311 = vmatprep.subr.mxu0 0.0
  %3312 = vmatpush1.msra.mxu0 0.0
  %3313 = vmatprep.subr.mxu0 0.0
  %3314 = vmatpush1.msra.mxu0 0.0
  %3315 = vmatprep.subr.mxu0 0.0
  %3316 = vmatpush1.msra.mxu0 0.0
  %3317 = vmatprep.subr.mxu0 0.0
  %3318 = vmatpush1.msra.mxu0 0.0
  %3319 = vmatprep.subr.mxu0 0.0
  %3320 = vmatpush1.msra.mxu0 0.0
  %3321 = vmatprep.subr.mxu0 0.0
  %3322 = vmatpush1.msra.mxu0 0.0
  %3323 = vmatprep.subr.mxu0 0.0
  %3324 = vmatpush1.msra.mxu0 0.0
  %3325 = vmatprep.subr.mxu0 0.0
  %3326 = vmatpush1.msra.mxu0 0.0
  %3327 = vmatprep.subr.mxu0 0.0
  %3328 = vmatpush1.msra.mxu0 0.0
  %3329 = vmatprep.subr.mxu0 0.0
  %3330 = vmatpush1.msra.mxu0 0.0
  %3331 = vmatprep.subr.mxu0 0.0
  %3332 = vmatpush1.msra.mxu0 0.0
  %3333 = vmatprep.subr.mxu0 0.0
  %3334 = vmatpush1.msra.mxu0 0.0
  %3335 = vmatprep.subr.mxu0 0.0
  %3336 = vmatpush1.msra.mxu0 0.0
  %3337 = vmatprep.subr.mxu0 0.0
  %3338 = vmatpush1.msra.mxu0 0.0
  %3339 = vmatprep.subr.mxu0 0.0
  %3340 = vmatpush1.msra.mxu0 0.0
  %3341 = vmatprep.subr.mxu0 0.0
  %3342 = vmatpush1.msra.mxu0 0.0
  %3343 = vmatprep.subr.mxu0 0.0
  %3344 = vmatpush1.msra.mxu0 0.0
  %3345 = vmatprep.subr.mxu0 0.0
  %3346 = vmatpush1.msra.mxu0 0.0
  %3347 = vmatprep.subr.mxu0 0.0
  %3348 = vmatpush1.msra.mxu0 0.0
  %3349 = vmatprep.subr.mxu0 0.0
  %3350 = vmatpush1.msra.mxu0 0.0
  %3351 = vmatprep.subr.mxu0 0.0
  %3352 = vmatpush1.msra.mxu0 0.0
  %3353 = vmatprep.subr.mxu0 0.0
  %3354 = vmatpush1.msra.mxu0 0.0
  %3355 = vmatprep.subr.mxu0 0.0
  %3356 = vmatpush1.msra.mxu0 0.0
  %3357 = vmatprep.subr.mxu0 0.0
  %3358 = vmatpush1.msra.mxu0 0.0
  %3359 = vmatprep.subr.mxu0 0.0
  %3360 = vmatpush1.msra.mxu0 0.0
  %3361 = vmatprep.mubr.f32.mxu0 0.0
  %3362 = vmatmul.mubr.f32.gmra.mrb[0].mxu0 %v3202
  %v3363 = vpop.f32.mrb[0].mxu0
  %v3364 = vadd.f32 %v3043, %v3363
  %v3365 = vpop.f32.mrb[0].mxu0
  %3366 = vmatprep.mubr.f32.mxu0 0.0
  %3367 = vmatmul.mubr.f32.gmra.mrb[0].mxu0 %v3205
  %v3368 = vpop.f32.mrb[0].mxu0
  %v3369 = vadd.f32 %v3048, %v3368
  %v3370 = vpop.f32.mrb[0].mxu0
  %3371 = vmatprep.mubr.f32.mxu0 0.0
  %3372 = vmatmul.mubr.f32.gmra.mrb[0].mxu0 %v3208
  %v3373 = vpop.f32.mrb[0].mxu0
  %v3374 = vadd.f32 %v3053, %v3373
  %v3375 = vpop.f32.mrb[0].mxu0
  %3376 = vmatprep.mubr.f32.mxu0 0.0
  %3377 = vmatmul.mubr.f32.gmra.mrb[0].mxu0 %v3211
  %v3378 = vpop.f32.mrb[0].mxu0
  %v3379 = vadd.f32 %v3058, %v3378
  %v3380 = vpop.f32.mrb[0].mxu0
  %3381 = vmatprep.mubr.f32.mxu0 0.0
  %3382 = vmatmul.mubr.f32.gmra.mrb[0].mxu0 %v3214
  %v3383 = vpop.f32.mrb[0].mxu0
  %v3384 = vadd.f32 %v3063, %v3383
  %v3385 = vpop.f32.mrb[0].mxu0
  %3386 = vmatprep.mubr.f32.mxu0 0.0
  %3387 = vmatmul.mubr.f32.gmra.mrb[0].mxu0 %v3217
  %v3388 = vpop.f32.mrb[0].mxu0
  %v3389 = vadd.f32 %v3068, %v3388
  %v3390 = vpop.f32.mrb[0].mxu0
  %3391 = vmatprep.mubr.f32.mxu0 0.0
  %3392 = vmatmul.mubr.f32.gmra.mrb[0].mxu0 %v3220
  %v3393 = vpop.f32.mrb[0].mxu0
  %v3394 = vadd.f32 %v3073, %v3393
  %v3395 = vpop.f32.mrb[0].mxu0
  %3396 = vmatprep.mubr.f32.mxu0 0.0
  %3397 = vmatmul.mubr.f32.gmra.mrb[0].mxu0 %v3223
  %v3398 = vpop.f32.mrb[0].mxu0
  %v3399 = vadd.f32 %v3078, %v3398
  %v3400 = vpop.f32.mrb[0].mxu0
  %3401 = vmatprep.mubr.f32.mxu0 0.0
  %3402 = vmatmul.mubr.f32.gmra.mrb[0].mxu0 %v3226
  %v3403 = vpop.f32.mrb[0].mxu0
  %v3404 = vadd.f32 %v3083, %v3403
  %v3405 = vpop.f32.mrb[0].mxu0
  %3406 = vmatprep.mubr.f32.mxu0 0.0
  %3407 = vmatmul.mubr.f32.gmra.mrb[0].mxu0 %v3229
  %v3408 = vpop.f32.mrb[0].mxu0
  %v3409 = vadd.f32 %v3088, %v3408
  %v3410 = vpop.f32.mrb[0].mxu0
  %3411 = vmatprep.mubr.f32.mxu0 0.0
  %3412 = vmatmul.mubr.f32.gmra.mrb[0].mxu0 %v3232
  %v3413 = vpop.f32.mrb[0].mxu0
  %v3414 = vadd.f32 %v3093, %v3413
  %v3415 = vpop.f32.mrb[0].mxu0
  %3416 = vmatprep.mubr.f32.mxu0 0.0
  %3417 = vmatmul.mubr.f32.gmra.mrb[0].mxu0 %v3235
  %v3418 = vpop.f32.mrb[0].mxu0
  %v3419 = vadd.f32 %v3098, %v3418
  %v3420 = vpop.f32.mrb[0].mxu0
  %3421 = vmatprep.mubr.f32.mxu0 0.0
  %3422 = vmatmul.mubr.f32.gmra.mrb[0].mxu0 %v3238
  %v3423 = vpop.f32.mrb[0].mxu0
  %v3424 = vadd.f32 %v3103, %v3423
  %v3425 = vpop.f32.mrb[0].mxu0
  %3426 = vmatprep.mubr.f32.mxu0 0.0
  %3427 = vmatmul.mubr.f32.gmra.mrb[0].mxu0 %v3241
  %v3428 = vpop.f32.mrb[0].mxu0
  %v3429 = vadd.f32 %v3108, %v3428
  %v3430 = vpop.f32.mrb[0].mxu0
  %3431 = vmatprep.mubr.f32.mxu0 0.0
  %3432 = vmatmul.mubr.f32.gmra.mrb[0].mxu0 %v3244
  %v3433 = vpop.f32.mrb[0].mxu0
  %v3434 = vadd.f32 %v3113, %v3433
  %v3435 = vpop.f32.mrb[0].mxu0
  %3436 = vmatprep.mubr.f32.mxu0 0.0
  %3437 = vmatmul.mubr.f32.gmra.mrb[0].mxu0 %v3247
  %v3438 = vpop.f32.mrb[0].mxu0
  %v3439 = vadd.f32 %v3118, %v3438
  %v3440 = vpop.f32.mrb[0].mxu0
  %3441 = vmatprep.mubr.f32.mxu0 0.0
  %3442 = vmatmul.mubr.f32.gmra.mrb[0].mxu0 %v3250
  %v3443 = vpop.f32.mrb[0].mxu0
  %v3444 = vadd.f32 %v3123, %v3443
  %v3445 = vpop.f32.mrb[0].mxu0
  %3446 = vmatprep.mubr.f32.mxu0 0.0
  %3447 = vmatmul.mubr.f32.gmra.mrb[0].mxu0 %v3253
  %v3448 = vpop.f32.mrb[0].mxu0
  %v3449 = vadd.f32 %v3128, %v3448
  %v3450 = vpop.f32.mrb[0].mxu0
  %3451 = vmatprep.mubr.f32.mxu0 0.0
  %3452 = vmatmul.mubr.f32.gmra.mrb[0].mxu0 %v3256
  %v3453 = vpop.f32.mrb[0].mxu0
  %v3454 = vadd.f32 %v3133, %v3453
  %v3455 = vpop.f32.mrb[0].mxu0
  %3456 = vmatprep.mubr.f32.mxu0 0.0
  %3457 = vmatmul.mubr.f32.gmra.mrb[0].mxu0 %v3259
  %v3458 = vpop.f32.mrb[0].mxu0
  %v3459 = vadd.f32 %v3138, %v3458
  %v3460 = vpop.f32.mrb[0].mxu0
  %3461 = vmatprep.mubr.f32.mxu0 0.0
  %3462 = vmatmul.mubr.f32.gmra.mrb[0].mxu0 %v3262
  %v3463 = vpop.f32.mrb[0].mxu0
  %v3464 = vadd.f32 %v3143, %v3463
  %v3465 = vpop.f32.mrb[0].mxu0
  %3466 = vmatprep.mubr.f32.mxu0 0.0
  %3467 = vmatmul.mubr.f32.gmra.mrb[0].mxu0 %v3265
  %v3468 = vpop.f32.mrb[0].mxu0
  %v3469 = vadd.f32 %v3148, %v3468
  %v3470 = vpop.f32.mrb[0].mxu0
  %3471 = vmatprep.mubr.f32.mxu0 0.0
  %3472 = vmatmul.mubr.f32.gmra.mrb[0].mxu0 %v3268
  %v3473 = vpop.f32.mrb[0].mxu0
  %v3474 = vadd.f32 %v3153, %v3473
  %v3475 = vpop.f32.mrb[0].mxu0
  %3476 = vmatprep.mubr.f32.mxu0 0.0
  %3477 = vmatmul.mubr.f32.gmra.mrb[0].mxu0 %v3271
  %v3478 = vpop.f32.mrb[0].mxu0
  %v3479 = vadd.f32 %v3158, %v3478
  %v3480 = vpop.f32.mrb[0].mxu0
  %3481 = vmatprep.mubr.f32.mxu0 0.0
  %3482 = vmatmul.mubr.f32.gmra.mrb[0].mxu0 %v3274
  %v3483 = vpop.f32.mrb[0].mxu0
  %v3484 = vadd.f32 %v3163, %v3483
  %v3485 = vpop.f32.mrb[0].mxu0
  %3486 = vmatprep.mubr.f32.mxu0 0.0
  %3487 = vmatmul.mubr.f32.gmra.mrb[0].mxu0 %v3277
  %v3488 = vpop.f32.mrb[0].mxu0
  %v3489 = vadd.f32 %v3168, %v3488
  %v3490 = vpop.f32.mrb[0].mxu0
  %3491 = vmatprep.mubr.f32.mxu0 0.0
  %3492 = vmatmul.mubr.f32.gmra.mrb[0].mxu0 %v3280
  %v3493 = vpop.f32.mrb[0].mxu0
  %v3494 = vadd.f32 %v3173, %v3493
  %v3495 = vpop.f32.mrb[0].mxu0
  %3496 = vmatprep.mubr.f32.mxu0 0.0
  %3497 = vmatmul.mubr.f32.gmra.mrb[0].mxu0 %v3283
  %v3498 = vpop.f32.mrb[0].mxu0
  %v3499 = vadd.f32 %v3178, %v3498
  %v3500 = vpop.f32.mrb[0].mxu0
  %3501 = vmatprep.mubr.f32.mxu0 0.0
  %3502 = vmatmul.mubr.f32.gmra.mrb[0].mxu0 %v3286
  %v3503 = vpop.f32.mrb[0].mxu0
  %v3504 = vadd.f32 %v3183, %v3503
  %v3505 = vpop.f32.mrb[0].mxu0
  %3506 = vmatprep.mubr.f32.mxu0 0.0
  %3507 = vmatmul.mubr.f32.gmra.mrb[0].mxu0 %v3289
  %v3508 = vpop.f32.mrb[0].mxu0
  %v3509 = vadd.f32 %v3188, %v3508
  %v3510 = vpop.f32.mrb[0].mxu0
  %3511 = vmatprep.mubr.f32.mxu0 0.0
  %3512 = vmatmul.mubr.f32.gmra.mrb[0].mxu0 %v3292
  %v3513 = vpop.f32.mrb[0].mxu0
  %v3514 = vadd.f32 %v3193, %v3513
  %v3515 = vpop.f32.mrb[0].mxu0
  %3516 = vmatprep.mubr.f32.mxu0 0.0
  %3517 = vmatmul.mubr.f32.gmra.mrb[0].mxu0 %v3295
  %v3518 = vpop.f32.mrb[0].mxu0
  %v3519 = vadd.f32 %v3198, %v3518
  %v3520 = vpop.f32.mrb[0].mxu0
  %3521 = vdwg.mxu0
  %v3522 = vld [vmem:[%s2 + $0xe0] sm:$0xff]
  %v3523 = vld [vmem:[%s2 + $0xe8] sm:$0xff]
  %v3524 = vld [vmem:[%s2 + $0xf0] sm:$0xff]
  %v3525 = vld [vmem:[%s2 + $0xf8] sm:$0xff]
  %v3527 = vsel %vm712, %v2840, 0
  %v3530 = vsel %vm712, %v2841, 0
  %v3533 = vsel %vm712, %v2842, 0
  %v3536 = vsel %vm712, %v2843, 0
  %v3539 = vsel %vm712, %v2844, 0
  %v3542 = vsel %vm712, %v2845, 0
  %v3545 = vsel %vm712, %v2846, 0
  %v3548 = vsel %vm712, %v2847, 0
  %v3551 = vsel %vm712, %v2848, 0
  %v3554 = vsel %vm712, %v2849, 0
  %v3557 = vsel %vm712, %v2850, 0
  %v3560 = vsel %vm712, %v2851, 0
  %v3563 = vsel %vm712, %v2852, 0
  %v3566 = vsel %vm712, %v2853, 0
  %v3569 = vsel %vm712, %v2854, 0
  %v3572 = vsel %vm712, %v2855, 0
  %v3575 = vsel %vm712, %v2856, 0
  %v3578 = vsel %vm712, %v2857, 0
  %v3581 = vsel %vm712, %v2858, 0
  %v3584 = vsel %vm712, %v2859, 0
  %v3587 = vsel %vm712, %v2860, 0
  %v3590 = vsel %vm712, %v2861, 0
  %v3593 = vsel %vm712, %v2862, 0
  %v3596 = vsel %vm712, %v2863, 0
  %v3599 = vsel %vm712, %v2864, 0
  %v3602 = vsel %vm712, %v2865, 0
  %v3605 = vsel %vm712, %v2866, 0
  %v3608 = vsel %vm712, %v2867, 0
  %v3611 = vsel %vm712, %v2868, 0
  %v3614 = vsel %vm712, %v2869, 0
  %v3617 = vsel %vm712, %v2870, 0
  %v3620 = vsel %vm712, %v2871, 0
  %3622 = vmatprep.subr.mxu0 0.0
  %3623 = vmatpush1.msra.mxu0 %v3522
  %3624 = vmatprep.subr.mxu0 0.0
  %3625 = vmatpush1.msra.mxu0 %v3523
  %3626 = vmatprep.subr.mxu0 0.0
  %3627 = vmatpush1.msra.mxu0 %v3524
  %3628 = vmatprep.subr.mxu0 0.0
  %3629 = vmatpush1.msra.mxu0 %v3525
  %3630 = vmatprep.subr.mxu0 0.0
  %3631 = vmatpush1.msra.mxu0 0.0
  %3632 = vmatprep.subr.mxu0 0.0
  %3633 = vmatpush1.msra.mxu0 0.0
  %3634 = vmatprep.subr.mxu0 0.0
  %3635 = vmatpush1.msra.mxu0 0.0
  %3636 = vmatprep.subr.mxu0 0.0
  %3637 = vmatpush1.msra.mxu0 0.0
  %3638 = vmatprep.subr.mxu0 0.0
  %3639 = vmatpush1.msra.mxu0 0.0
  %3640 = vmatprep.subr.mxu0 0.0
  %3641 = vmatpush1.msra.mxu0 0.0
  %3642 = vmatprep.subr.mxu0 0.0
  %3643 = vmatpush1.msra.mxu0 0.0
  %3644 = vmatprep.subr.mxu0 0.0
  %3645 = vmatpush1.msra.mxu0 0.0
  %3646 = vmatprep.subr.mxu0 0.0
  %3647 = vmatpush1.msra.mxu0 0.0
  %3648 = vmatprep.subr.mxu0 0.0
  %3649 = vmatpush1.msra.mxu0 0.0
  %3650 = vmatprep.subr.mxu0 0.0
  %3651 = vmatpush1.msra.mxu0 0.0
  %3652 = vmatprep.subr.mxu0 0.0
  %3653 = vmatpush1.msra.mxu0 0.0
  %3654 = vmatprep.subr.mxu0 0.0
  %3655 = vmatpush1.msra.mxu0 0.0
  %3656 = vmatprep.subr.mxu0 0.0
  %3657 = vmatpush1.msra.mxu0 0.0
  %3658 = vmatprep.subr.mxu0 0.0
  %3659 = vmatpush1.msra.mxu0 0.0
  %3660 = vmatprep.subr.mxu0 0.0
  %3661 = vmatpush1.msra.mxu0 0.0
  %3662 = vmatprep.subr.mxu0 0.0
  %3663 = vmatpush1.msra.mxu0 0.0
  %3664 = vmatprep.subr.mxu0 0.0
  %3665 = vmatpush1.msra.mxu0 0.0
  %3666 = vmatprep.subr.mxu0 0.0
  %3667 = vmatpush1.msra.mxu0 0.0
  %3668 = vmatprep.subr.mxu0 0.0
  %3669 = vmatpush1.msra.mxu0 0.0
  %3670 = vmatprep.subr.mxu0 0.0
  %3671 = vmatpush1.msra.mxu0 0.0
  %3672 = vmatprep.subr.mxu0 0.0
  %3673 = vmatpush1.msra.mxu0 0.0
  %3674 = vmatprep.subr.mxu0 0.0
  %3675 = vmatpush1.msra.mxu0 0.0
  %3676 = vmatprep.subr.mxu0 0.0
  %3677 = vmatpush1.msra.mxu0 0.0
  %3678 = vmatprep.subr.mxu0 0.0
  %3679 = vmatpush1.msra.mxu0 0.0
  %3680 = vmatprep.subr.mxu0 0.0
  %3681 = vmatpush1.msra.mxu0 0.0
  %3682 = vmatprep.subr.mxu0 0.0
  %3683 = vmatpush1.msra.mxu0 0.0
  %3684 = vmatprep.subr.mxu0 0.0
  %3685 = vmatpush1.msra.mxu0 0.0
  %3686 = vmatprep.mubr.f32.mxu0 0.0
  %3687 = vmatmul.mubr.f32.gmra.mrb[0].mxu0 %v3527
  %v3688 = vpop.f32.mrb[0].mxu0
  %v3689 = vadd.f32 0.0, %v3688
  %v3690 = vpop.f32.mrb[0].mxu0
  %3691 = vmatprep.mubr.f32.mxu0 0.0
  %3692 = vmatmul.mubr.f32.gmra.mrb[0].mxu0 %v3530
  %v3693 = vpop.f32.mrb[0].mxu0
  %v3694 = vadd.f32 0.0, %v3693
  %v3695 = vpop.f32.mrb[0].mxu0
  %3696 = vmatprep.mubr.f32.mxu0 0.0
  %3697 = vmatmul.mubr.f32.gmra.mrb[0].mxu0 %v3533
  %v3698 = vpop.f32.mrb[0].mxu0
  %v3699 = vadd.f32 0.0, %v3698
  %v3700 = vpop.f32.mrb[0].mxu0
  %3701 = vmatprep.mubr.f32.mxu0 0.0
  %3702 = vmatmul.mubr.f32.gmra.mrb[0].mxu0 %v3536
  %v3703 = vpop.f32.mrb[0].mxu0
  %v3704 = vadd.f32 0.0, %v3703
  %v3705 = vpop.f32.mrb[0].mxu0
  %3706 = vmatprep.mubr.f32.mxu0 0.0
  %3707 = vmatmul.mubr.f32.gmra.mrb[0].mxu0 %v3539
  %v3708 = vpop.f32.mrb[0].mxu0
  %v3709 = vadd.f32 0.0, %v3708
  %v3710 = vpop.f32.mrb[0].mxu0
  %3711 = vmatprep.mubr.f32.mxu0 0.0
  %3712 = vmatmul.mubr.f32.gmra.mrb[0].mxu0 %v3542
  %v3713 = vpop.f32.mrb[0].mxu0
  %v3714 = vadd.f32 0.0, %v3713
  %v3715 = vpop.f32.mrb[0].mxu0
  %3716 = vmatprep.mubr.f32.mxu0 0.0
  %3717 = vmatmul.mubr.f32.gmra.mrb[0].mxu0 %v3545
  %v3718 = vpop.f32.mrb[0].mxu0
  %v3719 = vadd.f32 0.0, %v3718
  %v3720 = vpop.f32.mrb[0].mxu0
  %3721 = vmatprep.mubr.f32.mxu0 0.0
  %3722 = vmatmul.mubr.f32.gmra.mrb[0].mxu0 %v3548
  %v3723 = vpop.f32.mrb[0].mxu0
  %v3724 = vadd.f32 0.0, %v3723
  %v3725 = vpop.f32.mrb[0].mxu0
  %3726 = vmatprep.mubr.f32.mxu0 0.0
  %3727 = vmatmul.mubr.f32.gmra.mrb[0].mxu0 %v3551
  %v3728 = vpop.f32.mrb[0].mxu0
  %v3729 = vadd.f32 0.0, %v3728
  %v3730 = vpop.f32.mrb[0].mxu0
  %3731 = vmatprep.mubr.f32.mxu0 0.0
  %3732 = vmatmul.mubr.f32.gmra.mrb[0].mxu0 %v3554
  %v3733 = vpop.f32.mrb[0].mxu0
  %v3734 = vadd.f32 0.0, %v3733
  %v3735 = vpop.f32.mrb[0].mxu0
  %3736 = vmatprep.mubr.f32.mxu0 0.0
  %3737 = vmatmul.mubr.f32.gmra.mrb[0].mxu0 %v3557
  %v3738 = vpop.f32.mrb[0].mxu0
  %v3739 = vadd.f32 0.0, %v3738
  %v3740 = vpop.f32.mrb[0].mxu0
  %3741 = vmatprep.mubr.f32.mxu0 0.0
  %3742 = vmatmul.mubr.f32.gmra.mrb[0].mxu0 %v3560
  %v3743 = vpop.f32.mrb[0].mxu0
  %v3744 = vadd.f32 0.0, %v3743
  %v3745 = vpop.f32.mrb[0].mxu0
  %3746 = vmatprep.mubr.f32.mxu0 0.0
  %3747 = vmatmul.mubr.f32.gmra.mrb[0].mxu0 %v3563
  %v3748 = vpop.f32.mrb[0].mxu0
  %v3749 = vadd.f32 0.0, %v3748
  %v3750 = vpop.f32.mrb[0].mxu0
  %3751 = vmatprep.mubr.f32.mxu0 0.0
  %3752 = vmatmul.mubr.f32.gmra.mrb[0].mxu0 %v3566
  %v3753 = vpop.f32.mrb[0].mxu0
  %v3754 = vadd.f32 0.0, %v3753
  %v3755 = vpop.f32.mrb[0].mxu0
  %3756 = vmatprep.mubr.f32.mxu0 0.0
  %3757 = vmatmul.mubr.f32.gmra.mrb[0].mxu0 %v3569
  %v3758 = vpop.f32.mrb[0].mxu0
  %v3759 = vadd.f32 0.0, %v3758
  %v3760 = vpop.f32.mrb[0].mxu0
  %3761 = vmatprep.mubr.f32.mxu0 0.0
  %3762 = vmatmul.mubr.f32.gmra.mrb[0].mxu0 %v3572
  %v3763 = vpop.f32.mrb[0].mxu0
  %v3764 = vadd.f32 0.0, %v3763
  %v3765 = vpop.f32.mrb[0].mxu0
  %3766 = vmatprep.mubr.f32.mxu0 0.0
  %3767 = vmatmul.mubr.f32.gmra.mrb[0].mxu0 %v3575
  %v3768 = vpop.f32.mrb[0].mxu0
  %v3769 = vadd.f32 0.0, %v3768
  %v3770 = vpop.f32.mrb[0].mxu0
  %3771 = vmatprep.mubr.f32.mxu0 0.0
  %3772 = vmatmul.mubr.f32.gmra.mrb[0].mxu0 %v3578
  %v3773 = vpop.f32.mrb[0].mxu0
  %v3774 = vadd.f32 0.0, %v3773
  %v3775 = vpop.f32.mrb[0].mxu0
  %3776 = vmatprep.mubr.f32.mxu0 0.0
  %3777 = vmatmul.mubr.f32.gmra.mrb[0].mxu0 %v3581
  %v3778 = vpop.f32.mrb[0].mxu0
  %v3779 = vadd.f32 0.0, %v3778
  %v3780 = vpop.f32.mrb[0].mxu0
  %3781 = vmatprep.mubr.f32.mxu0 0.0
  %3782 = vmatmul.mubr.f32.gmra.mrb[0].mxu0 %v3584
  %v3783 = vpop.f32.mrb[0].mxu0
  %v3784 = vadd.f32 0.0, %v3783
  %v3785 = vpop.f32.mrb[0].mxu0
  %3786 = vmatprep.mubr.f32.mxu0 0.0
  %3787 = vmatmul.mubr.f32.gmra.mrb[0].mxu0 %v3587
  %v3788 = vpop.f32.mrb[0].mxu0
  %v3789 = vadd.f32 0.0, %v3788
  %v3790 = vpop.f32.mrb[0].mxu0
  %3791 = vmatprep.mubr.f32.mxu0 0.0
  %3792 = vmatmul.mubr.f32.gmra.mrb[0].mxu0 %v3590
  %v3793 = vpop.f32.mrb[0].mxu0
  %v3794 = vadd.f32 0.0, %v3793
  %v3795 = vpop.f32.mrb[0].mxu0
  %3796 = vmatprep.mubr.f32.mxu0 0.0
  %3797 = vmatmul.mubr.f32.gmra.mrb[0].mxu0 %v3593
  %v3798 = vpop.f32.mrb[0].mxu0
  %v3799 = vadd.f32 0.0, %v3798
  %v3800 = vpop.f32.mrb[0].mxu0
  %3801 = vmatprep.mubr.f32.mxu0 0.0
  %3802 = vmatmul.mubr.f32.gmra.mrb[0].mxu0 %v3596
  %v3803 = vpop.f32.mrb[0].mxu0
  %v3804 = vadd.f32 0.0, %v3803
  %v3805 = vpop.f32.mrb[0].mxu0
  %3806 = vmatprep.mubr.f32.mxu0 0.0
  %3807 = vmatmul.mubr.f32.gmra.mrb[0].mxu0 %v3599
  %v3808 = vpop.f32.mrb[0].mxu0
  %v3809 = vadd.f32 0.0, %v3808
  %v3810 = vpop.f32.mrb[0].mxu0
  %3811 = vmatprep.mubr.f32.mxu0 0.0
  %3812 = vmatmul.mubr.f32.gmra.mrb[0].mxu0 %v3602
  %v3813 = vpop.f32.mrb[0].mxu0
  %v3814 = vadd.f32 0.0, %v3813
  %v3815 = vpop.f32.mrb[0].mxu0
  %3816 = vmatprep.mubr.f32.mxu0 0.0
  %3817 = vmatmul.mubr.f32.gmra.mrb[0].mxu0 %v3605
  %v3818 = vpop.f32.mrb[0].mxu0
  %v3819 = vadd.f32 0.0, %v3818
  %v3820 = vpop.f32.mrb[0].mxu0
  %3821 = vmatprep.mubr.f32.mxu0 0.0
  %3822 = vmatmul.mubr.f32.gmra.mrb[0].mxu0 %v3608
  %v3823 = vpop.f32.mrb[0].mxu0
  %v3824 = vadd.f32 0.0, %v3823
  %v3825 = vpop.f32.mrb[0].mxu0
  %3826 = vmatprep.mubr.f32.mxu0 0.0
  %3827 = vmatmul.mubr.f32.gmra.mrb[0].mxu0 %v3611
  %v3828 = vpop.f32.mrb[0].mxu0
  %v3829 = vadd.f32 0.0, %v3828
  %v3830 = vpop.f32.mrb[0].mxu0
  %3831 = vmatprep.mubr.f32.mxu0 0.0
  %3832 = vmatmul.mubr.f32.gmra.mrb[0].mxu0 %v3614
  %v3833 = vpop.f32.mrb[0].mxu0
  %v3834 = vadd.f32 0.0, %v3833
  %v3835 = vpop.f32.mrb[0].mxu0
  %3836 = vmatprep.mubr.f32.mxu0 0.0
  %3837 = vmatmul.mubr.f32.gmra.mrb[0].mxu0 %v3617
  %v3838 = vpop.f32.mrb[0].mxu0
  %v3839 = vadd.f32 0.0, %v3838
  %v3840 = vpop.f32.mrb[0].mxu0
  %3841 = vmatprep.mubr.f32.mxu0 0.0
  %3842 = vmatmul.mubr.f32.gmra.mrb[0].mxu0 %v3620
  %v3843 = vpop.f32.mrb[0].mxu0
  %v3844 = vadd.f32 0.0, %v3843
  %v3845 = vpop.f32.mrb[0].mxu0
  %3846 = vdwg.mxu0
  %v3847 = vadd.f32 %v3364, %v3689
  %v3848 = vadd.f32 %v3369, %v3694
  %v3849 = vadd.f32 %v3374, %v3699
  %v3850 = vadd.f32 %v3379, %v3704
  %v3851 = vadd.f32 %v3384, %v3709
  %v3852 = vadd.f32 %v3389, %v3714
  %v3853 = vadd.f32 %v3394, %v3719
  %v3854 = vadd.f32 %v3399, %v3724
  %v3855 = vadd.f32 %v3404, %v3729
  %v3856 = vadd.f32 %v3409, %v3734
  %v3857 = vadd.f32 %v3414, %v3739
  %v3858 = vadd.f32 %v3419, %v3744
  %v3859 = vadd.f32 %v3424, %v3749
  %v3860 = vadd.f32 %v3429, %v3754
  %v3861 = vadd.f32 %v3434, %v3759
  %v3862 = vadd.f32 %v3439, %v3764
  %v3863 = vadd.f32 %v3444, %v3769
  %v3864 = vadd.f32 %v3449, %v3774
  %v3865 = vadd.f32 %v3454, %v3779
  %v3866 = vadd.f32 %v3459, %v3784
  %v3867 = vadd.f32 %v3464, %v3789
  %v3868 = vadd.f32 %v3469, %v3794
  %v3869 = vadd.f32 %v3474, %v3799
  %v3870 = vadd.f32 %v3479, %v3804
  %v3871 = vadd.f32 %v3484, %v3809
  %v3872 = vadd.f32 %v3489, %v3814
  %v3873 = vadd.f32 %v3494, %v3819
  %v3874 = vadd.f32 %v3499, %v3824
  %v3875 = vadd.f32 %v3504, %v3829
  %v3876 = vadd.f32 %v3509, %v3834
  %v3877 = vadd.f32 %v3514, %v3839
  %v3878 = vadd.f32 %v3519, %v3844
  %v3879 = vlaneseq
  %v3880 = vshrl.u32 %v3879, 7
  %v3881 = vsub.s32 0, %v3880
  %v3882 = vrot.slane %v21, %v3881
  %v3883 = vadd.f32 %v3847, %v3882
  %v3884 = vadd.f32 %v3848, %v3882
  %v3885 = vadd.f32 %v3849, %v3882
  %v3886 = vadd.f32 %v3850, %v3882
  %v3887 = vadd.f32 %v3851, %v3882
  %v3888 = vadd.f32 %v3852, %v3882
  %v3889 = vadd.f32 %v3853, %v3882
  %v3890 = vadd.f32 %v3854, %v3882
  %v3891 = vadd.f32 %v3855, %v3882
  %v3892 = vadd.f32 %v3856, %v3882
  %v3893 = vadd.f32 %v3857, %v3882
  %v3894 = vadd.f32 %v3858, %v3882
  %v3895 = vadd.f32 %v3859, %v3882
  %v3896 = vadd.f32 %v3860, %v3882
  %v3897 = vadd.f32 %v3861, %v3882
  %v3898 = vadd.f32 %v3862, %v3882
  %v3899 = vadd.f32 %v3863, %v3882
  %v3900 = vadd.f32 %v3864, %v3882
  %v3901 = vadd.f32 %v3865, %v3882
  %v3902 = vadd.f32 %v3866, %v3882
  %v3903 = vadd.f32 %v3867, %v3882
  %v3904 = vadd.f32 %v3868, %v3882
  %v3905 = vadd.f32 %v3869, %v3882
  %v3906 = vadd.f32 %v3870, %v3882
  %v3907 = vadd.f32 %v3871, %v3882
  %v3908 = vadd.f32 %v3872, %v3882
  %v3909 = vadd.f32 %v3873, %v3882
  %v3910 = vadd.f32 %v3874, %v3882
  %v3911 = vadd.f32 %v3875, %v3882
  %v3912 = vadd.f32 %v3876, %v3882
  %v3913 = vadd.f32 %v3877, %v3882
  %v3914 = vadd.f32 %v3878, %v3882
  %3916 = vset.pattern.permute.xlu0 0
  %3917 = vperm.xlu0 %3916, %v23
  %v3918 = vpop.permute.xlu0 %3917
  %v3921 = vsel %vm712, %v22, 0
  %v3924 = vsel %vm712, %v3883, 0
  %v3927 = vsel %vm712, %v3884, 0
  %v3930 = vsel %vm712, %v3885, 0
  %v3933 = vsel %vm712, %v3886, 0
  %v3936 = vsel %vm712, %v3887, 0
  %v3939 = vsel %vm712, %v3888, 0
  %v3942 = vsel %vm712, %v3889, 0
  %v3945 = vsel %vm712, %v3890, 0
  %v3948 = vsel %vm712, %v3891, 0
  %v3951 = vsel %vm712, %v3892, 0
  %v3954 = vsel %vm712, %v3893, 0
  %v3957 = vsel %vm712, %v3894, 0
  %v3960 = vsel %vm712, %v3895, 0
  %v3963 = vsel %vm712, %v3896, 0
  %v3966 = vsel %vm712, %v3897, 0
  %v3969 = vsel %vm712, %v3898, 0
  %v3972 = vsel %vm712, %v3899, 0
  %v3975 = vsel %vm712, %v3900, 0
  %v3978 = vsel %vm712, %v3901, 0
  %v3981 = vsel %vm712, %v3902, 0
  %v3984 = vsel %vm712, %v3903, 0
  %v3987 = vsel %vm712, %v3904, 0
  %v3990 = vsel %vm712, %v3905, 0
  %v3993 = vsel %vm712, %v3906, 0
  %v3996 = vsel %vm712, %v3907, 0
  %v3999 = vsel %vm712, %v3908, 0
  %v4002 = vsel %vm712, %v3909, 0
  %v4005 = vsel %vm712, %v3910, 0
  %v4008 = vsel %vm712, %v3911, 0
  %v4011 = vsel %vm712, %v3912, 0
  %v4014 = vsel %vm712, %v3913, 0
  %v4017 = vsel %vm712, %v3914, 0
  %4019 = vmatprep.subr.mxu0 0.0
  %4020 = vmatpush1.xpose.msra.mxu0 %v3924
  %4021 = vmatprep.subr.mxu0 0.0
  %4022 = vmatpush1.xpose.msra.mxu0 %v3927
  %4023 = vmatprep.subr.mxu0 0.0
  %4024 = vmatpush1.xpose.msra.mxu0 %v3930
  %4025 = vmatprep.subr.mxu0 0.0
  %4026 = vmatpush1.xpose.msra.mxu0 %v3933
  %4027 = vmatprep.subr.mxu0 0.0
  %4028 = vmatpush1.xpose.msra.mxu0 %v3936
  %4029 = vmatprep.subr.mxu0 0.0
  %4030 = vmatpush1.xpose.msra.mxu0 %v3939
  %4031 = vmatprep.subr.mxu0 0.0
  %4032 = vmatpush1.xpose.msra.mxu0 %v3942
  %4033 = vmatprep.subr.mxu0 0.0
  %4034 = vmatpush1.xpose.msra.mxu0 %v3945
  %4035 = vmatprep.subr.mxu0 0.0
  %4036 = vmatpush1.xpose.msra.mxu0 %v3948
  %4037 = vmatprep.subr.mxu0 0.0
  %4038 = vmatpush1.xpose.msra.mxu0 %v3951
  %4039 = vmatprep.subr.mxu0 0.0
  %4040 = vmatpush1.xpose.msra.mxu0 %v3954
  %4041 = vmatprep.subr.mxu0 0.0
  %4042 = vmatpush1.xpose.msra.mxu0 %v3957
  %4043 = vmatprep.subr.mxu0 0.0
  %4044 = vmatpush1.xpose.msra.mxu0 %v3960
  %4045 = vmatprep.subr.mxu0 0.0
  %4046 = vmatpush1.xpose.msra.mxu0 %v3963
  %4047 = vmatprep.subr.mxu0 0.0
  %4048 = vmatpush1.xpose.msra.mxu0 %v3966
  %4049 = vmatprep.subr.mxu0 0.0
  %4050 = vmatpush1.xpose.msra.mxu0 %v3969
  %4051 = vmatprep.subr.mxu0 0.0
  %4052 = vmatpush1.xpose.msra.mxu0 %v3972
  %4053 = vmatprep.subr.mxu0 0.0
  %4054 = vmatpush1.xpose.msra.mxu0 %v3975
  %4055 = vmatprep.subr.mxu0 0.0
  %4056 = vmatpush1.xpose.msra.mxu0 %v3978
  %4057 = vmatprep.subr.mxu0 0.0
  %4058 = vmatpush1.xpose.msra.mxu0 %v3981
  %4059 = vmatprep.subr.mxu0 0.0
  %4060 = vmatpush1.xpose.msra.mxu0 %v3984
  %4061 = vmatprep.subr.mxu0 0.0
  %4062 = vmatpush1.xpose.msra.mxu0 %v3987
  %4063 = vmatprep.subr.mxu0 0.0
  %4064 = vmatpush1.xpose.msra.mxu0 %v3990
  %4065 = vmatprep.subr.mxu0 0.0
  %4066 = vmatpush1.xpose.msra.mxu0 %v3993
  %4067 = vmatprep.subr.mxu0 0.0
  %4068 = vmatpush1.xpose.msra.mxu0 %v3996
  %4069 = vmatprep.subr.mxu0 0.0
  %4070 = vmatpush1.xpose.msra.mxu0 %v3999
  %4071 = vmatprep.subr.mxu0 0.0
  %4072 = vmatpush1.xpose.msra.mxu0 %v4002
  %4073 = vmatprep.subr.mxu0 0.0
  %4074 = vmatpush1.xpose.msra.mxu0 %v4005
  %4075 = vmatprep.subr.mxu0 0.0
  %4076 = vmatpush1.xpose.msra.mxu0 %v4008
  %4077 = vmatprep.subr.mxu0 0.0
  %4078 = vmatpush1.xpose.msra.mxu0 %v4011
  %4079 = vmatprep.subr.mxu0 0.0
  %4080 = vmatpush1.xpose.msra.mxu0 %v4014
  %4081 = vmatprep.subr.mxu0 0.0
  %4082 = vmatpush1.xpose.msra.mxu0 %v4017
  %4083 = vmatprep.mubr.f32.mxu0 0.0
  %4084 = vmatmul.mubr.f32.gmra.mrb[0].mxu0 %v3921
  %v4085 = vpop.f32.mrb[0].mxu0
  %v4086 = vadd.f32 %v3918, %v4085
  %v4087 = vpop.f32.mrb[0].mxu0
  %v4088 = vadd.f32 %v3918, %v4087
  %4089 = vdwg.mxu0
  %4090 = vst [vmem:[%s3] sm:$0xff] %v4086
  %4091 = vst [vmem:[%s3 + $0x8] sm:$0xff] %v4088
  // Predicated region
  $region14: #{stgcn_forward.1} parent=0 // pred_check
    _
  $region15: #{stgcn_forward.1} parent=0 // pred_check_branch
    %4093 = sbr.rel (0) target = $region17
  $region16: #{stgcn_forward.1} parent=0 // pred_region
    _
  $region17: #{stgcn_forward.1} parent=0 // pred_fallthru
    _
  // Predicated region
  $region18: #{stgcn_forward.1} parent=0 // pred_check
    _
  $region19: #{stgcn_forward.1} parent=0 // pred_check_branch
    %4095 = sbr.rel (0) target = $region21
  $region20: #{stgcn_forward.1} parent=0 // pred_region
    _
  $region21: #{stgcn_forward.1} parent=0 // pred_fallthru
    _

</llo_original>
